<compile_context>
chip_gen: v7x
topology: tpu7x:2x2x1
jax: 0.10.0
libtpu: 0.0.40
codegen_flags: <defaults>
</compile_context>

<pallas_src>
import math

import numpy as np
import jax
import jax.numpy as jnp
from jax.experimental import pallas as pl
from jax.experimental.pallas import tpu as pltpu

# ---------------- configuration (small, TPU-layout-friendly synthetic shapes) ----------------
B = 2                        # batch
L = 128                      # sequence length
DIM = 256                    # model dim C (lane-dense, multiple of 128)
NUM_HEADS = 2
HEAD_DIM = DIM // NUM_HEADS  # 128 (matches real Wan head_dim; head slices are vreg-aligned)
EPS = 1e-6

TL = 64                      # kernel-1 L tile
TK = 128                     # kernel-1 contraction (K) tile of the QKV matmul
TQ = 128                     # kernel-2 query tile
TKV = 128                    # kernel-2 key/value tile


# ============ kernel 1: K-tiled QKV projection + full-dim RMSNorm + interleaved RoPE ============
def qkv_rope_kernel(x_ref, wqkv_ref, bqkv_ref, gq_ref, gk_ref, cos_ref, sin_ref,
                    q_ref, k_ref, v_ref, acc_ref):
    """Grid: (B, L/TL, C/TK); K axis innermost ('arbitrary').

    x_ref:    [TL, TK]  bf16
    wqkv_ref: [TK, 3C]  bf16 (wq|wk|wv pre-transposed + concatenated on host)
    bqkv_ref: [1, 3C]   f32
    gq/gk:    [1, C]    f32 RMSNorm gains (gq pre-scaled by 1/sqrt(head_dim))
    cos/sin:  [TL, C]   f32 RoPE tables (sin sign-folded: -sin at even lanes, +sin at odd)
    q/k/v:    [TL, C]   bf16 outputs (lane-dense, natural head-concatenated order)
    acc_ref:  [TL, 3C]  f32 scratch accumulator
    """
    ki = pl.program_id(2)

    @pl.when(ki == 0)
    def _init():
        acc_ref[...] = jnp.zeros_like(acc_ref)

    # Partial fused-QKV matmul: bf16 operands, f32 accumulation on the MXU.
    acc_ref[...] += jnp.dot(x_ref[...], wqkv_ref[...],
                            preferred_element_type=jnp.float32)

    @pl.when(ki == pl.num_programs(2) - 1)
    def _finalize():
        qkv = acc_ref[...] + bqkv_ref[...]          # [TL, 3C] f32
        q = qkv[:, 0 * DIM:1 * DIM]
        k = qkv[:, 1 * DIM:2 * DIM]
        v = qkv[:, 2 * DIM:3 * DIM]

        def rmsnorm(t, g):                           # full-dim (C) RMSNorm, f32
            ms = jnp.mean(t * t, axis=-1, keepdims=True)
            return t * jax.lax.rsqrt(ms + EPS) * g

        cos = cos_ref[...]
        sin_signed = sin_ref[...]                    # [2i] = -sin_i, [2i+1] = +sin_i
        even = (jax.lax.broadcasted_iota(jnp.int32, cos.shape, 1) % 2) == 0

        def rope(t):
            # Interleaved complex rotation:
            #   out[2i]   = t[2i]*cos - t[2i+1]*sin
            #   out[2i+1] = t[2i+1]*cos + t[2i]*sin
            # Pair swap via two XLU lane rotations + a lane-parity select; the sign is
            # folded into the dense sin table (no half-zero tables, no pair-swap matmul).
            nxt = pltpu.roll(t, DIM - 1, 1)          # nxt[j] = t[j+1]
            prv = pltpu.roll(t, 1, 1)                # prv[j] = t[j-1]
            swapped = jnp.where(even, nxt, prv)      # [2i] -> t[2i+1], [2i+1] -> t[2i]
            return t * cos + swapped * sin_signed

        q_ref[...] = rope(rmsnorm(q, gq_ref[...])).astype(jnp.bfloat16)  # 1/sqrt(d) in gq
        k_ref[...] = rope(rmsnorm(k, gk_ref[...])).astype(jnp.bfloat16)
        v_ref[...] = v.astype(jnp.bfloat16)


# ========== kernel 2: flash attention (online softmax) + fused output projection ==========
def flash_attn_oproj_kernel(q_ref, k_ref, v_ref, wo_ref, bo_ref, o_ref,
                            m_sc, l_sc, acc_sc):
    """Grid: (B, L/TQ, L/TKV); KV axis innermost ('arbitrary').

    q_ref:  [TQ,  C] bf16     k_ref / v_ref: [TKV, C] bf16   (heads contiguous, d = 128)
    wo_ref: [C, C]   bf16     bo_ref: [1, C] f32
    o_ref:  [TQ, C]  bf16 (lane-dense store)
    scratch: m/l [H, TQ, 1] f32, acc [TQ, H*d] f32 (heads along lanes)
    """
    ki = pl.program_id(2)

    @pl.when(ki == 0)
    def _init():
        m_sc[...] = jnp.full(m_sc.shape, -jnp.inf, jnp.float32)
        l_sc[...] = jnp.zeros(l_sc.shape, jnp.float32)
        acc_sc[...] = jnp.zeros(acc_sc.shape, jnp.float32)

    q = q_ref[...]                                   # softmax scale already folded upstream
    k = k_ref[...]
    v = v_ref[...]

    for h in range(NUM_HEADS):                       # static unroll; slices are vreg-aligned
        sl = slice(h * HEAD_DIM, (h + 1) * HEAD_DIM)
        s = jax.lax.dot_general(q[:, sl], k[:, sl], (((1,), (1,)), ((), ())),
                                preferred_element_type=jnp.float32)     # [TQ, TKV] f32
        m_prev = m_sc[h]                                                 # [TQ, 1]
        m_new = jnp.maximum(m_prev, jnp.max(s, axis=-1, keepdims=True))
        alpha = jnp.exp(m_prev - m_new)
        p = jnp.exp(s - m_new)
        l_sc[h] = alpha * l_sc[h] + jnp.sum(p, axis=-1, keepdims=True)
        pv = jnp.dot(p.astype(jnp.bfloat16), v[:, sl],
                     preferred_element_type=jnp.float32)                 # [TQ, d]
        acc_sc[:, sl] = alpha * acc_sc[:, sl] + pv
        m_sc[h] = m_new

    @pl.when(ki == pl.num_programs(2) - 1)
    def _finalize():
        # Per-head normalization (exact divide; runs once per Q tile), lane-aligned slices.
        for h in range(NUM_HEADS):
            sl = slice(h * HEAD_DIM, (h + 1) * HEAD_DIM)
            acc_sc[:, sl] = acc_sc[:, sl] * (1.0 / l_sc[h])
        # Fused output projection: one full-contraction [TQ, C] x [C, C] MXU matmul.
        attn = acc_sc[...].astype(jnp.bfloat16)                          # [TQ, H*d]
        out = jnp.dot(attn, wo_ref[...], preferred_element_type=jnp.float32) + bo_ref[...]
        o_ref[...] = out.astype(o_ref.dtype)


# ---------------- host wrapper ----------------
def wan_self_attention(x, params, rope_tables):
    """x: [B, L, C] f32 -> [B, L, C] bf16."""
    b, l, c = x.shape
    d = HEAD_DIM
    cos_full, sin_signed = rope_tables

    # ---- host-side prep: bf16 casts, QKV fusion, 1/sqrt(d) folding ----
    x_bf16 = x.astype(jnp.bfloat16)
    wqkv = jnp.concatenate([params["wq_t"], params["wk_t"], params["wv_t"]],
                           axis=1).astype(jnp.bfloat16)                    # [C, 3C]
    bqkv = jnp.concatenate([params["bq"], params["bk"], params["bv"]], axis=1)  # [1, 3C]
    gq_scaled = params["gq"] * (1.0 / math.sqrt(d))    # fold softmax scale into q's RMSNorm gain
    gk = params["gk"]
    wo = params["wo_t"].astype(jnp.bfloat16)                                # [C, C]
    bo = params["bo"]                                                       # [1, C]

    n_l, n_k = l // TL, c // TK

    # ---- kernel 1: QKV (K-tiled) + RMSNorm + RoPE ----
    qkv_spec_out = pl.BlockSpec((None, TL, c), lambda bb, li, ki: (bb, li, 0))
    q_ld, k_ld, v_ld = pl.pallas_call(
        qkv_rope_kernel,
        out_shape=tuple(jax.ShapeDtypeStruct((b, l, c), jnp.bfloat16) for _ in range(3)),
        grid_spec=pltpu.PrefetchScalarGridSpec(
            num_scalar_prefetch=0,
            grid=(b, n_l, n_k),
            in_specs=[
                pl.BlockSpec((None, TL, TK), lambda bb, li, ki: (bb, li, ki)),   # x (bf16)
                pl.BlockSpec((TK, 3 * c), lambda bb, li, ki: (ki, 0)),           # wqkv (bf16)
                pl.BlockSpec((1, 3 * c), lambda bb, li, ki: (0, 0)),             # bqkv
                pl.BlockSpec((1, c), lambda bb, li, ki: (0, 0)),                 # gq (scaled)
                pl.BlockSpec((1, c), lambda bb, li, ki: (0, 0)),                 # gk
                pl.BlockSpec((TL, c), lambda bb, li, ki: (li, 0)),               # cos
                pl.BlockSpec((TL, c), lambda bb, li, ki: (li, 0)),               # sin (signed)
            ],
            out_specs=[qkv_spec_out, qkv_spec_out, qkv_spec_out],
            scratch_shapes=[pltpu.VMEM((TL, 3 * c), jnp.float32)],
        ),
        compiler_params=pltpu.CompilerParams(
            dimension_semantics=("parallel", "parallel", "arbitrary"),
            vmem_limit_bytes=32 * 1024 * 1024),
    )(x_bf16, wqkv, bqkv, gq_scaled, gk, cos_full, sin_signed)

    # ---- kernel 2: flash attention + fused output projection ----
    n_q, n_kv = l // TQ, l // TKV
    out = pl.pallas_call(
        flash_attn_oproj_kernel,
        out_shape=jax.ShapeDtypeStruct((b, l, c), jnp.bfloat16),
        grid_spec=pltpu.PrefetchScalarGridSpec(
            num_scalar_prefetch=0,
            grid=(b, n_q, n_kv),
            in_specs=[
                pl.BlockSpec((None, TQ, c), lambda bb, qi, ki: (bb, qi, 0)),     # q
                pl.BlockSpec((None, TKV, c), lambda bb, qi, ki: (bb, ki, 0)),    # k
                pl.BlockSpec((None, TKV, c), lambda bb, qi, ki: (bb, ki, 0)),    # v
                pl.BlockSpec((c, c), lambda bb, qi, ki: (0, 0)),                 # wo (bf16)
                pl.BlockSpec((1, c), lambda bb, qi, ki: (0, 0)),                 # bo
            ],
            out_specs=pl.BlockSpec((None, TQ, c), lambda bb, qi, ki: (bb, qi, 0)),
            scratch_shapes=[
                pltpu.VMEM((NUM_HEADS, TQ, 1), jnp.float32),   # running max
                pltpu.VMEM((NUM_HEADS, TQ, 1), jnp.float32),   # running sum
                pltpu.VMEM((TQ, c), jnp.float32),              # accumulator [TQ, H*d]
            ],
        ),
        compiler_params=pltpu.CompilerParams(
            dimension_semantics=("parallel", "parallel", "arbitrary"),
            vmem_limit_bytes=32 * 1024 * 1024),
    )(q_ld, k_ld, v_ld, wo, bo)
    return out


# ---------------- plain-JAX reference (f32, for validation) ----------------
def reference(x, params, cos_half, sin_half):
    def rms(t, g):
        return t * jax.lax.rsqrt(jnp.mean(t * t, -1, keepdims=True) + EPS) * g[0]

    q = rms(x @ params["wq_t"] + params["bq"][0], params["gq"])
    k = rms(x @ params["wk_t"] + params["bk"][0], params["gk"])
    v = x @ params["wv_t"] + params["bv"][0]

    def rope(t):
        t4 = t.reshape(B, L, NUM_HEADS, HEAD_DIM // 2, 2)
        tr, ti = t4[..., 0], t4[..., 1]
        c = cos_half[None, :, None, :]
        s = sin_half[None, :, None, :]
        return jnp.stack([tr * c - ti * s, tr * s + ti * c], -1).reshape(B, L, DIM)

    q, k = rope(q), rope(k)
    qh = q.reshape(B, L, NUM_HEADS, HEAD_DIM).transpose(0, 2, 1, 3)
    kh = k.reshape(B, L, NUM_HEADS, HEAD_DIM).transpose(0, 2, 1, 3)
    vh = v.reshape(B, L, NUM_HEADS, HEAD_DIM).transpose(0, 2, 1, 3)
    s = jnp.einsum("bhqd,bhkd->bhqk", qh, kh) / math.sqrt(HEAD_DIM)
    p = jax.nn.softmax(s, axis=-1)
    o = jnp.einsum("bhqk,bhkd->bhqd", p, vh).transpose(0, 2, 1, 3).reshape(B, L, DIM)
    return o @ params["wo_t"] + params["bo"][0]


# ---------------- parameter / RoPE-table construction ----------------
def make_params(key):
    ks = jax.random.split(key, 10)
    w_scale = DIM ** -0.5
    init_w = lambda k: (w_scale * jax.random.normal(k, (DIM, DIM))).astype(jnp.float32)
    init_b = lambda k: (0.02 * jax.random.normal(k, (1, DIM))).astype(jnp.float32)
    return {
        "wq_t": init_w(ks[0]), "bq": init_b(ks[1]),
        "wk_t": init_w(ks[2]), "bk": init_b(ks[3]),
        "wv_t": init_w(ks[4]), "bv": init_b(ks[5]),
        "wo_t": init_w(ks[6]), "bo": init_b(ks[7]),
        # RMSNorm elementwise_affine gains (perturbed around the PyTorch default of 1.0)
        "gq": (1.0 + 0.1 * jax.random.normal(ks[8], (1, DIM))).astype(jnp.float32),
        "gk": (1.0 + 0.1 * jax.random.normal(ks[9], (1, DIM))).astype(jnp.float32),
    }


def make_rope_tables(seq_len):
    # 1D rotary freqs of shape [1024, head_dim // 2] per the module docstring.
    half = HEAD_DIM // 2
    inv_freq = 1.0 / (10000.0 ** (np.arange(half, dtype=np.float64) / half))
    pos = np.arange(1024, dtype=np.float64)
    angles = (pos[:, None] * inv_freq[None, :]).astype(np.float32)      # [1024, half]
    ang = angles[:seq_len]                                              # [L, half]
    cos_half = np.cos(ang)
    sin_half = np.sin(ang)

    # Dense kernel tables in interleaved layout, tiled across heads.
    cos_full = np.tile(np.repeat(cos_half, 2, axis=1), (1, NUM_HEADS))  # [L, C]
    sin_signed = np.zeros((seq_len, HEAD_DIM), np.float32)
    sin_signed[:, 0::2] = -sin_half      # even lanes:  out[2i]   += t[2i+1] * (-sin)
    sin_signed[:, 1::2] = sin_half       # odd lanes:   out[2i+1] += t[2i]   * (+sin)
    sin_signed = np.tile(sin_signed, (1, NUM_HEADS))                    # [L, C]
    return (jnp.asarray(cos_half), jnp.asarray(sin_half),
            jnp.asarray(cos_full), jnp.asarray(sin_signed))


if __name__ == "__main__":
    key = jax.random.PRNGKey(0)
    kx, kp = jax.random.split(key)
    x = jax.random.normal(kx, (B, L, DIM), dtype=jnp.float32)
    params = make_params(kp)
    cos_half, sin_half, cos_full, sin_signed = make_rope_tables(L)

    fn = jax.jit(wan_self_attention)
    out = jax.block_until_ready(fn(x, params, (cos_full, sin_signed)))

    ref = jax.block_until_ready(reference(x, params, cos_half, sin_half))

    assert out.shape == (B, L, DIM)
    np.testing.assert_allclose(np.asarray(out, dtype=np.float32), np.asarray(ref),
                               rtol=5e-2, atol=5e-2)
    print("KERNEL_OK")
</pallas_src>

<mosaic_0001>
module attributes {stable_mosaic.version = 11 : i64} {
  func.func @qkv_rope_kernel(%arg0: i32, %arg1: i32, %arg2: i32, %arg3: memref<1x64x128xbf16, #tpu.memory_space<vmem>>, %arg4: memref<128x768xbf16, #tpu.memory_space<vmem>>, %arg5: memref<1x768xf32, #tpu.memory_space<vmem>>, %arg6: memref<1x256xf32, #tpu.memory_space<vmem>>, %arg7: memref<1x256xf32, #tpu.memory_space<vmem>>, %arg8: memref<64x256xf32, #tpu.memory_space<vmem>>, %arg9: memref<64x256xf32, #tpu.memory_space<vmem>>, %arg10: memref<1x64x256xbf16, #tpu.memory_space<vmem>>, %arg11: memref<1x64x256xbf16, #tpu.memory_space<vmem>>, %arg12: memref<1x64x256xbf16, #tpu.memory_space<vmem>>, %arg13: memref<64x768xf32, #tpu.memory_space<vmem>>) attributes {dimension_semantics = [#tpu.dimension_semantics<parallel>, #tpu.dimension_semantics<parallel>, #tpu.dimension_semantics<arbitrary>], iteration_bounds = array<i64: 2, 2, 2>, scalar_prefetch = 0 : i64, scratch_operands = 1 : i64, tpu.core_type = #tpu.core_type<tc>, window_params = [{transform_indices = @transform_0, window_bounds = array<i64: 1, 64, 128>}, {transform_indices = @transform_1, window_bounds = array<i64: 128, 768>}, {pipeline_mode = #tpu.pipeline_mode<synchronous>, transform_indices = @transform_2, window_bounds = array<i64: 1, 768>}, {pipeline_mode = #tpu.pipeline_mode<synchronous>, transform_indices = @transform_3, window_bounds = array<i64: 1, 256>}, {pipeline_mode = #tpu.pipeline_mode<synchronous>, transform_indices = @transform_4, window_bounds = array<i64: 1, 256>}, {transform_indices = @transform_5, window_bounds = array<i64: 64, 256>}, {transform_indices = @transform_6, window_bounds = array<i64: 64, 256>}, {transform_indices = @transform_7, window_bounds = array<i64: 1, 64, 256>}, {transform_indices = @transform_8, window_bounds = array<i64: 1, 64, 256>}, {transform_indices = @transform_9, window_bounds = array<i64: 1, 64, 256>}]} {
    %c0_i32 = arith.constant 0 : i32
    %0 = arith.cmpi eq, %arg2, %c0_i32 : i32
    %1 = arith.extui %0 : i1 to i32
    %c0_i32_0 = arith.constant 0 : i32
    %2 = arith.cmpi ne, %1, %c0_i32_0 : i32
    scf.if %2 {
      %cst_10 = arith.constant 0.000000e+00 : f32
      %13 = vector.broadcast %cst_10 : f32 to vector<64x768xf32>
      %c0_11 = arith.constant 0 : index
      %c0_12 = arith.constant 0 : index
      %14 = vector.load %arg13[%c0_11, %c0_12] : memref<64x768xf32, #tpu.memory_space<vmem>>, vector<64x768xf32>
      tpu.vector_store %arg13[%c0_11, %c0_12], %13 {strides = array<i32>} : memref<64x768xf32, #tpu.memory_space<vmem>>, vector<64x768xf32>,
    } else {
    }
    %c0 = arith.constant 0 : index
    %c0_1 = arith.constant 0 : index
    %3 = vector.load %arg13[%c0, %c0_1] : memref<64x768xf32, #tpu.memory_space<vmem>>, vector<64x768xf32>
    %c0_2 = arith.constant 0 : index
    %c0_3 = arith.constant 0 : index
    %c0_4 = arith.constant 0 : index
    %4 = vector.load %arg3[%c0_2, %c0_3, %c0_4] : memref<1x64x128xbf16, #tpu.memory_space<vmem>>, vector<1x64x128xbf16>
    %5 = vector.shape_cast %4 : vector<1x64x128xbf16> to vector<64x128xbf16>
    %c0_5 = arith.constant 0 : index
    %c0_6 = arith.constant 0 : index
    %6 = vector.load %arg4[%c0_5, %c0_6] : memref<128x768xbf16, #tpu.memory_space<vmem>>, vector<128x768xbf16>
    %cst = arith.constant dense<0.000000e+00> : vector<64x768xf32>
    %7 = tpu.matmul %5, %6, %cst {dimension_numbers = #tpu.dot_dimension_numbers<[1], [0], [0], [1], [0, 0, 1, 1], [], []>} : vector<64x128xbf16>, vector<128x768xbf16>, vector<64x768xf32> -> vector<64x768xf32>
    %8 = arith.addf %3, %7 : vector<64x768xf32>
    %c0_7 = arith.constant 0 : index
    %c0_8 = arith.constant 0 : index
    %9 = vector.load %arg13[%c0_7, %c0_8] : memref<64x768xf32, #tpu.memory_space<vmem>>, vector<64x768xf32>
    tpu.vector_store %arg13[%c0_7, %c0_8], %8 {strides = array<i32>} : memref<64x768xf32, #tpu.memory_space<vmem>>, vector<64x768xf32>,
    %c1_i32 = arith.constant 1 : i32
    %10 = arith.cmpi eq, %arg2, %c1_i32 : i32
    %11 = arith.extui %10 : i1 to i32
    %c0_i32_9 = arith.constant 0 : i32
    %12 = arith.cmpi ne, %11, %c0_i32_9 : i32
    scf.if %12 {
      %c0_10 = arith.constant 0 : index
      %c0_11 = arith.constant 0 : index
      %13 = vector.load %arg13[%c0_10, %c0_11] : memref<64x768xf32, #tpu.memory_space<vmem>>, vector<64x768xf32>
      %c0_12 = arith.constant 0 : index
      %c0_13 = arith.constant 0 : index
      %14 = vector.load %arg5[%c0_12, %c0_13] : memref<1x768xf32, #tpu.memory_space<vmem>>, vector<1x768xf32>
      %15 = vector.broadcast %14 : vector<1x768xf32> to vector<64x768xf32>
      %16 = arith.addf %13, %15 : vector<64x768xf32>
      %17 = vector.extract_strided_slice %16 {offsets = [0, 0], sizes = [64, 256], strides = [1, 1]} : vector<64x768xf32> to vector<64x256xf32>
      %18 = vector.extract_strided_slice %16 {offsets = [0, 256], sizes = [64, 256], strides = [1, 1]} : vector<64x768xf32> to vector<64x256xf32>
      %19 = vector.extract_strided_slice %16 {offsets = [0, 512], sizes = [64, 256], strides = [1, 1]} : vector<64x768xf32> to vector<64x256xf32>
      %c0_14 = arith.constant 0 : index
      %c0_15 = arith.constant 0 : index
      %20 = vector.load %arg8[%c0_14, %c0_15] : memref<64x256xf32, #tpu.memory_space<vmem>>, vector<64x256xf32>
      %c0_16 = arith.constant 0 : index
      %c0_17 = arith.constant 0 : index
      %21 = vector.load %arg9[%c0_16, %c0_17] : memref<64x256xf32, #tpu.memory_space<vmem>>, vector<64x256xf32>
      %22 = tpu.iota {dimensions = array<i32: 1>} : vector<64x256xi32>
      %c2_i32 = arith.constant 2 : i32
      %c0_i32_18 = arith.constant 0 : i32
      %23 = arith.cmpi eq, %c2_i32, %c0_i32_18 : i32
      %c1_i32_19 = arith.constant 1 : i32
      %24 = arith.select %23, %c1_i32_19, %c2_i32 : i32
      %25 = vector.broadcast %24 : i32 to vector<64x256xi32>
      %26 = arith.remsi %22, %25 : vector<64x256xi32>
      %c0_i32_20 = arith.constant 0 : i32
      %27 = vector.broadcast %c0_i32_20 : i32 to vector<64x256xi32>
      %28 = arith.cmpi ne, %26, %27 : vector<64x256xi32>
      %c0_i32_21 = arith.constant 0 : i32
      %29 = vector.broadcast %c0_i32_21 : i32 to vector<64x256xi32>
      %30 = arith.cmpi slt, %26, %29 : vector<64x256xi32>
      %c0_i32_22 = arith.constant 0 : i32
      %31 = arith.cmpi slt, %24, %c0_i32_22 : i32
      %32 = vector.broadcast %31 : i1 to vector<64x256xi1>
      %33 = vector.broadcast %32 : vector<64x256xi1> to vector<64x256xi1>
      %34 = arith.xori %30, %33 : vector<64x256xi1>
      %35 = arith.andi %34, %28 : vector<64x256xi1>
      %36 = vector.broadcast %24 : i32 to vector<64x256xi32>
      %37 = arith.addi %26, %36 : vector<64x256xi32>
      %38 = arith.select %35, %37, %26 : vector<64x256xi1>, vector<64x256xi32>
      %c0_i32_23 = arith.constant 0 : i32
      %39 = vector.broadcast %c0_i32_23 : i32 to vector<64x256xi32>
      %40 = arith.cmpi eq, %38, %39 : vector<64x256xi32>
      %c0_24 = arith.constant 0 : index
      %c0_25 = arith.constant 0 : index
      %41 = vector.load %arg6[%c0_24, %c0_25] : memref<1x256xf32, #tpu.memory_space<vmem>>, vector<1x256xf32>
      %42 = arith.mulf %17, %17 : vector<64x256xf32>
      %cst_26 = arith.constant dense<0.000000e+00> : vector<64xf32>
      %43 = vector.multi_reduction <add>, %42, %cst_26 [1] : vector<64x256xf32> to vector<64xf32>
      %44 = vector.shape_cast %43 : vector<64xf32> to vector<64x1xf32>
      %cst_27 = arith.constant 2.560000e+02 : f32
      %45 = vector.broadcast %cst_27 : f32 to vector<64x1xf32>
      %46 = arith.divf %44, %45 : vector<64x1xf32>
      %cst_28 = arith.constant 9.99999997E-7 : f32
      %47 = vector.broadcast %cst_28 : f32 to vector<64x1xf32>
      %48 = arith.addf %46, %47 : vector<64x1xf32>
      %49 = math.rsqrt %48 : vector<64x1xf32>
      %50 = vector.broadcast %49 : vector<64x1xf32> to vector<64x256xf32>
      %51 = arith.mulf %17, %50 : vector<64x256xf32>
      %52 = vector.broadcast %41 : vector<1x256xf32> to vector<64x256xf32>
      %53 = arith.mulf %51, %52 : vector<64x256xf32>
      %c255_i32 = arith.constant 255 : i32
      %54 = tpu.dynamic_rotate %53 by %c255_i32 dim 1 : vector<64x256xf32>, i32 -> vector<64x256xf32>
      %c1_i32_29 = arith.constant 1 : i32
      %55 = tpu.dynamic_rotate %53 by %c1_i32_29 dim 1 : vector<64x256xf32>, i32 -> vector<64x256xf32>
      %56 = arith.select %40, %54, %55 : vector<64x256xi1>, vector<64x256xf32>
      %57 = arith.mulf %53, %20 : vector<64x256xf32>
      %58 = arith.mulf %56, %21 : vector<64x256xf32>
      %59 = arith.addf %57, %58 : vector<64x256xf32>
      %60 = arith.truncf %59 : vector<64x256xf32> to vector<64x256xbf16>
      %c0_30 = arith.constant 0 : index
      %c0_31 = arith.constant 0 : index
      %c0_32 = arith.constant 0 : index
      %61 = vector.load %arg10[%c0_30, %c0_31, %c0_32] : memref<1x64x256xbf16, #tpu.memory_space<vmem>>, vector<1x64x256xbf16>
      %62 = vector.shape_cast %61 : vector<1x64x256xbf16> to vector<64x256xbf16>
      %63 = vector.shape_cast %60 : vector<64x256xbf16> to vector<1x64x256xbf16>
      tpu.vector_store %arg10[%c0_30, %c0_31, %c0_32], %63 {strides = array<i32>} : memref<1x64x256xbf16, #tpu.memory_space<vmem>>, vector<1x64x256xbf16>,
      %c0_33 = arith.constant 0 : index
      %c0_34 = arith.constant 0 : index
      %64 = vector.load %arg7[%c0_33, %c0_34] : memref<1x256xf32, #tpu.memory_space<vmem>>, vector<1x256xf32>
      %65 = arith.mulf %18, %18 : vector<64x256xf32>
      %cst_35 = arith.constant dense<0.000000e+00> : vector<64xf32>
      %66 = vector.multi_reduction <add>, %65, %cst_35 [1] : vector<64x256xf32> to vector<64xf32>
      %67 = vector.shape_cast %66 : vector<64xf32> to vector<64x1xf32>
      %cst_36 = arith.constant 2.560000e+02 : f32
      %68 = vector.broadcast %cst_36 : f32 to vector<64x1xf32>
      %69 = arith.divf %67, %68 : vector<64x1xf32>
      %cst_37 = arith.constant 9.99999997E-7 : f32
      %70 = vector.broadcast %cst_37 : f32 to vector<64x1xf32>
      %71 = arith.addf %69, %70 : vector<64x1xf32>
      %72 = math.rsqrt %71 : vector<64x1xf32>
      %73 = vector.broadcast %72 : vector<64x1xf32> to vector<64x256xf32>
      %74 = arith.mulf %18, %73 : vector<64x256xf32>
      %75 = vector.broadcast %64 : vector<1x256xf32> to vector<64x256xf32>
      %76 = arith.mulf %74, %75 : vector<64x256xf32>
      %c255_i32_38 = arith.constant 255 : i32
      %77 = tpu.dynamic_rotate %76 by %c255_i32_38 dim 1 : vector<64x256xf32>, i32 -> vector<64x256xf32>
      %c1_i32_39 = arith.constant 1 : i32
      %78 = tpu.dynamic_rotate %76 by %c1_i32_39 dim 1 : vector<64x256xf32>, i32 -> vector<64x256xf32>
      %79 = arith.select %40, %77, %78 : vector<64x256xi1>, vector<64x256xf32>
      %80 = arith.mulf %76, %20 : vector<64x256xf32>
      %81 = arith.mulf %79, %21 : vector<64x256xf32>
      %82 = arith.addf %80, %81 : vector<64x256xf32>
      %83 = arith.truncf %82 : vector<64x256xf32> to vector<64x256xbf16>
      %c0_40 = arith.constant 0 : index
      %c0_41 = arith.constant 0 : index
      %c0_42 = arith.constant 0 : index
      %84 = vector.load %arg11[%c0_40, %c0_41, %c0_42] : memref<1x64x256xbf16, #tpu.memory_space<vmem>>, vector<1x64x256xbf16>
      %85 = vector.shape_cast %84 : vector<1x64x256xbf16> to vector<64x256xbf16>
      %86 = vector.shape_cast %83 : vector<64x256xbf16> to vector<1x64x256xbf16>
      tpu.vector_store %arg11[%c0_40, %c0_41, %c0_42], %86 {strides = array<i32>} : memref<1x64x256xbf16, #tpu.memory_space<vmem>>, vector<1x64x256xbf16>,
      %87 = arith.truncf %19 : vector<64x256xf32> to vector<64x256xbf16>
      %c0_43 = arith.constant 0 : index
      %c0_44 = arith.constant 0 : index
      %c0_45 = arith.constant 0 : index
      %88 = vector.load %arg12[%c0_43, %c0_44, %c0_45] : memref<1x64x256xbf16, #tpu.memory_space<vmem>>, vector<1x64x256xbf16>
      %89 = vector.shape_cast %88 : vector<1x64x256xbf16> to vector<64x256xbf16>
      %90 = vector.shape_cast %87 : vector<64x256xbf16> to vector<1x64x256xbf16>
      tpu.vector_store %arg12[%c0_43, %c0_44, %c0_45], %90 {strides = array<i32>} : memref<1x64x256xbf16, #tpu.memory_space<vmem>>, vector<1x64x256xbf16>,
    } else {
    }
    return
  }
  func.func @transform_0(%arg0: i32, %arg1: i32, %arg2: i32) -> (i32, i32, i32) {
    %c0_i32 = arith.constant 0 : i32
    return %arg0, %arg1, %arg2 : i32, i32, i32
  }
  func.func @transform_1(%arg0: i32, %arg1: i32, %arg2: i32) -> (i32, i32) {
    %c0_i32 = arith.constant 0 : i32
    %c0_i32_0 = arith.constant 0 : i32
    return %arg2, %c0_i32 : i32, i32
  }
  func.func @transform_2(%arg0: i32, %arg1: i32, %arg2: i32) -> (i32, i32) {
    %c0_i32 = arith.constant 0 : i32
    %c0_i32_0 = arith.constant 0 : i32
    %c0_i32_1 = arith.constant 0 : i32
    return %c0_i32, %c0_i32_0 : i32, i32
  }
  func.func @transform_3(%arg0: i32, %arg1: i32, %arg2: i32) -> (i32, i32) {
    %c0_i32 = arith.constant 0 : i32
    %c0_i32_0 = arith.constant 0 : i32
    %c0_i32_1 = arith.constant 0 : i32
    return %c0_i32, %c0_i32_0 : i32, i32
  }
  func.func @transform_4(%arg0: i32, %arg1: i32, %arg2: i32) -> (i32, i32) {
    %c0_i32 = arith.constant 0 : i32
    %c0_i32_0 = arith.constant 0 : i32
    %c0_i32_1 = arith.constant 0 : i32
    return %c0_i32, %c0_i32_0 : i32, i32
  }
  func.func @transform_5(%arg0: i32, %arg1: i32, %arg2: i32) -> (i32, i32) {
    %c0_i32 = arith.constant 0 : i32
    %c0_i32_0 = arith.constant 0 : i32
    return %arg1, %c0_i32 : i32, i32
  }
  func.func @transform_6(%arg0: i32, %arg1: i32, %arg2: i32) -> (i32, i32) {
    %c0_i32 = arith.constant 0 : i32
    %c0_i32_0 = arith.constant 0 : i32
    return %arg1, %c0_i32 : i32, i32
  }
  func.func @transform_7(%arg0: i32, %arg1: i32, %arg2: i32) -> (i32, i32, i32) {
    %c0_i32 = arith.constant 0 : i32
    %c0_i32_0 = arith.constant 0 : i32
    return %arg0, %arg1, %c0_i32 : i32, i32, i32
  }
  func.func @transform_8(%arg0: i32, %arg1: i32, %arg2: i32) -> (i32, i32, i32) {
    %c0_i32 = arith.constant 0 : i32
    %c0_i32_0 = arith.constant 0 : i32
    return %arg0, %arg1, %c0_i32 : i32, i32, i32
  }
  func.func @transform_9(%arg0: i32, %arg1: i32, %arg2: i32) -> (i32, i32, i32) {
    %c0_i32 = arith.constant 0 : i32
    %c0_i32_0 = arith.constant 0 : i32
    return %arg0, %arg1, %c0_i32 : i32, i32, i32
  }
}

module attributes {stable_mosaic.version = 11 : i64} {
  func.func @flash_attn_oproj_kernel(%arg0: i32, %arg1: i32, %arg2: i32, %arg3: memref<1x128x256xbf16, #tpu.memory_space<vmem>>, %arg4: memref<1x128x256xbf16, #tpu.memory_space<vmem>>, %arg5: memref<1x128x256xbf16, #tpu.memory_space<vmem>>, %arg6: memref<256x256xbf16, #tpu.memory_space<vmem>>, %arg7: memref<1x256xf32, #tpu.memory_space<vmem>>, %arg8: memref<1x128x256xbf16, #tpu.memory_space<vmem>>, %arg9: memref<2x128x1xf32, #tpu.memory_space<vmem>>, %arg10: memref<2x128x1xf32, #tpu.memory_space<vmem>>, %arg11: memref<128x256xf32, #tpu.memory_space<vmem>>) attributes {dimension_semantics = [#tpu.dimension_semantics<parallel>, #tpu.dimension_semantics<parallel>, #tpu.dimension_semantics<arbitrary>], iteration_bounds = array<i64: 2, 1, 1>, scalar_prefetch = 0 : i64, scratch_operands = 3 : i64, tpu.core_type = #tpu.core_type<tc>, window_params = [{transform_indices = @transform_0, window_bounds = array<i64: 1, 128, 256>}, {transform_indices = @transform_1, window_bounds = array<i64: 1, 128, 256>}, {transform_indices = @transform_2, window_bounds = array<i64: 1, 128, 256>}, {pipeline_mode = #tpu.pipeline_mode<synchronous>, transform_indices = @transform_3, window_bounds = array<i64: 256, 256>}, {pipeline_mode = #tpu.pipeline_mode<synchronous>, transform_indices = @transform_4, window_bounds = array<i64: 1, 256>}, {transform_indices = @transform_5, window_bounds = array<i64: 1, 128, 256>}]} {
    %c0_i32 = arith.constant 0 : i32
    %0 = arith.cmpi eq, %arg2, %c0_i32 : i32
    %1 = arith.extui %0 : i1 to i32
    %c0_i32_0 = arith.constant 0 : i32
    %2 = arith.cmpi ne, %1, %c0_i32_0 : i32
    scf.if %2 {
      %cst_48 = arith.constant 0xFF800000 : f32
      %78 = vector.broadcast %cst_48 : f32 to vector<2x128x1xf32>
      %c0_49 = arith.constant 0 : index
      %c0_50 = arith.constant 0 : index
      %c0_51 = arith.constant 0 : index
      %79 = vector.load %arg9[%c0_49, %c0_50, %c0_51] : memref<2x128x1xf32, #tpu.memory_space<vmem>>, vector<2x128x1xf32>
      tpu.vector_store %arg9[%c0_49, %c0_50, %c0_51], %78 {strides = array<i32>} : memref<2x128x1xf32, #tpu.memory_space<vmem>>, vector<2x128x1xf32>,
      %cst_52 = arith.constant 0.000000e+00 : f32
      %80 = vector.broadcast %cst_52 : f32 to vector<2x128x1xf32>
      %c0_53 = arith.constant 0 : index
      %c0_54 = arith.constant 0 : index
      %c0_55 = arith.constant 0 : index
      %81 = vector.load %arg10[%c0_53, %c0_54, %c0_55] : memref<2x128x1xf32, #tpu.memory_space<vmem>>, vector<2x128x1xf32>
      tpu.vector_store %arg10[%c0_53, %c0_54, %c0_55], %80 {strides = array<i32>} : memref<2x128x1xf32, #tpu.memory_space<vmem>>, vector<2x128x1xf32>,
      %cst_56 = arith.constant 0.000000e+00 : f32
      %82 = vector.broadcast %cst_56 : f32 to vector<128x256xf32>
      %c0_57 = arith.constant 0 : index
      %c0_58 = arith.constant 0 : index
      %83 = vector.load %arg11[%c0_57, %c0_58] : memref<128x256xf32, #tpu.memory_space<vmem>>, vector<128x256xf32>
      tpu.vector_store %arg11[%c0_57, %c0_58], %82 {strides = array<i32>} : memref<128x256xf32, #tpu.memory_space<vmem>>, vector<128x256xf32>,
    } else {
    }
    %c0 = arith.constant 0 : index
    %c0_1 = arith.constant 0 : index
    %c0_2 = arith.constant 0 : index
    %3 = vector.load %arg3[%c0, %c0_1, %c0_2] : memref<1x128x256xbf16, #tpu.memory_space<vmem>>, vector<1x128x256xbf16>
    %4 = vector.shape_cast %3 : vector<1x128x256xbf16> to vector<128x256xbf16>
    %c0_3 = arith.constant 0 : index
    %c0_4 = arith.constant 0 : index
    %c0_5 = arith.constant 0 : index
    %5 = vector.load %arg4[%c0_3, %c0_4, %c0_5] : memref<1x128x256xbf16, #tpu.memory_space<vmem>>, vector<1x128x256xbf16>
    %6 = vector.shape_cast %5 : vector<1x128x256xbf16> to vector<128x256xbf16>
    %c0_6 = arith.constant 0 : index
    %c0_7 = arith.constant 0 : index
    %c0_8 = arith.constant 0 : index
    %7 = vector.load %arg5[%c0_6, %c0_7, %c0_8] : memref<1x128x256xbf16, #tpu.memory_space<vmem>>, vector<1x128x256xbf16>
    %8 = vector.shape_cast %7 : vector<1x128x256xbf16> to vector<128x256xbf16>
    %9 = vector.extract_strided_slice %4 {offsets = [0, 0], sizes = [128, 128], strides = [1, 1]} : vector<128x256xbf16> to vector<128x128xbf16>
    %10 = vector.extract_strided_slice %6 {offsets = [0, 0], sizes = [128, 128], strides = [1, 1]} : vector<128x256xbf16> to vector<128x128xbf16>
    %cst = arith.constant dense<0.000000e+00> : vector<128x128xf32>
    %11 = tpu.matmul %9, %10, %cst {dimension_numbers = #tpu.dot_dimension_numbers<[1], [1], [0], [0], [0, 0, 1, 0], [], []>} : vector<128x128xbf16>, vector<128x128xbf16>, vector<128x128xf32> -> vector<128x128xf32>
    %c0_9 = arith.constant 0 : index
    %c0_10 = arith.constant 0 : index
    %c0_11 = arith.constant 0 : index
    %12 = vector.load %arg9[%c0_9, %c0_10, %c0_11] : memref<2x128x1xf32, #tpu.memory_space<vmem>>, vector<1x128x1xf32>
    %13 = vector.shape_cast %12 : vector<1x128x1xf32> to vector<128x1xf32>
    %cst_12 = arith.constant dense<0xFF800000> : vector<128xf32>
    %14 = vector.multi_reduction <maximumf>, %11, %cst_12 [1] : vector<128x128xf32> to vector<128xf32>
    %15 = vector.shape_cast %14 : vector<128xf32> to vector<128x1xf32>
    %16 = arith.maximumf %13, %15 : vector<128x1xf32>
    %17 = arith.subf %13, %16 : vector<128x1xf32>
    %18 = math.exp %17 : vector<128x1xf32>
    %19 = vector.broadcast %16 : vector<128x1xf32> to vector<128x128xf32>
    %20 = arith.subf %11, %19 : vector<128x128xf32>
    %21 = math.exp %20 : vector<128x128xf32>
    %c0_13 = arith.constant 0 : index
    %c0_14 = arith.constant 0 : index
    %c0_15 = arith.constant 0 : index
    %22 = vector.load %arg10[%c0_13, %c0_14, %c0_15] : memref<2x128x1xf32, #tpu.memory_space<vmem>>, vector<1x128x1xf32>
    %23 = vector.shape_cast %22 : vector<1x128x1xf32> to vector<128x1xf32>
    %24 = arith.mulf %18, %23 : vector<128x1xf32>
    %cst_16 = arith.constant dense<0.000000e+00> : vector<128xf32>
    %25 = vector.multi_reduction <add>, %21, %cst_16 [1] : vector<128x128xf32> to vector<128xf32>
    %26 = vector.shape_cast %25 : vector<128xf32> to vector<128x1xf32>
    %27 = arith.addf %24, %26 : vector<128x1xf32>
    %c0_17 = arith.constant 0 : index
    %c0_18 = arith.constant 0 : index
    %c0_19 = arith.constant 0 : index
    %28 = vector.load %arg10[%c0_17, %c0_18, %c0_19] : memref<2x128x1xf32, #tpu.memory_space<vmem>>, vector<1x128x1xf32>
    %29 = vector.shape_cast %28 : vector<1x128x1xf32> to vector<128x1xf32>
    %30 = vector.shape_cast %27 : vector<128x1xf32> to vector<1x128x1xf32>
    tpu.vector_store %arg10[%c0_17, %c0_18, %c0_19], %30 {strides = array<i32>} : memref<2x128x1xf32, #tpu.memory_space<vmem>>, vector<1x128x1xf32>,
    %31 = arith.truncf %21 : vector<128x128xf32> to vector<128x128xbf16>
    %32 = vector.extract_strided_slice %8 {offsets = [0, 0], sizes = [128, 128], strides = [1, 1]} : vector<128x256xbf16> to vector<128x128xbf16>
    %cst_20 = arith.constant dense<0.000000e+00> : vector<128x128xf32>
    %33 = tpu.matmul %31, %32, %cst_20 {dimension_numbers = #tpu.dot_dimension_numbers<[1], [0], [0], [1], [0, 0, 1, 1], [], []>} : vector<128x128xbf16>, vector<128x128xbf16>, vector<128x128xf32> -> vector<128x128xf32>
    %c0_21 = arith.constant 0 : index
    %c0_22 = arith.constant 0 : index
    %34 = vector.load %arg11[%c0_21, %c0_22] : memref<128x256xf32, #tpu.memory_space<vmem>>, vector<128x128xf32>
    %35 = vector.broadcast %18 : vector<128x1xf32> to vector<128x128xf32>
    %36 = arith.mulf %35, %34 : vector<128x128xf32>
    %37 = arith.addf %36, %33 : vector<128x128xf32>
    %c0_23 = arith.constant 0 : index
    %c0_24 = arith.constant 0 : index
    %38 = vector.load %arg11[%c0_23, %c0_24] : memref<128x256xf32, #tpu.memory_space<vmem>>, vector<128x128xf32>
    tpu.vector_store %arg11[%c0_23, %c0_24], %37 {strides = array<i32>} : memref<128x256xf32, #tpu.memory_space<vmem>>, vector<128x128xf32>,
    %c0_25 = arith.constant 0 : index
    %c0_26 = arith.constant 0 : index
    %c0_27 = arith.constant 0 : index
    %39 = vector.load %arg9[%c0_25, %c0_26, %c0_27] : memref<2x128x1xf32, #tpu.memory_space<vmem>>, vector<1x128x1xf32>
    %40 = vector.shape_cast %39 : vector<1x128x1xf32> to vector<128x1xf32>
    %41 = vector.shape_cast %16 : vector<128x1xf32> to vector<1x128x1xf32>
    tpu.vector_store %arg9[%c0_25, %c0_26, %c0_27], %41 {strides = array<i32>} : memref<2x128x1xf32, #tpu.memory_space<vmem>>, vector<1x128x1xf32>,
    %42 = vector.extract_strided_slice %4 {offsets = [0, 128], sizes = [128, 128], strides = [1, 1]} : vector<128x256xbf16> to vector<128x128xbf16>
    %43 = vector.extract_strided_slice %6 {offsets = [0, 128], sizes = [128, 128], strides = [1, 1]} : vector<128x256xbf16> to vector<128x128xbf16>
    %cst_28 = arith.constant dense<0.000000e+00> : vector<128x128xf32>
    %44 = tpu.matmul %42, %43, %cst_28 {dimension_numbers = #tpu.dot_dimension_numbers<[1], [1], [0], [0], [0, 0, 1, 0], [], []>} : vector<128x128xbf16>, vector<128x128xbf16>, vector<128x128xf32> -> vector<128x128xf32>
    %c1 = arith.constant 1 : index
    %c0_29 = arith.constant 0 : index
    %c0_30 = arith.constant 0 : index
    %45 = vector.load %arg9[%c1, %c0_29, %c0_30] : memref<2x128x1xf32, #tpu.memory_space<vmem>>, vector<1x128x1xf32>
    %46 = vector.shape_cast %45 : vector<1x128x1xf32> to vector<128x1xf32>
    %cst_31 = arith.constant dense<0xFF800000> : vector<128xf32>
    %47 = vector.multi_reduction <maximumf>, %44, %cst_31 [1] : vector<128x128xf32> to vector<128xf32>
    %48 = vector.shape_cast %47 : vector<128xf32> to vector<128x1xf32>
    %49 = arith.maximumf %46, %48 : vector<128x1xf32>
    %50 = arith.subf %46, %49 : vector<128x1xf32>
    %51 = math.exp %50 : vector<128x1xf32>
    %52 = vector.broadcast %49 : vector<128x1xf32> to vector<128x128xf32>
    %53 = arith.subf %44, %52 : vector<128x128xf32>
    %54 = math.exp %53 : vector<128x128xf32>
    %c1_32 = arith.constant 1 : index
    %c0_33 = arith.constant 0 : index
    %c0_34 = arith.constant 0 : index
    %55 = vector.load %arg10[%c1_32, %c0_33, %c0_34] : memref<2x128x1xf32, #tpu.memory_space<vmem>>, vector<1x128x1xf32>
    %56 = vector.shape_cast %55 : vector<1x128x1xf32> to vector<128x1xf32>
    %57 = arith.mulf %51, %56 : vector<128x1xf32>
    %cst_35 = arith.constant dense<0.000000e+00> : vector<128xf32>
    %58 = vector.multi_reduction <add>, %54, %cst_35 [1] : vector<128x128xf32> to vector<128xf32>
    %59 = vector.shape_cast %58 : vector<128xf32> to vector<128x1xf32>
    %60 = arith.addf %57, %59 : vector<128x1xf32>
    %c1_36 = arith.constant 1 : index
    %c0_37 = arith.constant 0 : index
    %c0_38 = arith.constant 0 : index
    %61 = vector.load %arg10[%c1_36, %c0_37, %c0_38] : memref<2x128x1xf32, #tpu.memory_space<vmem>>, vector<1x128x1xf32>
    %62 = vector.shape_cast %61 : vector<1x128x1xf32> to vector<128x1xf32>
    %63 = vector.shape_cast %60 : vector<128x1xf32> to vector<1x128x1xf32>
    tpu.vector_store %arg10[%c1_36, %c0_37, %c0_38], %63 {strides = array<i32>} : memref<2x128x1xf32, #tpu.memory_space<vmem>>, vector<1x128x1xf32>,
    %64 = arith.truncf %54 : vector<128x128xf32> to vector<128x128xbf16>
    %65 = vector.extract_strided_slice %8 {offsets = [0, 128], sizes = [128, 128], strides = [1, 1]} : vector<128x256xbf16> to vector<128x128xbf16>
    %cst_39 = arith.constant dense<0.000000e+00> : vector<128x128xf32>
    %66 = tpu.matmul %64, %65, %cst_39 {dimension_numbers = #tpu.dot_dimension_numbers<[1], [0], [0], [1], [0, 0, 1, 1], [], []>} : vector<128x128xbf16>, vector<128x128xbf16>, vector<128x128xf32> -> vector<128x128xf32>
    %c0_40 = arith.constant 0 : index
    %c128 = arith.constant 128 : index
    %67 = vector.load %arg11[%c0_40, %c128] : memref<128x256xf32, #tpu.memory_space<vmem>>, vector<128x128xf32>
    %68 = vector.broadcast %51 : vector<128x1xf32> to vector<128x128xf32>
    %69 = arith.mulf %68, %67 : vector<128x128xf32>
    %70 = arith.addf %69, %66 : vector<128x128xf32>
    %c0_41 = arith.constant 0 : index
    %c128_42 = arith.constant 128 : index
    %71 = vector.load %arg11[%c0_41, %c128_42] : memref<128x256xf32, #tpu.memory_space<vmem>>, vector<128x128xf32>
    tpu.vector_store %arg11[%c0_41, %c128_42], %70 {strides = array<i32>} : memref<128x256xf32, #tpu.memory_space<vmem>>, vector<128x128xf32>,
    %c1_43 = arith.constant 1 : index
    %c0_44 = arith.constant 0 : index
    %c0_45 = arith.constant 0 : index
    %72 = vector.load %arg9[%c1_43, %c0_44, %c0_45] : memref<2x128x1xf32, #tpu.memory_space<vmem>>, vector<1x128x1xf32>
    %73 = vector.shape_cast %72 : vector<1x128x1xf32> to vector<128x1xf32>
    %74 = vector.shape_cast %49 : vector<128x1xf32> to vector<1x128x1xf32>
    tpu.vector_store %arg9[%c1_43, %c0_44, %c0_45], %74 {strides = array<i32>} : memref<2x128x1xf32, #tpu.memory_space<vmem>>, vector<1x128x1xf32>,
    %c0_i32_46 = arith.constant 0 : i32
    %75 = arith.cmpi eq, %arg2, %c0_i32_46 : i32
    %76 = arith.extui %75 : i1 to i32
    %c0_i32_47 = arith.constant 0 : i32
    %77 = arith.cmpi ne, %76, %c0_i32_47 : i32
    scf.if %77 {
      %c0_48 = arith.constant 0 : index
      %c0_49 = arith.constant 0 : index
      %78 = vector.load %arg11[%c0_48, %c0_49] : memref<128x256xf32, #tpu.memory_space<vmem>>, vector<128x128xf32>
      %c0_50 = arith.constant 0 : index
      %c0_51 = arith.constant 0 : index
      %c0_52 = arith.constant 0 : index
      %79 = vector.load %arg10[%c0_50, %c0_51, %c0_52] : memref<2x128x1xf32, #tpu.memory_space<vmem>>, vector<1x128x1xf32>
      %80 = vector.shape_cast %79 : vector<1x128x1xf32> to vector<128x1xf32>
      %cst_53 = arith.constant 1.000000e+00 : f32
      %81 = vector.broadcast %cst_53 : f32 to vector<128x1xf32>
      %82 = arith.divf %81, %80 : vector<128x1xf32>
      %83 = vector.broadcast %82 : vector<128x1xf32> to vector<128x128xf32>
      %84 = arith.mulf %78, %83 : vector<128x128xf32>
      %c0_54 = arith.constant 0 : index
      %c0_55 = arith.constant 0 : index
      %85 = vector.load %arg11[%c0_54, %c0_55] : memref<128x256xf32, #tpu.memory_space<vmem>>, vector<128x128xf32>
      tpu.vector_store %arg11[%c0_54, %c0_55], %84 {strides = array<i32>} : memref<128x256xf32, #tpu.memory_space<vmem>>, vector<128x128xf32>,
      %c0_56 = arith.constant 0 : index
      %c128_57 = arith.constant 128 : index
      %86 = vector.load %arg11[%c0_56, %c128_57] : memref<128x256xf32, #tpu.memory_space<vmem>>, vector<128x128xf32>
      %c1_58 = arith.constant 1 : index
      %c0_59 = arith.constant 0 : index
      %c0_60 = arith.constant 0 : index
      %87 = vector.load %arg10[%c1_58, %c0_59, %c0_60] : memref<2x128x1xf32, #tpu.memory_space<vmem>>, vector<1x128x1xf32>
      %88 = vector.shape_cast %87 : vector<1x128x1xf32> to vector<128x1xf32>
      %cst_61 = arith.constant 1.000000e+00 : f32
      %89 = vector.broadcast %cst_61 : f32 to vector<128x1xf32>
      %90 = arith.divf %89, %88 : vector<128x1xf32>
      %91 = vector.broadcast %90 : vector<128x1xf32> to vector<128x128xf32>
      %92 = arith.mulf %86, %91 : vector<128x128xf32>
      %c0_62 = arith.constant 0 : index
      %c128_63 = arith.constant 128 : index
      %93 = vector.load %arg11[%c0_62, %c128_63] : memref<128x256xf32, #tpu.memory_space<vmem>>, vector<128x128xf32>
      tpu.vector_store %arg11[%c0_62, %c128_63], %92 {strides = array<i32>} : memref<128x256xf32, #tpu.memory_space<vmem>>, vector<128x128xf32>,
      %c0_64 = arith.constant 0 : index
      %c0_65 = arith.constant 0 : index
      %94 = vector.load %arg11[%c0_64, %c0_65] : memref<128x256xf32, #tpu.memory_space<vmem>>, vector<128x256xf32>
      %95 = arith.truncf %94 : vector<128x256xf32> to vector<128x256xbf16>
      %c0_66 = arith.constant 0 : index
      %c0_67 = arith.constant 0 : index
      %96 = vector.load %arg6[%c0_66, %c0_67] : memref<256x256xbf16, #tpu.memory_space<vmem>>, vector<256x256xbf16>
      %cst_68 = arith.constant dense<0.000000e+00> : vector<128x256xf32>
      %97 = tpu.matmul %95, %96, %cst_68 {dimension_numbers = #tpu.dot_dimension_numbers<[1], [0], [0], [1], [0, 0, 1, 1], [], []>} : vector<128x256xbf16>, vector<256x256xbf16>, vector<128x256xf32> -> vector<128x256xf32>
      %c0_69 = arith.constant 0 : index
      %c0_70 = arith.constant 0 : index
      %98 = vector.load %arg7[%c0_69, %c0_70] : memref<1x256xf32, #tpu.memory_space<vmem>>, vector<1x256xf32>
      %99 = vector.broadcast %98 : vector<1x256xf32> to vector<128x256xf32>
      %100 = arith.addf %97, %99 : vector<128x256xf32>
      %101 = arith.truncf %100 : vector<128x256xf32> to vector<128x256xbf16>
      %c0_71 = arith.constant 0 : index
      %c0_72 = arith.constant 0 : index
      %c0_73 = arith.constant 0 : index
      %102 = vector.load %arg8[%c0_71, %c0_72, %c0_73] : memref<1x128x256xbf16, #tpu.memory_space<vmem>>, vector<1x128x256xbf16>
      %103 = vector.shape_cast %102 : vector<1x128x256xbf16> to vector<128x256xbf16>
      %104 = vector.shape_cast %101 : vector<128x256xbf16> to vector<1x128x256xbf16>
      tpu.vector_store %arg8[%c0_71, %c0_72, %c0_73], %104 {strides = array<i32>} : memref<1x128x256xbf16, #tpu.memory_space<vmem>>, vector<1x128x256xbf16>,
    } else {
    }
    return
  }
  func.func @transform_0(%arg0: i32, %arg1: i32, %arg2: i32) -> (i32, i32, i32) {
    %c0_i32 = arith.constant 0 : i32
    %c0_i32_0 = arith.constant 0 : i32
    return %arg0, %arg1, %c0_i32 : i32, i32, i32
  }
  func.func @transform_1(%arg0: i32, %arg1: i32, %arg2: i32) -> (i32, i32, i32) {
    %c0_i32 = arith.constant 0 : i32
    %c0_i32_0 = arith.constant 0 : i32
    return %arg0, %arg2, %c0_i32 : i32, i32, i32
  }
  func.func @transform_2(%arg0: i32, %arg1: i32, %arg2: i32) -> (i32, i32, i32) {
    %c0_i32 = arith.constant 0 : i32
    %c0_i32_0 = arith.constant 0 : i32
    return %arg0, %arg2, %c0_i32 : i32, i32, i32
  }
  func.func @transform_3(%arg0: i32, %arg1: i32, %arg2: i32) -> (i32, i32) {
    %c0_i32 = arith.constant 0 : i32
    %c0_i32_0 = arith.constant 0 : i32
    %c0_i32_1 = arith.constant 0 : i32
    return %c0_i32, %c0_i32_0 : i32, i32
  }
  func.func @transform_4(%arg0: i32, %arg1: i32, %arg2: i32) -> (i32, i32) {
    %c0_i32 = arith.constant 0 : i32
    %c0_i32_0 = arith.constant 0 : i32
    %c0_i32_1 = arith.constant 0 : i32
    return %c0_i32, %c0_i32_0 : i32, i32
  }
  func.func @transform_5(%arg0: i32, %arg1: i32, %arg2: i32) -> (i32, i32, i32) {
    %c0_i32 = arith.constant 0 : i32
    %c0_i32_0 = arith.constant 0 : i32
    return %arg0, %arg1, %c0_i32 : i32, i32, i32
  }
}

</mosaic_0001>

<llo_original>
// kernel: wan_self_attention.2
$region0: #{wan_self_attention.2}
  #allocation0 [shape = 'u32[]', space=smem, size = 0x4, offset = 0x4, fixed_abs, tag = 'smem constant byte address 0x4 - core index']
  #allocation1 [shape = 'u32[144,128]{1,0:T(1,128)}', space=vmem, size = 0x12000, scoped, tag = 'internal scratch']
  #allocation2 [shape = 'f32[64,768]{1,0:T(8,128)}', space=vmem, size = 0x30000, scoped, tag = 'scratch operand']
  %s0 = inlined_call_operand.vmem [shape: bf16[2,128,256], index: 0, kind: input, shape index: {}]
  %s1 = inlined_call_operand.vmem [shape: bf16[256,768], index: 1, kind: input, shape index: {}]
  %s2 = inlined_call_operand.vmem [shape: f32[1,768], index: 2, kind: input, shape index: {}]
  %s3 = inlined_call_operand.vmem [shape: f32[1,256], index: 3, kind: input, shape index: {}]
  %s4 = inlined_call_operand.vmem [shape: f32[1,256], index: 4, kind: input, shape index: {}]
  %s5 = inlined_call_operand.vmem [shape: f32[128,256], index: 5, kind: input, shape index: {}]
  %s6 = inlined_call_operand.vmem [shape: f32[128,256], index: 6, kind: input, shape index: {}]
  %s7 = inlined_call_operand.vmem [shape: bf16[2,128,256], index: 7, kind: output, shape index: {0}]
  %s8 = inlined_call_operand.vmem [shape: bf16[2,128,256], index: 8, kind: output, shape index: {1}]
  %s9 = inlined_call_operand.vmem [shape: bf16[2,128,256], index: 9, kind: output, shape index: {2}]
  %10 = xla_tuple %s7, %s8, %s9
  %s11 = sld [smem:[#allocation0]]
  $region126: #{wan_self_attention.2} parent=0
    _
  %s13 = ssub.s32 1, %s11
  %s14 = scalar_select 0, %s13, %s11
  $region1: #{wan_self_attention.2} parent=0
    #allocation3 [shape = 'u8[32768]{0}', space=vmem, size = 0x8000, scoped, tag = 'input window, operand 0']
    loop: start=0, step=1, limit=10
    $region2: #{wan_self_attention.2} parent=1 // loop_pre_header
      _
    $region3: #{wan_self_attention.2} parent=1 // loop_header
      %s16 = sphi 0, %s20
      %p17 = scmp.ge.s32.totalorder %s16, 10
      %s23 = sphi 0, %s42
      %s24 = sphi 0, %s38
      %s25 = sphi 0, %s34
      %s26 = sphi 0, %s23
      %s27 = sphi 0, %s24
      %s28 = sphi 0, %s25
      %s29 = sphi 0, %s26
      %s30 = sphi 0, %s27
      %s31 = sphi 0, %s28
      %s49 = sphi 0, %s51
      %s52 = sphi 0, %s49
      %s53 = sphi 0, %s52
      %s69 = sphi 0, %s53
      %s75 = sphi 0, %s77
      %s78 = sphi 0, %s75
      %s79 = sphi 0, %s78
      %s95 = sphi 0, %s79
      %s99 = sphi 0, %s99
      %s101 = sphi 0, %s99
      %s102 = sphi 0, %s101
      %s116 = sphi 0, %s102
      %s120 = sphi 0, %s120
      %s122 = sphi 0, %s120
      %s123 = sphi 0, %s122
      %s137 = sphi 0, %s123
      %s141 = sphi 0, %s141
      %s143 = sphi 0, %s141
      %s144 = sphi 0, %s143
      %s158 = sphi 0, %s144
      %s164 = sphi 0, %s166
      %s167 = sphi 0, %s164
      %s168 = sphi 0, %s167
      %s184 = sphi 0, %s168
      %s190 = sphi 0, %s192
      %s193 = sphi 0, %s190
      %s194 = sphi 0, %s193
      %s210 = sphi 0, %s194
      %s218 = sphi 0, %s220
      %s221 = sphi 0, %s218
      %s222 = sphi 0, %s221
      %s238 = sphi 0, %s222
      %s246 = sphi 0, %s248
      %s249 = sphi 0, %s246
      %s250 = sphi 0, %s249
      %s266 = sphi 0, %s250
      %s274 = sphi 0, %s276
      %s277 = sphi 0, %s274
      %s278 = sphi 0, %s277
      %s294 = sphi 0, %s278
    $region4: #{wan_self_attention.2} parent=1 // loop_header_branch
      %19 = sbr.rel (%p17) target = $region8
    $region5: #{wan_self_attention.2} parent=1 // loop_body
      %s21 = ssub.s32 %s16, 1
      %s22 = ssub.s32 %s16, 2
      %s32 = sadd.s32 1, %s25
      %p33 = scmp.ge.s32.totalorder %s32, 2
      %s34 = scalar_select %p33, 0, %s32
      %s35 = sadd.s32 1, %s24
      %s36 = scalar_select %p33, %s35, %s24
      %p37 = scmp.ge.s32.totalorder %s36, 2
      %s38 = scalar_select %p37, 0, %s36
      %s39 = sadd.s32 1, %s23
      %s40 = scalar_select %p37, %s39, %s23
      %p41 = scmp.ge.s32.totalorder %s40, 2
      %s42 = scalar_select %p41, 0, %s40
      %s43 = ssub.s32 %s23, %s42
      %s44 = ssub.s32 %s24, %s38
      %s45 = sor.u32 %s43, %s44
      %s46 = ssub.s32 %s25, %s34
      %s47 = sor.u32 %s45, %s46
      %p48 = scmp.eq.s32.totalorder %s47, 0
      %s50 = sadd.s32 %s49, 1
      %s51 = scalar_select %p48, %s49, %s50
      %p54 = pneg %p48
      %p55 = scmp.eq.s32.totalorder %s16, 7
      %p56 = por %p54, %p55
      %p57 = scmp.ne.s32.totalorder %s49, %s52
      %p58 = scmp.eq.s32.totalorder %s16, 0
      %p59 = por %p57, %p58
      %p60 = scmp.ne.s32.totalorder %s49, %s52
      %p61 = scmp.eq.s32.totalorder %s21, 7
      %p62 = por %p60, %p61
      %p63 = scmp.ne.s32.totalorder %s52, %s53
      %p64 = scmp.eq.s32.totalorder %s21, 0
      %p65 = por %p63, %p64
      %p66 = scmp.ne.s32.totalorder %s52, %s53
      %p67 = scmp.eq.s32.totalorder %s22, 7
      %p68 = por %p66, %p67
      %p70 = scmp.ne.s32.totalorder %s53, %s69
      %p71 = scmp.eq.s32.totalorder %s22, 0
      %p72 = por %p70, %p71
      %s73 = ssub.s32 %s25, %s34
      %p74 = scmp.eq.s32.totalorder %s73, 0
      %s76 = sadd.s32 %s75, 1
      %s77 = scalar_select %p74, %s75, %s76
      %p80 = pneg %p74
      %p81 = scmp.eq.s32.totalorder %s16, 7
      %p82 = por %p80, %p81
      %p83 = scmp.ne.s32.totalorder %s75, %s78
      %p84 = scmp.eq.s32.totalorder %s16, 0
      %p85 = por %p83, %p84
      %p86 = scmp.ne.s32.totalorder %s75, %s78
      %p87 = scmp.eq.s32.totalorder %s21, 7
      %p88 = por %p86, %p87
      %p89 = scmp.ne.s32.totalorder %s78, %s79
      %p90 = scmp.eq.s32.totalorder %s21, 0
      %p91 = por %p89, %p90
      %p92 = scmp.ne.s32.totalorder %s78, %s79
      %p93 = scmp.eq.s32.totalorder %s22, 7
      %p94 = por %p92, %p93
      %p96 = scmp.ne.s32.totalorder %s79, %s95
      %p97 = scmp.eq.s32.totalorder %s22, 0
      %p98 = por %p96, %p97
      %s100 = sadd.s32 %s99, 1
      %p103 = scmp.eq.s32.totalorder %s16, 7
      %p104 = scmp.ne.s32.totalorder %s99, %s101
      %p105 = scmp.eq.s32.totalorder %s16, 0
      %p106 = por %p104, %p105
      %p107 = scmp.ne.s32.totalorder %s99, %s101
      %p108 = scmp.eq.s32.totalorder %s21, 7
      %p109 = por %p107, %p108
      %p110 = scmp.ne.s32.totalorder %s101, %s102
      %p111 = scmp.eq.s32.totalorder %s21, 0
      %p112 = por %p110, %p111
      %p113 = scmp.ne.s32.totalorder %s101, %s102
      %p114 = scmp.eq.s32.totalorder %s22, 7
      %p115 = por %p113, %p114
      %p117 = scmp.ne.s32.totalorder %s102, %s116
      %p118 = scmp.eq.s32.totalorder %s22, 0
      %p119 = por %p117, %p118
      %s121 = sadd.s32 %s120, 1
      %p124 = scmp.eq.s32.totalorder %s16, 7
      %p125 = scmp.ne.s32.totalorder %s120, %s122
      %p126 = scmp.eq.s32.totalorder %s16, 0
      %p127 = por %p125, %p126
      %p128 = scmp.ne.s32.totalorder %s120, %s122
      %p129 = scmp.eq.s32.totalorder %s21, 7
      %p130 = por %p128, %p129
      %p131 = scmp.ne.s32.totalorder %s122, %s123
      %p132 = scmp.eq.s32.totalorder %s21, 0
      %p133 = por %p131, %p132
      %p134 = scmp.ne.s32.totalorder %s122, %s123
      %p135 = scmp.eq.s32.totalorder %s22, 7
      %p136 = por %p134, %p135
      %p138 = scmp.ne.s32.totalorder %s123, %s137
      %p139 = scmp.eq.s32.totalorder %s22, 0
      %p140 = por %p138, %p139
      %s142 = sadd.s32 %s141, 1
      %p145 = scmp.eq.s32.totalorder %s16, 7
      %p146 = scmp.ne.s32.totalorder %s141, %s143
      %p147 = scmp.eq.s32.totalorder %s16, 0
      %p148 = por %p146, %p147
      %p149 = scmp.ne.s32.totalorder %s141, %s143
      %p150 = scmp.eq.s32.totalorder %s21, 7
      %p151 = por %p149, %p150
      %p152 = scmp.ne.s32.totalorder %s143, %s144
      %p153 = scmp.eq.s32.totalorder %s21, 0
      %p154 = por %p152, %p153
      %p155 = scmp.ne.s32.totalorder %s143, %s144
      %p156 = scmp.eq.s32.totalorder %s22, 7
      %p157 = por %p155, %p156
      %p159 = scmp.ne.s32.totalorder %s144, %s158
      %p160 = scmp.eq.s32.totalorder %s22, 0
      %p161 = por %p159, %p160
      %s162 = ssub.s32 %s24, %s38
      %p163 = scmp.eq.s32.totalorder %s162, 0
      %s165 = sadd.s32 %s164, 1
      %s166 = scalar_select %p163, %s164, %s165
      %p169 = pneg %p163
      %p170 = scmp.eq.s32.totalorder %s16, 7
      %p171 = por %p169, %p170
      %p172 = scmp.ne.s32.totalorder %s164, %s167
      %p173 = scmp.eq.s32.totalorder %s16, 0
      %p174 = por %p172, %p173
      %p175 = scmp.ne.s32.totalorder %s164, %s167
      %p176 = scmp.eq.s32.totalorder %s21, 7
      %p177 = por %p175, %p176
      %p178 = scmp.ne.s32.totalorder %s167, %s168
      %p179 = scmp.eq.s32.totalorder %s21, 0
      %p180 = por %p178, %p179
      %p181 = scmp.ne.s32.totalorder %s167, %s168
      %p182 = scmp.eq.s32.totalorder %s22, 7
      %p183 = por %p181, %p182
      %p185 = scmp.ne.s32.totalorder %s168, %s184
      %p186 = scmp.eq.s32.totalorder %s22, 0
      %p187 = por %p185, %p186
      %s188 = ssub.s32 %s24, %s38
      %p189 = scmp.eq.s32.totalorder %s188, 0
      %s191 = sadd.s32 %s190, 1
      %s192 = scalar_select %p189, %s190, %s191
      %p195 = pneg %p189
      %p196 = scmp.eq.s32.totalorder %s16, 7
      %p197 = por %p195, %p196
      %p198 = scmp.ne.s32.totalorder %s190, %s193
      %p199 = scmp.eq.s32.totalorder %s16, 0
      %p200 = por %p198, %p199
      %p201 = scmp.ne.s32.totalorder %s190, %s193
      %p202 = scmp.eq.s32.totalorder %s21, 7
      %p203 = por %p201, %p202
      %p204 = scmp.ne.s32.totalorder %s193, %s194
      %p205 = scmp.eq.s32.totalorder %s21, 0
      %p206 = por %p204, %p205
      %p207 = scmp.ne.s32.totalorder %s193, %s194
      %p208 = scmp.eq.s32.totalorder %s22, 7
      %p209 = por %p207, %p208
      %p211 = scmp.ne.s32.totalorder %s194, %s210
      %p212 = scmp.eq.s32.totalorder %s22, 0
      %p213 = por %p211, %p212
      %s214 = ssub.s32 %s23, %s42
      %s215 = ssub.s32 %s24, %s38
      %s216 = sor.u32 %s214, %s215
      %p217 = scmp.eq.s32.totalorder %s216, 0
      %s219 = sadd.s32 %s218, 1
      %s220 = scalar_select %p217, %s218, %s219
      %p223 = pneg %p217
      %p224 = scmp.eq.s32.totalorder %s16, 7
      %p225 = por %p223, %p224
      %p226 = scmp.ne.s32.totalorder %s218, %s221
      %p227 = scmp.eq.s32.totalorder %s16, 0
      %p228 = por %p226, %p227
      %p229 = scmp.ne.s32.totalorder %s218, %s221
      %p230 = scmp.eq.s32.totalorder %s21, 7
      %p231 = por %p229, %p230
      %p232 = scmp.ne.s32.totalorder %s221, %s222
      %p233 = scmp.eq.s32.totalorder %s21, 0
      %p234 = por %p232, %p233
      %p235 = scmp.ne.s32.totalorder %s221, %s222
      %p236 = scmp.eq.s32.totalorder %s22, 7
      %p237 = por %p235, %p236
      %p239 = scmp.ne.s32.totalorder %s222, %s238
      %p240 = scmp.eq.s32.totalorder %s22, 0
      %p241 = por %p239, %p240
      %s242 = ssub.s32 %s23, %s42
      %s243 = ssub.s32 %s24, %s38
      %s244 = sor.u32 %s242, %s243
      %p245 = scmp.eq.s32.totalorder %s244, 0
      %s247 = sadd.s32 %s246, 1
      %s248 = scalar_select %p245, %s246, %s247
      %p251 = pneg %p245
      %p252 = scmp.eq.s32.totalorder %s16, 7
      %p253 = por %p251, %p252
      %p254 = scmp.ne.s32.totalorder %s246, %s249
      %p255 = scmp.eq.s32.totalorder %s16, 0
      %p256 = por %p254, %p255
      %p257 = scmp.ne.s32.totalorder %s246, %s249
      %p258 = scmp.eq.s32.totalorder %s21, 7
      %p259 = por %p257, %p258
      %p260 = scmp.ne.s32.totalorder %s249, %s250
      %p261 = scmp.eq.s32.totalorder %s21, 0
      %p262 = por %p260, %p261
      %p263 = scmp.ne.s32.totalorder %s249, %s250
      %p264 = scmp.eq.s32.totalorder %s22, 7
      %p265 = por %p263, %p264
      %p267 = scmp.ne.s32.totalorder %s250, %s266
      %p268 = scmp.eq.s32.totalorder %s22, 0
      %p269 = por %p267, %p268
      %s270 = ssub.s32 %s23, %s42
      %s271 = ssub.s32 %s24, %s38
      %s272 = sor.u32 %s270, %s271
      %p273 = scmp.eq.s32.totalorder %s272, 0
      %s275 = sadd.s32 %s274, 1
      %s276 = scalar_select %p273, %s274, %s275
      %p279 = pneg %p273
      %p280 = scmp.eq.s32.totalorder %s16, 7
      %p281 = por %p279, %p280
      %p282 = scmp.ne.s32.totalorder %s274, %s277
      %p283 = scmp.eq.s32.totalorder %s16, 0
      %p284 = por %p282, %p283
      %p285 = scmp.ne.s32.totalorder %s274, %s277
      %p286 = scmp.eq.s32.totalorder %s21, 7
      %p287 = por %p285, %p286
      %p288 = scmp.ne.s32.totalorder %s277, %s278
      %p289 = scmp.eq.s32.totalorder %s21, 0
      %p290 = por %p288, %p289
      %p291 = scmp.ne.s32.totalorder %s277, %s278
      %p292 = scmp.eq.s32.totalorder %s22, 7
      %p293 = por %p291, %p292
      %p295 = scmp.ne.s32.totalorder %s278, %s294
      %p296 = scmp.eq.s32.totalorder %s22, 0
      %p297 = por %p295, %p296
      %p298 = scmp.le.s32.totalorder 1, %s16
      %p299 = scmp.lt.s32.totalorder %s16, 9
      %p300 = pnand %p298, %p299
      %p301 = pneg %p300
      // Predicated region
      $region9: #{wan_self_attention.2} parent=5 // pred_check
        _
      $region10: #{wan_self_attention.2} parent=5 // pred_check_branch
        %303 = sbr.rel (%p300) target = $region12
      $region11: #{wan_self_attention.2} parent=5 // pred_region
        %s304 = ssub.s32 %s16, 1
        // Predicated region
        $region13: #{wan_self_attention.2} parent=11 // pred_check
          %p305 = pneg %p112
        $region14: #{wan_self_attention.2} parent=11 // pred_check_branch
          %307 = sbr.rel (%p305) target = $region16
        $region15: #{wan_self_attention.2} parent=11 // pred_region
          _
        $region16: #{wan_self_attention.2} parent=11 // pred_fallthru
          _
        // Predicated region
        $region17: #{wan_self_attention.2} parent=11 // pred_check
          %p308 = pneg %p133
        $region18: #{wan_self_attention.2} parent=11 // pred_check_branch
          %310 = sbr.rel (%p308) target = $region20
        $region19: #{wan_self_attention.2} parent=11 // pred_region
          _
        $region20: #{wan_self_attention.2} parent=11 // pred_fallthru
          _
        // Predicated region
        $region21: #{wan_self_attention.2} parent=11 // pred_check
          %p311 = pneg %p154
        $region22: #{wan_self_attention.2} parent=11 // pred_check_branch
          %313 = sbr.rel (%p311) target = $region24
        $region23: #{wan_self_attention.2} parent=11 // pred_region
          _
        $region24: #{wan_self_attention.2} parent=11 // pred_fallthru
          _
      $region12: #{wan_self_attention.2} parent=5 // pred_fallthru
        _
      %p314 = scmp.lt.s32.totalorder %s16, 8
      // Predicated region
      $region25: #{wan_self_attention.2} parent=5 // pred_check
        %p315 = pneg %p314
      $region26: #{wan_self_attention.2} parent=5 // pred_check_branch
        %317 = sbr.rel (%p315) target = $region28
      $region27: #{wan_self_attention.2} parent=5 // pred_region
        // Predicated region
        $region29: #{wan_self_attention.2} parent=27 // pred_check
          %p318 = pneg %p59
        $region30: #{wan_self_attention.2} parent=27 // pred_check_branch
          %320 = sbr.rel (%p318) target = $region32
        $region31: #{wan_self_attention.2} parent=27 // pred_region
          %s321 = sand.u32 %s49, 1
          %s322 = sand.u32 %s49, 1
          %s323 = smul.addr %s322, 32
          %s324 = scalar_lea.vmem [#allocation3], %s323
          %s325 = smul.u32 8, %s24
          %s326 = smul.addr %s325, 2
          %s327 = sadd.s32 %s25, %s326
          %s328 = smul.addr %s23, 32
          %s329 = sadd.s32 %s327, %s328
          %s330 = smul.addr %s329, 4
          %s331 = scalar_lea.vmem %s0, %s330
          // Predicated region
          $region33: #{wan_self_attention.2} parent=31 // pred_check
            _
          $region34: #{wan_self_attention.2} parent=31 // pred_check_branch
            %333 = sbr.rel (0) target = $region36
          $region35: #{wan_self_attention.2} parent=31 // pred_region
            // Predicated region
            $region37: #{wan_self_attention.2} parent=35 // pred_check
              _
            $region38: #{wan_self_attention.2} parent=35 // pred_check_branch
              %335 = sbr.rel target = $region40
            $region39: #{wan_self_attention.2} parent=35 // pred_region
              // Predicated region
              $region52: #{wan_self_attention.2} parent=39 // pred_check
                _
              $region53: #{wan_self_attention.2} parent=39 // pred_check_branch
                %364 = sbr.rel (0) target = $region55
              $region54: #{wan_self_attention.2} parent=39 // pred_region
                loop: start=0, step=1, limit=1
                $region56: #{wan_self_attention.2} parent=54 // loop_pre_header
                  _
                $region57: #{wan_self_attention.2} parent=54 // loop_header
                  %s366 = sphi 0, %s370
                  %p367 = scmp.ge.s32.totalorder %s366, 1
                  %s371 = sphi %s331, %s331
                  %s372 = sphi %s324, %s324
                $region58: #{wan_self_attention.2} parent=54 // loop_header_branch
                  %369 = sbr.rel (%p367) target = $region62
                $region59: #{wan_self_attention.2} parent=54 // loop_body
                  _
                $region60: #{wan_self_attention.2} parent=54 // loop_footer
                  %s370 = sadd.s32 1, %s366
                $region61: #{wan_self_attention.2} parent=54 // loop_footer_branch
                  %365 = sbr.rel target = $region57
                $region62: #{wan_self_attention.2} parent=54 // loop_exit
                  _
                loop: start=0, step=1, limit=1
                $region63: #{wan_self_attention.2} parent=54 // loop_pre_header
                  _
                $region64: #{wan_self_attention.2} parent=54 // loop_header
                  %s375 = sphi 0, %s379
                  %p376 = scmp.ge.s32.totalorder %s375, 1
                  %s380 = sphi %s331, %s331
                  %s381 = sphi %s324, %s324
                $region65: #{wan_self_attention.2} parent=54 // loop_header_branch
                  %378 = sbr.rel (%p376) target = $region69
                $region66: #{wan_self_attention.2} parent=54 // loop_body
                  %v382 = vld [vmem:[%s380] sm:$0xf]
                  %383 = vst [vmem:[%s381] sm:$0xf] %v382
                  %v384 = vld [vmem:[%s380 + $0x8] sm:$0xf]
                  %385 = vst [vmem:[%s381 + $0x4] sm:$0xf] %v384
                  %v386 = vld [vmem:[%s380 + $0x10] sm:$0xf]
                  %387 = vst [vmem:[%s381 + $0x8] sm:$0xf] %v386
                  %v388 = vld [vmem:[%s380 + $0x18] sm:$0xf]
                  %389 = vst [vmem:[%s381 + $0xc] sm:$0xf] %v388
                  %v390 = vld [vmem:[%s380 + $0x20] sm:$0xf]
                  %391 = vst [vmem:[%s381 + $0x10] sm:$0xf] %v390
                  %v392 = vld [vmem:[%s380 + $0x28] sm:$0xf]
                  %393 = vst [vmem:[%s381 + $0x14] sm:$0xf] %v392
                  %v394 = vld [vmem:[%s380 + $0x30] sm:$0xf]
                  %395 = vst [vmem:[%s381 + $0x18] sm:$0xf] %v394
                  %v396 = vld [vmem:[%s380 + $0x38] sm:$0xf]
                  %397 = vst [vmem:[%s381 + $0x1c] sm:$0xf] %v396
                $region67: #{wan_self_attention.2} parent=54 // loop_footer
                  %s379 = sadd.s32 1, %s375
                $region68: #{wan_self_attention.2} parent=54 // loop_footer_branch
                  %374 = sbr.rel target = $region64
                $region69: #{wan_self_attention.2} parent=54 // loop_exit
                  _
              $region55: #{wan_self_attention.2} parent=39 // pred_fallthru
                _
            $region40: #{wan_self_attention.2} parent=35 // pred_fallthru
              _
            // Predicated region
            $region41: #{wan_self_attention.2} parent=35 // pred_check
              _
            $region42: #{wan_self_attention.2} parent=35 // pred_check_branch
              %337 = sbr.rel (0) target = $region44
            $region43: #{wan_self_attention.2} parent=35 // pred_region
              loop: start=0, step=1, limit=1
              $region45: #{wan_self_attention.2} parent=43 // loop_pre_header
                _
              $region46: #{wan_self_attention.2} parent=43 // loop_header
                %s340 = sphi 0, %s344
                %p341 = scmp.ge.s32.totalorder %s340, 1
                %s345 = sphi %s331, %s331
                %s346 = sphi %s324, %s324
              $region47: #{wan_self_attention.2} parent=43 // loop_header_branch
                %343 = sbr.rel (%p341) target = $region51
              $region48: #{wan_self_attention.2} parent=43 // loop_body
                %v347 = vld [vmem:[%s345] sm:$0xf]
                %348 = vst [vmem:[%s346] sm:$0xf] %v347
                %v349 = vld [vmem:[%s345 + $0x8] sm:$0xf]
                %350 = vst [vmem:[%s346 + $0x4] sm:$0xf] %v349
                %v351 = vld [vmem:[%s345 + $0x10] sm:$0xf]
                %352 = vst [vmem:[%s346 + $0x8] sm:$0xf] %v351
                %v353 = vld [vmem:[%s345 + $0x18] sm:$0xf]
                %354 = vst [vmem:[%s346 + $0xc] sm:$0xf] %v353
                %v355 = vld [vmem:[%s345 + $0x20] sm:$0xf]
                %356 = vst [vmem:[%s346 + $0x10] sm:$0xf] %v355
                %v357 = vld [vmem:[%s345 + $0x28] sm:$0xf]
                %358 = vst [vmem:[%s346 + $0x14] sm:$0xf] %v357
                %v359 = vld [vmem:[%s345 + $0x30] sm:$0xf]
                %360 = vst [vmem:[%s346 + $0x18] sm:$0xf] %v359
                %v361 = vld [vmem:[%s345 + $0x38] sm:$0xf]
                %362 = vst [vmem:[%s346 + $0x1c] sm:$0xf] %v361
              $region49: #{wan_self_attention.2} parent=43 // loop_footer
                %s344 = sadd.s32 1, %s340
              $region50: #{wan_self_attention.2} parent=43 // loop_footer_branch
                %339 = sbr.rel target = $region46
              $region51: #{wan_self_attention.2} parent=43 // loop_exit
                _
            $region44: #{wan_self_attention.2} parent=35 // pred_fallthru
              _
          $region36: #{wan_self_attention.2} parent=31 // pred_fallthru
            _
          %398 = vnop
        $region32: #{wan_self_attention.2} parent=27 // pred_fallthru
          _
        // Predicated region
        $region70: #{wan_self_attention.2} parent=27 // pred_check
          %p399 = pneg %p85
        $region71: #{wan_self_attention.2} parent=27 // pred_check_branch
          %401 = sbr.rel (%p399) target = $region73
        $region72: #{wan_self_attention.2} parent=27 // pred_region
          %s402 = smul.u32 16, %s25
          %p403 = scmp.lt.s32.totalorder %s402, 31
          %s404 = scalar_select %p403, %s402, 31
          %s405 = smul.addr %s404, 6
          %s406 = smul.addr %s405, 4
          %s407 = scalar_lea.vmem %s1, %s406
          %s408 = smul.u32 16, %s25
        $region73: #{wan_self_attention.2} parent=27 // pred_fallthru
          _
        // Predicated region
        $region74: #{wan_self_attention.2} parent=27 // pred_check
          %p409 = pneg %p174
        $region75: #{wan_self_attention.2} parent=27 // pred_check_branch
          %411 = sbr.rel (%p409) target = $region77
        $region76: #{wan_self_attention.2} parent=27 // pred_region
          %s412 = smul.u32 8, %s24
          %p413 = scmp.lt.s32.totalorder %s412, 15
          %s414 = scalar_select %p413, %s412, 15
          %s415 = smul.addr %s414, 2
          %s416 = smul.addr %s415, 8
          %s417 = scalar_lea.vmem %s5, %s416
          %s418 = smul.u32 8, %s24
        $region77: #{wan_self_attention.2} parent=27 // pred_fallthru
          _
        // Predicated region
        $region78: #{wan_self_attention.2} parent=27 // pred_check
          %p419 = pneg %p200
        $region79: #{wan_self_attention.2} parent=27 // pred_check_branch
          %421 = sbr.rel (%p419) target = $region81
        $region80: #{wan_self_attention.2} parent=27 // pred_region
          %s422 = smul.u32 8, %s24
          %p423 = scmp.lt.s32.totalorder %s422, 15
          %s424 = scalar_select %p423, %s422, 15
          %s425 = smul.addr %s424, 2
          %s426 = smul.addr %s425, 8
          %s427 = scalar_lea.vmem %s6, %s426
          %s428 = smul.u32 8, %s24
        $region81: #{wan_self_attention.2} parent=27 // pred_fallthru
          _
      $region28: #{wan_self_attention.2} parent=5 // pred_fallthru
        _
      %p429 = scmp.le.s32.totalorder 1, %s16
      %p430 = scmp.lt.s32.totalorder %s16, 9
      %p431 = pnand %p429, %p430
      %p432 = pneg %p431
      // Predicated region
      $region82: #{wan_self_attention.2} parent=5 // pred_check
        _
      $region83: #{wan_self_attention.2} parent=5 // pred_check_branch
        %434 = sbr.rel (%p431) target = $region85
      $region84: #{wan_self_attention.2} parent=5 // pred_region
        %s435 = ssub.s32 %s16, 1
        %s436 = sand.u32 %s52, 1
        %s437 = sand.u32 %s52, 1
        %s438 = smul.addr %s437, 32
        %s439 = scalar_lea.vmem [#allocation3], %s438
        // Predicated region
        $region86: #{wan_self_attention.2} parent=84 // pred_check
          %p440 = pneg %p65
        $region87: #{wan_self_attention.2} parent=84 // pred_check_branch
          %442 = sbr.rel (%p440) target = $region89
        $region88: #{wan_self_attention.2} parent=84 // pred_region
          _
        $region89: #{wan_self_attention.2} parent=84 // pred_fallthru
          _
        %s443 = sand.u32 %s52, 1
        %s444 = sand.u32 %s52, 1
        %s445 = smul.addr %s444, 32
        %s446 = scalar_lea.vmem [#allocation3], %s445
        %p447 = pneg %p65
        %p448 = pneg %p62
        %s449 = smul.u32 16, %s28
        %p450 = scmp.lt.s32.totalorder %s449, 31
        %s451 = scalar_select %p450, %s449, 31
        %s452 = smul.addr %s451, 6
        %s453 = smul.addr %s452, 4
        %s454 = scalar_lea.vmem %s1, %s453
        %p455 = pneg %p91
        %p456 = pneg %p88
        %p457 = pneg %p112
        %p458 = pneg %p109
        %p459 = pneg %p133
        %p460 = pneg %p130
        %p461 = pneg %p154
        %p462 = pneg %p151
        %s463 = smul.u32 8, %s27
        %p464 = scmp.lt.s32.totalorder %s463, 15
        %s465 = scalar_select %p464, %s463, 15
        %s466 = smul.addr %s465, 2
        %s467 = smul.addr %s466, 8
        %s468 = scalar_lea.vmem %s5, %s467
        %p469 = pneg %p180
        %p470 = pneg %p177
        %s471 = smul.u32 8, %s27
        %p472 = scmp.lt.s32.totalorder %s471, 15
        %s473 = scalar_select %p472, %s471, 15
        %s474 = smul.addr %s473, 2
        %s475 = smul.addr %s474, 8
        %s476 = scalar_lea.vmem %s6, %s475
        %p477 = pneg %p206
        %p478 = pneg %p203
        %p479 = pneg %p234
        %p480 = pneg %p231
        %s481 = smul.u32 8, %s27
        %p482 = scmp.lt.s32.totalorder %s26, 1
        %s483 = scalar_select %p482, %s26, 1
        %p484 = scmp.lt.s32.totalorder %s481, 15
        %s485 = scalar_select %p484, %s481, 15
        %s486 = smul.addr %s485, 2
        %s487 = smul.addr %s483, 32
        %s488 = sadd.s32 %s486, %s487
        %s489 = smul.addr %s488, 4
        %s490 = scalar_lea.vmem %s7, %s489
        %p491 = pneg %p262
        %p492 = pneg %p259
        %s493 = smul.u32 8, %s27
        %p494 = scmp.lt.s32.totalorder %s26, 1
        %s495 = scalar_select %p494, %s26, 1
        %p496 = scmp.lt.s32.totalorder %s493, 15
        %s497 = scalar_select %p496, %s493, 15
        %s498 = smul.addr %s497, 2
        %s499 = smul.addr %s495, 32
        %s500 = sadd.s32 %s498, %s499
        %s501 = smul.addr %s500, 4
        %s502 = scalar_lea.vmem %s8, %s501
        %p503 = pneg %p290
        %p504 = pneg %p287
        %s505 = smul.u32 8, %s27
        %p506 = scmp.lt.s32.totalorder %s26, 1
        %s507 = scalar_select %p506, %s26, 1
        %p508 = scmp.lt.s32.totalorder %s505, 15
        %s509 = scalar_select %p508, %s505, 15
        %s510 = smul.addr %s509, 2
        %s511 = smul.addr %s507, 32
        %s512 = sadd.s32 %s510, %s511
        %s513 = smul.addr %s512, 4
        %s514 = scalar_lea.vmem %s9, %s513
        %s515 = smul.u32 8, %s27
        %s516 = smul.u32 16, %s28
        %p517 = scmp.lt.s32.totalorder %s516, 31
        %s518 = scalar_select %p517, %s516, 31
        %s519 = smul.addr %s518, 6
        %s520 = smul.addr %s519, 4
        %s521 = scalar_lea.vmem %s1, %s520
        %s522 = smul.u32 16, %s28
        %s523 = smul.u32 8, %s27
        %p524 = scmp.lt.s32.totalorder %s523, 15
        %s525 = scalar_select %p524, %s523, 15
        %s526 = smul.addr %s525, 2
        %s527 = smul.addr %s526, 8
        %s528 = scalar_lea.vmem %s5, %s527
        %s529 = smul.u32 8, %s27
        %s530 = smul.u32 8, %s27
        %p531 = scmp.lt.s32.totalorder %s530, 15
        %s532 = scalar_select %p531, %s530, 15
        %s533 = smul.addr %s532, 2
        %s534 = smul.addr %s533, 8
        %s535 = scalar_lea.vmem %s6, %s534
        %s536 = smul.u32 8, %s27
        %s537 = smul.u32 8, %s27
        %p538 = scmp.lt.s32.totalorder %s26, 1
        %s539 = scalar_select %p538, %s26, 1
        %p540 = scmp.lt.s32.totalorder %s537, 15
        %s541 = scalar_select %p540, %s537, 15
        %s542 = smul.addr %s541, 2
        %s543 = smul.addr %s539, 32
        %s544 = sadd.s32 %s542, %s543
        %s545 = smul.addr %s544, 4
        %s546 = scalar_lea.vmem %s7, %s545
        %s547 = smul.u32 8, %s27
        %s548 = smul.u32 8, %s27
        %p549 = scmp.lt.s32.totalorder %s26, 1
        %s550 = scalar_select %p549, %s26, 1
        %p551 = scmp.lt.s32.totalorder %s548, 15
        %s552 = scalar_select %p551, %s548, 15
        %s553 = smul.addr %s552, 2
        %s554 = smul.addr %s550, 32
        %s555 = sadd.s32 %s553, %s554
        %s556 = smul.addr %s555, 4
        %s557 = scalar_lea.vmem %s8, %s556
        %s558 = smul.u32 8, %s27
        %s559 = smul.u32 8, %s27
        %p560 = scmp.lt.s32.totalorder %s26, 1
        %s561 = scalar_select %p560, %s26, 1
        %p562 = scmp.lt.s32.totalorder %s559, 15
        %s563 = scalar_select %p562, %s559, 15
        %s564 = smul.addr %s563, 2
        %s565 = smul.addr %s561, 32
        %s566 = sadd.s32 %s564, %s565
        %s567 = smul.addr %s566, 4
        %s568 = scalar_lea.vmem %s9, %s567
        %s569 = smul.u32 8, %s27
        %p571 = scmp.eq.s32.totalorder %s28, 0
        // Predicated region
        $region90: #{wan_self_attention.2} parent=84 // pred_check
          %p572 = pneg %p571
        $region91: #{wan_self_attention.2} parent=84 // pred_check_branch
          %574 = sbr.rel (%p572) target = $region93
        $region92: #{wan_self_attention.2} parent=84 // pred_region
          %575 = vst [vmem:[#allocation2] sm:$0xff] 0.0
          %576 = vst [vmem:[#allocation2 + $0x8] sm:$0xff] 0.0
          %577 = vst [vmem:[#allocation2 + $0x10] sm:$0xff] 0.0
          %578 = vst [vmem:[#allocation2 + $0x18] sm:$0xff] 0.0
          %579 = vst [vmem:[#allocation2 + $0x20] sm:$0xff] 0.0
          %580 = vst [vmem:[#allocation2 + $0x28] sm:$0xff] 0.0
          %581 = vst [vmem:[#allocation2 + $0x30] sm:$0xff] 0.0
          %582 = vst [vmem:[#allocation2 + $0x38] sm:$0xff] 0.0
          %583 = vst [vmem:[#allocation2 + $0x40] sm:$0xff] 0.0
          %584 = vst [vmem:[#allocation2 + $0x48] sm:$0xff] 0.0
          %585 = vst [vmem:[#allocation2 + $0x50] sm:$0xff] 0.0
          %586 = vst [vmem:[#allocation2 + $0x58] sm:$0xff] 0.0
          %587 = vst [vmem:[#allocation2 + $0x60] sm:$0xff] 0.0
          %588 = vst [vmem:[#allocation2 + $0x68] sm:$0xff] 0.0
          %589 = vst [vmem:[#allocation2 + $0x70] sm:$0xff] 0.0
          %590 = vst [vmem:[#allocation2 + $0x78] sm:$0xff] 0.0
          %591 = vst [vmem:[#allocation2 + $0x80] sm:$0xff] 0.0
          %592 = vst [vmem:[#allocation2 + $0x88] sm:$0xff] 0.0
          %593 = vst [vmem:[#allocation2 + $0x90] sm:$0xff] 0.0
          %594 = vst [vmem:[#allocation2 + $0x98] sm:$0xff] 0.0
          %595 = vst [vmem:[#allocation2 + $0xa0] sm:$0xff] 0.0
          %596 = vst [vmem:[#allocation2 + $0xa8] sm:$0xff] 0.0
          %597 = vst [vmem:[#allocation2 + $0xb0] sm:$0xff] 0.0
          %598 = vst [vmem:[#allocation2 + $0xb8] sm:$0xff] 0.0
          %599 = vst [vmem:[#allocation2 + $0xc0] sm:$0xff] 0.0
          %600 = vst [vmem:[#allocation2 + $0xc8] sm:$0xff] 0.0
          %601 = vst [vmem:[#allocation2 + $0xd0] sm:$0xff] 0.0
          %602 = vst [vmem:[#allocation2 + $0xd8] sm:$0xff] 0.0
          %603 = vst [vmem:[#allocation2 + $0xe0] sm:$0xff] 0.0
          %604 = vst [vmem:[#allocation2 + $0xe8] sm:$0xff] 0.0
          %605 = vst [vmem:[#allocation2 + $0xf0] sm:$0xff] 0.0
          %606 = vst [vmem:[#allocation2 + $0xf8] sm:$0xff] 0.0
          %607 = vst [vmem:[#allocation2 + $0x100] sm:$0xff] 0.0
          %608 = vst [vmem:[#allocation2 + $0x108] sm:$0xff] 0.0
          %609 = vst [vmem:[#allocation2 + $0x110] sm:$0xff] 0.0
          %610 = vst [vmem:[#allocation2 + $0x118] sm:$0xff] 0.0
          %611 = vst [vmem:[#allocation2 + $0x120] sm:$0xff] 0.0
          %612 = vst [vmem:[#allocation2 + $0x128] sm:$0xff] 0.0
          %613 = vst [vmem:[#allocation2 + $0x130] sm:$0xff] 0.0
          %614 = vst [vmem:[#allocation2 + $0x138] sm:$0xff] 0.0
          %615 = vst [vmem:[#allocation2 + $0x140] sm:$0xff] 0.0
          %616 = vst [vmem:[#allocation2 + $0x148] sm:$0xff] 0.0
          %617 = vst [vmem:[#allocation2 + $0x150] sm:$0xff] 0.0
          %618 = vst [vmem:[#allocation2 + $0x158] sm:$0xff] 0.0
          %619 = vst [vmem:[#allocation2 + $0x160] sm:$0xff] 0.0
          %620 = vst [vmem:[#allocation2 + $0x168] sm:$0xff] 0.0
          %621 = vst [vmem:[#allocation2 + $0x170] sm:$0xff] 0.0
          %622 = vst [vmem:[#allocation2 + $0x178] sm:$0xff] 0.0
        $region93: #{wan_self_attention.2} parent=84 // pred_fallthru
          _
        %v623 = vld [vmem:[#allocation2] sm:$0xff]
        %v624 = vld [vmem:[#allocation2 + $0x8] sm:$0xff]
        %v625 = vld [vmem:[#allocation2 + $0x10] sm:$0xff]
        %v626 = vld [vmem:[#allocation2 + $0x18] sm:$0xff]
        %v627 = vld [vmem:[#allocation2 + $0x20] sm:$0xff]
        %v628 = vld [vmem:[#allocation2 + $0x28] sm:$0xff]
        %v629 = vld [vmem:[#allocation2 + $0x30] sm:$0xff]
        %v630 = vld [vmem:[#allocation2 + $0x38] sm:$0xff]
        %v631 = vld [vmem:[#allocation2 + $0x40] sm:$0xff]
        %v632 = vld [vmem:[#allocation2 + $0x48] sm:$0xff]
        %v633 = vld [vmem:[#allocation2 + $0x50] sm:$0xff]
        %v634 = vld [vmem:[#allocation2 + $0x58] sm:$0xff]
        %v635 = vld [vmem:[#allocation2 + $0x60] sm:$0xff]
        %v636 = vld [vmem:[#allocation2 + $0x68] sm:$0xff]
        %v637 = vld [vmem:[#allocation2 + $0x70] sm:$0xff]
        %v638 = vld [vmem:[#allocation2 + $0x78] sm:$0xff]
        %v639 = vld [vmem:[#allocation2 + $0x80] sm:$0xff]
        %v640 = vld [vmem:[#allocation2 + $0x88] sm:$0xff]
        %v641 = vld [vmem:[#allocation2 + $0x90] sm:$0xff]
        %v642 = vld [vmem:[#allocation2 + $0x98] sm:$0xff]
        %v643 = vld [vmem:[#allocation2 + $0xa0] sm:$0xff]
        %v644 = vld [vmem:[#allocation2 + $0xa8] sm:$0xff]
        %v645 = vld [vmem:[#allocation2 + $0xb0] sm:$0xff]
        %v646 = vld [vmem:[#allocation2 + $0xb8] sm:$0xff]
        %v647 = vld [vmem:[#allocation2 + $0xc0] sm:$0xff]
        %v648 = vld [vmem:[#allocation2 + $0xc8] sm:$0xff]
        %v649 = vld [vmem:[#allocation2 + $0xd0] sm:$0xff]
        %v650 = vld [vmem:[#allocation2 + $0xd8] sm:$0xff]
        %v651 = vld [vmem:[#allocation2 + $0xe0] sm:$0xff]
        %v652 = vld [vmem:[#allocation2 + $0xe8] sm:$0xff]
        %v653 = vld [vmem:[#allocation2 + $0xf0] sm:$0xff]
        %v654 = vld [vmem:[#allocation2 + $0xf8] sm:$0xff]
        %v655 = vld [vmem:[#allocation2 + $0x100] sm:$0xff]
        %v656 = vld [vmem:[#allocation2 + $0x108] sm:$0xff]
        %v657 = vld [vmem:[#allocation2 + $0x110] sm:$0xff]
        %v658 = vld [vmem:[#allocation2 + $0x118] sm:$0xff]
        %v659 = vld [vmem:[#allocation2 + $0x120] sm:$0xff]
        %v660 = vld [vmem:[#allocation2 + $0x128] sm:$0xff]
        %v661 = vld [vmem:[#allocation2 + $0x130] sm:$0xff]
        %v662 = vld [vmem:[#allocation2 + $0x138] sm:$0xff]
        %v663 = vld [vmem:[#allocation2 + $0x140] sm:$0xff]
        %v664 = vld [vmem:[#allocation2 + $0x148] sm:$0xff]
        %v665 = vld [vmem:[#allocation2 + $0x150] sm:$0xff]
        %v666 = vld [vmem:[#allocation2 + $0x158] sm:$0xff]
        %v667 = vld [vmem:[#allocation2 + $0x160] sm:$0xff]
        %v668 = vld [vmem:[#allocation2 + $0x168] sm:$0xff]
        %v669 = vld [vmem:[#allocation2 + $0x170] sm:$0xff]
        %v670 = vld [vmem:[#allocation2 + $0x178] sm:$0xff]
        %v671 = vld [vmem:[%s439] sm:$0xf]
        %v672 = vld [vmem:[%s439 + $0x4] sm:$0xf]
        %v673 = vld [vmem:[%s439 + $0x8] sm:$0xf]
        %v674 = vld [vmem:[%s439 + $0xc] sm:$0xf]
        %v675 = vld [vmem:[%s439 + $0x10] sm:$0xf]
        %v676 = vld [vmem:[%s439 + $0x14] sm:$0xf]
        %v677 = vld [vmem:[%s439 + $0x18] sm:$0xf]
        %v678 = vld [vmem:[%s439 + $0x1c] sm:$0xf]
        %v679 = vld [vmem:[%s521] sm:$0xff]
        %v680 = vld [vmem:[%s521 + $0x8] sm:$0xff]
        %v681 = vld [vmem:[%s521 + $0x10] sm:$0xff]
        %v682 = vld [vmem:[%s521 + $0x18] sm:$0xff]
        %v683 = vld [vmem:[%s521 + $0x20] sm:$0xff]
        %v684 = vld [vmem:[%s521 + $0x28] sm:$0xff]
        %v685 = vld [vmem:[%s521 + $0x30] sm:$0xff]
        %v686 = vld [vmem:[%s521 + $0x38] sm:$0xff]
        %v687 = vld [vmem:[%s521 + $0x40] sm:$0xff]
        %v688 = vld [vmem:[%s521 + $0x48] sm:$0xff]
        %v689 = vld [vmem:[%s521 + $0x50] sm:$0xff]
        %v690 = vld [vmem:[%s521 + $0x58] sm:$0xff]
        %v691 = vld [vmem:[%s521 + $0x60] sm:$0xff]
        %v692 = vld [vmem:[%s521 + $0x68] sm:$0xff]
        %v693 = vld [vmem:[%s521 + $0x70] sm:$0xff]
        %v694 = vld [vmem:[%s521 + $0x78] sm:$0xff]
        %v695 = vld [vmem:[%s521 + $0x80] sm:$0xff]
        %v696 = vld [vmem:[%s521 + $0x88] sm:$0xff]
        %v697 = vld [vmem:[%s521 + $0x90] sm:$0xff]
        %v698 = vld [vmem:[%s521 + $0x98] sm:$0xff]
        %v699 = vld [vmem:[%s521 + $0xa0] sm:$0xff]
        %v700 = vld [vmem:[%s521 + $0xa8] sm:$0xff]
        %v701 = vld [vmem:[%s521 + $0xb0] sm:$0xff]
        %v702 = vld [vmem:[%s521 + $0xb8] sm:$0xff]
        %v703 = vld [vmem:[%s521 + $0xc0] sm:$0xff]
        %v704 = vld [vmem:[%s521 + $0xc8] sm:$0xff]
        %v705 = vld [vmem:[%s521 + $0xd0] sm:$0xff]
        %v706 = vld [vmem:[%s521 + $0xd8] sm:$0xff]
        %v707 = vld [vmem:[%s521 + $0xe0] sm:$0xff]
        %v708 = vld [vmem:[%s521 + $0xe8] sm:$0xff]
        %v709 = vld [vmem:[%s521 + $0xf0] sm:$0xff]
        %v710 = vld [vmem:[%s521 + $0xf8] sm:$0xff]
        %v711 = vld [vmem:[%s521 + $0x100] sm:$0xff]
        %v712 = vld [vmem:[%s521 + $0x108] sm:$0xff]
        %v713 = vld [vmem:[%s521 + $0x110] sm:$0xff]
        %v714 = vld [vmem:[%s521 + $0x118] sm:$0xff]
        %v715 = vld [vmem:[%s521 + $0x120] sm:$0xff]
        %v716 = vld [vmem:[%s521 + $0x128] sm:$0xff]
        %v717 = vld [vmem:[%s521 + $0x130] sm:$0xff]
        %v718 = vld [vmem:[%s521 + $0x138] sm:$0xff]
        %v719 = vld [vmem:[%s521 + $0x140] sm:$0xff]
        %v720 = vld [vmem:[%s521 + $0x148] sm:$0xff]
        %v721 = vld [vmem:[%s521 + $0x150] sm:$0xff]
        %v722 = vld [vmem:[%s521 + $0x158] sm:$0xff]
        %v723 = vld [vmem:[%s521 + $0x160] sm:$0xff]
        %v724 = vld [vmem:[%s521 + $0x168] sm:$0xff]
        %v725 = vld [vmem:[%s521 + $0x170] sm:$0xff]
        %v726 = vld [vmem:[%s521 + $0x178] sm:$0xff]
        %v735 = vunpack.c.l.b16 %v671
        %v736 = vunpack.c.l.b16 %v672
        %v737 = vunpack.c.l.b16 %v673
        %v738 = vunpack.c.l.b16 %v674
        %v739 = vunpack.c.l.b16 %v675
        %v740 = vunpack.c.l.b16 %v676
        %v741 = vunpack.c.l.b16 %v677
        %v742 = vunpack.c.l.b16 %v678
        %v743 = vpack.c.b16 %v736, %v735
        %v744 = vpack.c.b16 %v738, %v737
        %v745 = vpack.c.b16 %v740, %v739
        %v746 = vpack.c.b16 %v742, %v741
        %v799 = vunpack.c.l.b16 %v679
        %v800 = vunpack.c.h.b16 %v679
        %v801 = vunpack.c.l.b16 %v680
        %v802 = vunpack.c.h.b16 %v680
        %v803 = vunpack.c.l.b16 %v681
        %v804 = vunpack.c.h.b16 %v681
        %v805 = vunpack.c.l.b16 %v682
        %v806 = vunpack.c.h.b16 %v682
        %v807 = vunpack.c.l.b16 %v683
        %v808 = vunpack.c.h.b16 %v683
        %v809 = vunpack.c.l.b16 %v684
        %v810 = vunpack.c.h.b16 %v684
        %v811 = vunpack.c.l.b16 %v685
        %v812 = vunpack.c.h.b16 %v685
        %v813 = vunpack.c.l.b16 %v686
        %v814 = vunpack.c.h.b16 %v686
        %v815 = vunpack.c.l.b16 %v687
        %v816 = vunpack.c.h.b16 %v687
        %v817 = vunpack.c.l.b16 %v688
        %v818 = vunpack.c.h.b16 %v688
        %v819 = vunpack.c.l.b16 %v689
        %v820 = vunpack.c.h.b16 %v689
        %v821 = vunpack.c.l.b16 %v690
        %v822 = vunpack.c.h.b16 %v690
        %v823 = vunpack.c.l.b16 %v691
        %v824 = vunpack.c.h.b16 %v691
        %v825 = vunpack.c.l.b16 %v692
        %v826 = vunpack.c.h.b16 %v692
        %v827 = vunpack.c.l.b16 %v693
        %v828 = vunpack.c.h.b16 %v693
        %v829 = vunpack.c.l.b16 %v694
        %v830 = vunpack.c.h.b16 %v694
        %v831 = vunpack.c.l.b16 %v695
        %v832 = vunpack.c.h.b16 %v695
        %v833 = vunpack.c.l.b16 %v696
        %v834 = vunpack.c.h.b16 %v696
        %v835 = vunpack.c.l.b16 %v697
        %v836 = vunpack.c.h.b16 %v697
        %v837 = vunpack.c.l.b16 %v698
        %v838 = vunpack.c.h.b16 %v698
        %v839 = vunpack.c.l.b16 %v699
        %v840 = vunpack.c.h.b16 %v699
        %v841 = vunpack.c.l.b16 %v700
        %v842 = vunpack.c.h.b16 %v700
        %v843 = vunpack.c.l.b16 %v701
        %v844 = vunpack.c.h.b16 %v701
        %v845 = vunpack.c.l.b16 %v702
        %v846 = vunpack.c.h.b16 %v702
        %v847 = vunpack.c.l.b16 %v703
        %v848 = vunpack.c.h.b16 %v703
        %v849 = vunpack.c.l.b16 %v704
        %v850 = vunpack.c.h.b16 %v704
        %v851 = vunpack.c.l.b16 %v705
        %v852 = vunpack.c.h.b16 %v705
        %v853 = vunpack.c.l.b16 %v706
        %v854 = vunpack.c.h.b16 %v706
        %v855 = vunpack.c.l.b16 %v707
        %v856 = vunpack.c.h.b16 %v707
        %v857 = vunpack.c.l.b16 %v708
        %v858 = vunpack.c.h.b16 %v708
        %v859 = vunpack.c.l.b16 %v709
        %v860 = vunpack.c.h.b16 %v709
        %v861 = vunpack.c.l.b16 %v710
        %v862 = vunpack.c.h.b16 %v710
        %v863 = vunpack.c.l.b16 %v711
        %v864 = vunpack.c.h.b16 %v711
        %v865 = vunpack.c.l.b16 %v712
        %v866 = vunpack.c.h.b16 %v712
        %v867 = vunpack.c.l.b16 %v713
        %v868 = vunpack.c.h.b16 %v713
        %v869 = vunpack.c.l.b16 %v714
        %v870 = vunpack.c.h.b16 %v714
        %v871 = vunpack.c.l.b16 %v715
        %v872 = vunpack.c.h.b16 %v715
        %v873 = vunpack.c.l.b16 %v716
        %v874 = vunpack.c.h.b16 %v716
        %v875 = vunpack.c.l.b16 %v717
        %v876 = vunpack.c.h.b16 %v717
        %v877 = vunpack.c.l.b16 %v718
        %v878 = vunpack.c.h.b16 %v718
        %v879 = vunpack.c.l.b16 %v719
        %v880 = vunpack.c.h.b16 %v719
        %v881 = vunpack.c.l.b16 %v720
        %v882 = vunpack.c.h.b16 %v720
        %v883 = vunpack.c.l.b16 %v721
        %v884 = vunpack.c.h.b16 %v721
        %v885 = vunpack.c.l.b16 %v722
        %v886 = vunpack.c.h.b16 %v722
        %v887 = vunpack.c.l.b16 %v723
        %v888 = vunpack.c.h.b16 %v723
        %v889 = vunpack.c.l.b16 %v724
        %v890 = vunpack.c.h.b16 %v724
        %v891 = vunpack.c.l.b16 %v725
        %v892 = vunpack.c.h.b16 %v725
        %v893 = vunpack.c.l.b16 %v726
        %v894 = vunpack.c.h.b16 %v726
        %v895 = vpack.c.b16 %v805, %v799
        %v896 = vpack.c.b16 %v806, %v800
        %v897 = vpack.c.b16 %v807, %v801
        %v898 = vpack.c.b16 %v808, %v802
        %v899 = vpack.c.b16 %v809, %v803
        %v900 = vpack.c.b16 %v810, %v804
        %v901 = vpack.c.b16 %v817, %v811
        %v902 = vpack.c.b16 %v818, %v812
        %v903 = vpack.c.b16 %v819, %v813
        %v904 = vpack.c.b16 %v820, %v814
        %v905 = vpack.c.b16 %v821, %v815
        %v906 = vpack.c.b16 %v822, %v816
        %v907 = vpack.c.b16 %v829, %v823
        %v908 = vpack.c.b16 %v830, %v824
        %v909 = vpack.c.b16 %v831, %v825
        %v910 = vpack.c.b16 %v832, %v826
        %v911 = vpack.c.b16 %v833, %v827
        %v912 = vpack.c.b16 %v834, %v828
        %v913 = vpack.c.b16 %v841, %v835
        %v914 = vpack.c.b16 %v842, %v836
        %v915 = vpack.c.b16 %v843, %v837
        %v916 = vpack.c.b16 %v844, %v838
        %v917 = vpack.c.b16 %v845, %v839
        %v918 = vpack.c.b16 %v846, %v840
        %v919 = vpack.c.b16 %v853, %v847
        %v920 = vpack.c.b16 %v854, %v848
        %v921 = vpack.c.b16 %v855, %v849
        %v922 = vpack.c.b16 %v856, %v850
        %v923 = vpack.c.b16 %v857, %v851
        %v924 = vpack.c.b16 %v858, %v852
        %v925 = vpack.c.b16 %v865, %v859
        %v926 = vpack.c.b16 %v866, %v860
        %v927 = vpack.c.b16 %v867, %v861
        %v928 = vpack.c.b16 %v868, %v862
        %v929 = vpack.c.b16 %v869, %v863
        %v930 = vpack.c.b16 %v870, %v864
        %v931 = vpack.c.b16 %v877, %v871
        %v932 = vpack.c.b16 %v878, %v872
        %v933 = vpack.c.b16 %v879, %v873
        %v934 = vpack.c.b16 %v880, %v874
        %v935 = vpack.c.b16 %v881, %v875
        %v936 = vpack.c.b16 %v882, %v876
        %v937 = vpack.c.b16 %v889, %v883
        %v938 = vpack.c.b16 %v890, %v884
        %v939 = vpack.c.b16 %v891, %v885
        %v940 = vpack.c.b16 %v892, %v886
        %v941 = vpack.c.b16 %v893, %v887
        %v942 = vpack.c.b16 %v894, %v888
        %991 = vmatprep.subr.bf16.mxu0 %v896
        %992 = vmatpush1.bf16.msra.mxu0 %v895
        %993 = vmatprep.subr.bf16.mxu0 %v902
        %994 = vmatpush1.bf16.msra.mxu0 %v901
        %995 = vmatprep.subr.bf16.mxu0 %v908
        %996 = vmatpush1.bf16.msra.mxu0 %v907
        %997 = vmatprep.subr.bf16.mxu0 %v914
        %998 = vmatpush1.bf16.msra.mxu0 %v913
        %999 = vmatprep.subr.bf16.mxu0 %v920
        %1000 = vmatpush1.bf16.msra.mxu0 %v919
        %1001 = vmatprep.subr.bf16.mxu0 %v926
        %1002 = vmatpush1.bf16.msra.mxu0 %v925
        %1003 = vmatprep.subr.bf16.mxu0 %v932
        %1004 = vmatpush1.bf16.msra.mxu0 %v931
        %1005 = vmatprep.subr.bf16.mxu0 %v938
        %1006 = vmatpush1.bf16.msra.mxu0 %v937
        %1007 = vmatprep.subr.bf16.mxu0 0
        %1008 = vmatpush1.bf16.msra.mxu0 0
        %1009 = vmatprep.subr.bf16.mxu0 0
        %1010 = vmatpush1.bf16.msra.mxu0 0
        %1011 = vmatprep.subr.bf16.mxu0 0
        %1012 = vmatpush1.bf16.msra.mxu0 0
        %1013 = vmatprep.subr.bf16.mxu0 0
        %1014 = vmatpush1.bf16.msra.mxu0 0
        %1015 = vmatprep.subr.bf16.mxu0 0
        %1016 = vmatpush1.bf16.msra.mxu0 0
        %1017 = vmatprep.subr.bf16.mxu0 0
        %1018 = vmatpush1.bf16.msra.mxu0 0
        %1019 = vmatprep.subr.bf16.mxu0 0
        %1020 = vmatpush1.bf16.msra.mxu0 0
        %1021 = vmatprep.subr.bf16.mxu0 0
        %1022 = vmatpush1.bf16.msra.mxu0 0
        %1023 = vmatprep.mubr.bf16.mxu0 0
        %1024 = vmatmul.mubr.bf16.gmra.mrb[0].mxu0 %v743
        %v1025 = vpop.f32.mrb[0].mxu0
        %v1026 = vadd.f32 0.0, %v1025
        %v1027 = vpop.f32.mrb[0].mxu0
        %v1028 = vadd.f32 0.0, %v1027
        %v1029 = vpop.f32.mrb[0].mxu0
        %v1030 = vadd.f32 0.0, %v1029
        %v1031 = vpop.f32.mrb[0].mxu0
        %v1032 = vadd.f32 0.0, %v1031
        %1033 = vmatprep.mubr.bf16.mxu0 0
        %1034 = vmatmul.mubr.bf16.gmra.mrb[0].mxu0 %v744
        %v1035 = vpop.f32.mrb[0].mxu0
        %v1036 = vadd.f32 0.0, %v1035
        %v1037 = vpop.f32.mrb[0].mxu0
        %v1038 = vadd.f32 0.0, %v1037
        %v1039 = vpop.f32.mrb[0].mxu0
        %v1040 = vadd.f32 0.0, %v1039
        %v1041 = vpop.f32.mrb[0].mxu0
        %v1042 = vadd.f32 0.0, %v1041
        %1043 = vmatprep.mubr.bf16.mxu0 0
        %1044 = vmatmul.mubr.bf16.gmra.mrb[0].mxu0 %v745
        %v1045 = vpop.f32.mrb[0].mxu0
        %v1046 = vadd.f32 0.0, %v1045
        %v1047 = vpop.f32.mrb[0].mxu0
        %v1048 = vadd.f32 0.0, %v1047
        %v1049 = vpop.f32.mrb[0].mxu0
        %v1050 = vadd.f32 0.0, %v1049
        %v1051 = vpop.f32.mrb[0].mxu0
        %v1052 = vadd.f32 0.0, %v1051
        %1053 = vmatprep.mubr.bf16.mxu0 0
        %1054 = vmatmul.mubr.bf16.gmra.mrb[0].mxu0 %v746
        %v1055 = vpop.f32.mrb[0].mxu0
        %v1056 = vadd.f32 0.0, %v1055
        %v1057 = vpop.f32.mrb[0].mxu0
        %v1058 = vadd.f32 0.0, %v1057
        %v1059 = vpop.f32.mrb[0].mxu0
        %v1060 = vadd.f32 0.0, %v1059
        %v1061 = vpop.f32.mrb[0].mxu0
        %v1062 = vadd.f32 0.0, %v1061
        %1063 = vdwg.mxu0
        %1064 = vmatprep.subr.bf16.mxu0 %v898
        %1065 = vmatpush1.bf16.msra.mxu0 %v897
        %1066 = vmatprep.subr.bf16.mxu0 %v904
        %1067 = vmatpush1.bf16.msra.mxu0 %v903
        %1068 = vmatprep.subr.bf16.mxu0 %v910
        %1069 = vmatpush1.bf16.msra.mxu0 %v909
        %1070 = vmatprep.subr.bf16.mxu0 %v916
        %1071 = vmatpush1.bf16.msra.mxu0 %v915
        %1072 = vmatprep.subr.bf16.mxu0 %v922
        %1073 = vmatpush1.bf16.msra.mxu0 %v921
        %1074 = vmatprep.subr.bf16.mxu0 %v928
        %1075 = vmatpush1.bf16.msra.mxu0 %v927
        %1076 = vmatprep.subr.bf16.mxu0 %v934
        %1077 = vmatpush1.bf16.msra.mxu0 %v933
        %1078 = vmatprep.subr.bf16.mxu0 %v940
        %1079 = vmatpush1.bf16.msra.mxu0 %v939
        %1080 = vmatprep.subr.bf16.mxu0 0
        %1081 = vmatpush1.bf16.msra.mxu0 0
        %1082 = vmatprep.subr.bf16.mxu0 0
        %1083 = vmatpush1.bf16.msra.mxu0 0
        %1084 = vmatprep.subr.bf16.mxu0 0
        %1085 = vmatpush1.bf16.msra.mxu0 0
        %1086 = vmatprep.subr.bf16.mxu0 0
        %1087 = vmatpush1.bf16.msra.mxu0 0
        %1088 = vmatprep.subr.bf16.mxu0 0
        %1089 = vmatpush1.bf16.msra.mxu0 0
        %1090 = vmatprep.subr.bf16.mxu0 0
        %1091 = vmatpush1.bf16.msra.mxu0 0
        %1092 = vmatprep.subr.bf16.mxu0 0
        %1093 = vmatpush1.bf16.msra.mxu0 0
        %1094 = vmatprep.subr.bf16.mxu0 0
        %1095 = vmatpush1.bf16.msra.mxu0 0
        %1096 = vmatprep.mubr.bf16.mxu0 0
        %1097 = vmatmul.mubr.bf16.gmra.mrb[0].mxu0 %v743
        %v1098 = vpop.f32.mrb[0].mxu0
        %v1099 = vadd.f32 0.0, %v1098
        %v1100 = vpop.f32.mrb[0].mxu0
        %v1101 = vadd.f32 0.0, %v1100
        %v1102 = vpop.f32.mrb[0].mxu0
        %v1103 = vadd.f32 0.0, %v1102
        %v1104 = vpop.f32.mrb[0].mxu0
        %v1105 = vadd.f32 0.0, %v1104
        %1106 = vmatprep.mubr.bf16.mxu0 0
        %1107 = vmatmul.mubr.bf16.gmra.mrb[0].mxu0 %v744
        %v1108 = vpop.f32.mrb[0].mxu0
        %v1109 = vadd.f32 0.0, %v1108
        %v1110 = vpop.f32.mrb[0].mxu0
        %v1111 = vadd.f32 0.0, %v1110
        %v1112 = vpop.f32.mrb[0].mxu0
        %v1113 = vadd.f32 0.0, %v1112
        %v1114 = vpop.f32.mrb[0].mxu0
        %v1115 = vadd.f32 0.0, %v1114
        %1116 = vmatprep.mubr.bf16.mxu0 0
        %1117 = vmatmul.mubr.bf16.gmra.mrb[0].mxu0 %v745
        %v1118 = vpop.f32.mrb[0].mxu0
        %v1119 = vadd.f32 0.0, %v1118
        %v1120 = vpop.f32.mrb[0].mxu0
        %v1121 = vadd.f32 0.0, %v1120
        %v1122 = vpop.f32.mrb[0].mxu0
        %v1123 = vadd.f32 0.0, %v1122
        %v1124 = vpop.f32.mrb[0].mxu0
        %v1125 = vadd.f32 0.0, %v1124
        %1126 = vmatprep.mubr.bf16.mxu0 0
        %1127 = vmatmul.mubr.bf16.gmra.mrb[0].mxu0 %v746
        %v1128 = vpop.f32.mrb[0].mxu0
        %v1129 = vadd.f32 0.0, %v1128
        %v1130 = vpop.f32.mrb[0].mxu0
        %v1131 = vadd.f32 0.0, %v1130
        %v1132 = vpop.f32.mrb[0].mxu0
        %v1133 = vadd.f32 0.0, %v1132
        %v1134 = vpop.f32.mrb[0].mxu0
        %v1135 = vadd.f32 0.0, %v1134
        %1136 = vdwg.mxu0
        %1137 = vmatprep.subr.bf16.mxu0 %v900
        %1138 = vmatpush1.bf16.msra.mxu0 %v899
        %1139 = vmatprep.subr.bf16.mxu0 %v906
        %1140 = vmatpush1.bf16.msra.mxu0 %v905
        %1141 = vmatprep.subr.bf16.mxu0 %v912
        %1142 = vmatpush1.bf16.msra.mxu0 %v911
        %1143 = vmatprep.subr.bf16.mxu0 %v918
        %1144 = vmatpush1.bf16.msra.mxu0 %v917
        %1145 = vmatprep.subr.bf16.mxu0 %v924
        %1146 = vmatpush1.bf16.msra.mxu0 %v923
        %1147 = vmatprep.subr.bf16.mxu0 %v930
        %1148 = vmatpush1.bf16.msra.mxu0 %v929
        %1149 = vmatprep.subr.bf16.mxu0 %v936
        %1150 = vmatpush1.bf16.msra.mxu0 %v935
        %1151 = vmatprep.subr.bf16.mxu0 %v942
        %1152 = vmatpush1.bf16.msra.mxu0 %v941
        %1153 = vmatprep.subr.bf16.mxu0 0
        %1154 = vmatpush1.bf16.msra.mxu0 0
        %1155 = vmatprep.subr.bf16.mxu0 0
        %1156 = vmatpush1.bf16.msra.mxu0 0
        %1157 = vmatprep.subr.bf16.mxu0 0
        %1158 = vmatpush1.bf16.msra.mxu0 0
        %1159 = vmatprep.subr.bf16.mxu0 0
        %1160 = vmatpush1.bf16.msra.mxu0 0
        %1161 = vmatprep.subr.bf16.mxu0 0
        %1162 = vmatpush1.bf16.msra.mxu0 0
        %1163 = vmatprep.subr.bf16.mxu0 0
        %1164 = vmatpush1.bf16.msra.mxu0 0
        %1165 = vmatprep.subr.bf16.mxu0 0
        %1166 = vmatpush1.bf16.msra.mxu0 0
        %1167 = vmatprep.subr.bf16.mxu0 0
        %1168 = vmatpush1.bf16.msra.mxu0 0
        %1169 = vmatprep.mubr.bf16.mxu0 0
        %1170 = vmatmul.mubr.bf16.gmra.mrb[0].mxu0 %v743
        %v1171 = vpop.f32.mrb[0].mxu0
        %v1172 = vadd.f32 0.0, %v1171
        %v1173 = vpop.f32.mrb[0].mxu0
        %v1174 = vadd.f32 0.0, %v1173
        %v1175 = vpop.f32.mrb[0].mxu0
        %v1176 = vadd.f32 0.0, %v1175
        %v1177 = vpop.f32.mrb[0].mxu0
        %v1178 = vadd.f32 0.0, %v1177
        %1179 = vmatprep.mubr.bf16.mxu0 0
        %1180 = vmatmul.mubr.bf16.gmra.mrb[0].mxu0 %v744
        %v1181 = vpop.f32.mrb[0].mxu0
        %v1182 = vadd.f32 0.0, %v1181
        %v1183 = vpop.f32.mrb[0].mxu0
        %v1184 = vadd.f32 0.0, %v1183
        %v1185 = vpop.f32.mrb[0].mxu0
        %v1186 = vadd.f32 0.0, %v1185
        %v1187 = vpop.f32.mrb[0].mxu0
        %v1188 = vadd.f32 0.0, %v1187
        %1189 = vmatprep.mubr.bf16.mxu0 0
        %1190 = vmatmul.mubr.bf16.gmra.mrb[0].mxu0 %v745
        %v1191 = vpop.f32.mrb[0].mxu0
        %v1192 = vadd.f32 0.0, %v1191
        %v1193 = vpop.f32.mrb[0].mxu0
        %v1194 = vadd.f32 0.0, %v1193
        %v1195 = vpop.f32.mrb[0].mxu0
        %v1196 = vadd.f32 0.0, %v1195
        %v1197 = vpop.f32.mrb[0].mxu0
        %v1198 = vadd.f32 0.0, %v1197
        %1199 = vmatprep.mubr.bf16.mxu0 0
        %1200 = vmatmul.mubr.bf16.gmra.mrb[0].mxu0 %v746
        %v1201 = vpop.f32.mrb[0].mxu0
        %v1202 = vadd.f32 0.0, %v1201
        %v1203 = vpop.f32.mrb[0].mxu0
        %v1204 = vadd.f32 0.0, %v1203
        %v1205 = vpop.f32.mrb[0].mxu0
        %v1206 = vadd.f32 0.0, %v1205
        %v1207 = vpop.f32.mrb[0].mxu0
        %v1208 = vadd.f32 0.0, %v1207
        %1209 = vdwg.mxu0
        %v1210 = vadd.f32 %v623, %v1026
        %v1211 = vadd.f32 %v624, %v1028
        %v1212 = vadd.f32 %v625, %v1099
        %v1213 = vadd.f32 %v626, %v1101
        %v1214 = vadd.f32 %v627, %v1172
        %v1215 = vadd.f32 %v628, %v1174
        %v1216 = vadd.f32 %v629, %v1030
        %v1217 = vadd.f32 %v630, %v1032
        %v1218 = vadd.f32 %v631, %v1103
        %v1219 = vadd.f32 %v632, %v1105
        %v1220 = vadd.f32 %v633, %v1176
        %v1221 = vadd.f32 %v634, %v1178
        %v1222 = vadd.f32 %v635, %v1036
        %v1223 = vadd.f32 %v636, %v1038
        %v1224 = vadd.f32 %v637, %v1109
        %v1225 = vadd.f32 %v638, %v1111
        %v1226 = vadd.f32 %v639, %v1182
        %v1227 = vadd.f32 %v640, %v1184
        %v1228 = vadd.f32 %v641, %v1040
        %v1229 = vadd.f32 %v642, %v1042
        %v1230 = vadd.f32 %v643, %v1113
        %v1231 = vadd.f32 %v644, %v1115
        %v1232 = vadd.f32 %v645, %v1186
        %v1233 = vadd.f32 %v646, %v1188
        %v1234 = vadd.f32 %v647, %v1046
        %v1235 = vadd.f32 %v648, %v1048
        %v1236 = vadd.f32 %v649, %v1119
        %v1237 = vadd.f32 %v650, %v1121
        %v1238 = vadd.f32 %v651, %v1192
        %v1239 = vadd.f32 %v652, %v1194
        %v1240 = vadd.f32 %v653, %v1050
        %v1241 = vadd.f32 %v654, %v1052
        %v1242 = vadd.f32 %v655, %v1123
        %v1243 = vadd.f32 %v656, %v1125
        %v1244 = vadd.f32 %v657, %v1196
        %v1245 = vadd.f32 %v658, %v1198
        %v1246 = vadd.f32 %v659, %v1056
        %v1247 = vadd.f32 %v660, %v1058
        %v1248 = vadd.f32 %v661, %v1129
        %v1249 = vadd.f32 %v662, %v1131
        %v1250 = vadd.f32 %v663, %v1202
        %v1251 = vadd.f32 %v664, %v1204
        %v1252 = vadd.f32 %v665, %v1060
        %v1253 = vadd.f32 %v666, %v1062
        %v1254 = vadd.f32 %v667, %v1133
        %v1255 = vadd.f32 %v668, %v1135
        %v1256 = vadd.f32 %v669, %v1206
        %v1257 = vadd.f32 %v670, %v1208
        %1258 = vst [vmem:[#allocation2] sm:$0xff] %v1210
        %1259 = vst [vmem:[#allocation2 + $0x8] sm:$0xff] %v1211
        %1260 = vst [vmem:[#allocation2 + $0x10] sm:$0xff] %v1212
        %1261 = vst [vmem:[#allocation2 + $0x18] sm:$0xff] %v1213
        %1262 = vst [vmem:[#allocation2 + $0x20] sm:$0xff] %v1214
        %1263 = vst [vmem:[#allocation2 + $0x28] sm:$0xff] %v1215
        %1264 = vst [vmem:[#allocation2 + $0x30] sm:$0xff] %v1216
        %1265 = vst [vmem:[#allocation2 + $0x38] sm:$0xff] %v1217
        %1266 = vst [vmem:[#allocation2 + $0x40] sm:$0xff] %v1218
        %1267 = vst [vmem:[#allocation2 + $0x48] sm:$0xff] %v1219
        %1268 = vst [vmem:[#allocation2 + $0x50] sm:$0xff] %v1220
        %1269 = vst [vmem:[#allocation2 + $0x58] sm:$0xff] %v1221
        %1270 = vst [vmem:[#allocation2 + $0x60] sm:$0xff] %v1222
        %1271 = vst [vmem:[#allocation2 + $0x68] sm:$0xff] %v1223
        %1272 = vst [vmem:[#allocation2 + $0x70] sm:$0xff] %v1224
        %1273 = vst [vmem:[#allocation2 + $0x78] sm:$0xff] %v1225
        %1274 = vst [vmem:[#allocation2 + $0x80] sm:$0xff] %v1226
        %1275 = vst [vmem:[#allocation2 + $0x88] sm:$0xff] %v1227
        %1276 = vst [vmem:[#allocation2 + $0x90] sm:$0xff] %v1228
        %1277 = vst [vmem:[#allocation2 + $0x98] sm:$0xff] %v1229
        %1278 = vst [vmem:[#allocation2 + $0xa0] sm:$0xff] %v1230
        %1279 = vst [vmem:[#allocation2 + $0xa8] sm:$0xff] %v1231
        %1280 = vst [vmem:[#allocation2 + $0xb0] sm:$0xff] %v1232
        %1281 = vst [vmem:[#allocation2 + $0xb8] sm:$0xff] %v1233
        %1282 = vst [vmem:[#allocation2 + $0xc0] sm:$0xff] %v1234
        %1283 = vst [vmem:[#allocation2 + $0xc8] sm:$0xff] %v1235
        %1284 = vst [vmem:[#allocation2 + $0xd0] sm:$0xff] %v1236
        %1285 = vst [vmem:[#allocation2 + $0xd8] sm:$0xff] %v1237
        %1286 = vst [vmem:[#allocation2 + $0xe0] sm:$0xff] %v1238
        %1287 = vst [vmem:[#allocation2 + $0xe8] sm:$0xff] %v1239
        %1288 = vst [vmem:[#allocation2 + $0xf0] sm:$0xff] %v1240
        %1289 = vst [vmem:[#allocation2 + $0xf8] sm:$0xff] %v1241
        %1290 = vst [vmem:[#allocation2 + $0x100] sm:$0xff] %v1242
        %1291 = vst [vmem:[#allocation2 + $0x108] sm:$0xff] %v1243
        %1292 = vst [vmem:[#allocation2 + $0x110] sm:$0xff] %v1244
        %1293 = vst [vmem:[#allocation2 + $0x118] sm:$0xff] %v1245
        %1294 = vst [vmem:[#allocation2 + $0x120] sm:$0xff] %v1246
        %1295 = vst [vmem:[#allocation2 + $0x128] sm:$0xff] %v1247
        %1296 = vst [vmem:[#allocation2 + $0x130] sm:$0xff] %v1248
        %1297 = vst [vmem:[#allocation2 + $0x138] sm:$0xff] %v1249
        %1298 = vst [vmem:[#allocation2 + $0x140] sm:$0xff] %v1250
        %1299 = vst [vmem:[#allocation2 + $0x148] sm:$0xff] %v1251
        %1300 = vst [vmem:[#allocation2 + $0x150] sm:$0xff] %v1252
        %1301 = vst [vmem:[#allocation2 + $0x158] sm:$0xff] %v1253
        %1302 = vst [vmem:[#allocation2 + $0x160] sm:$0xff] %v1254
        %1303 = vst [vmem:[#allocation2 + $0x168] sm:$0xff] %v1255
        %1304 = vst [vmem:[#allocation2 + $0x170] sm:$0xff] %v1256
        %1305 = vst [vmem:[#allocation2 + $0x178] sm:$0xff] %v1257
        %p1306 = scmp.eq.s32.totalorder %s28, 1
        // Predicated region
        $region94: #{wan_self_attention.2} parent=84 // pred_check
          %p1307 = pneg %p1306
        $region95: #{wan_self_attention.2} parent=84 // pred_check_branch
          %1309 = sbr.rel (%p1307) target = $region97
        $region96: #{wan_self_attention.2} parent=84 // pred_region
          %v1310 = vld [vmem:[#allocation2] sm:$0xff]
          %v1311 = vld [vmem:[#allocation2 + $0x8] sm:$0xff]
          %v1312 = vld [vmem:[#allocation2 + $0x10] sm:$0xff]
          %v1313 = vld [vmem:[#allocation2 + $0x18] sm:$0xff]
          %v1314 = vld [vmem:[#allocation2 + $0x20] sm:$0xff]
          %v1315 = vld [vmem:[#allocation2 + $0x28] sm:$0xff]
          %v1316 = vld [vmem:[#allocation2 + $0x30] sm:$0xff]
          %v1317 = vld [vmem:[#allocation2 + $0x38] sm:$0xff]
          %v1318 = vld [vmem:[#allocation2 + $0x40] sm:$0xff]
          %v1319 = vld [vmem:[#allocation2 + $0x48] sm:$0xff]
          %v1320 = vld [vmem:[#allocation2 + $0x50] sm:$0xff]
          %v1321 = vld [vmem:[#allocation2 + $0x58] sm:$0xff]
          %v1322 = vld [vmem:[#allocation2 + $0x60] sm:$0xff]
          %v1323 = vld [vmem:[#allocation2 + $0x68] sm:$0xff]
          %v1324 = vld [vmem:[#allocation2 + $0x70] sm:$0xff]
          %v1325 = vld [vmem:[#allocation2 + $0x78] sm:$0xff]
          %v1326 = vld [vmem:[#allocation2 + $0x80] sm:$0xff]
          %v1327 = vld [vmem:[#allocation2 + $0x88] sm:$0xff]
          %v1328 = vld [vmem:[#allocation2 + $0x90] sm:$0xff]
          %v1329 = vld [vmem:[#allocation2 + $0x98] sm:$0xff]
          %v1330 = vld [vmem:[#allocation2 + $0xa0] sm:$0xff]
          %v1331 = vld [vmem:[#allocation2 + $0xa8] sm:$0xff]
          %v1332 = vld [vmem:[#allocation2 + $0xb0] sm:$0xff]
          %v1333 = vld [vmem:[#allocation2 + $0xb8] sm:$0xff]
          %v1334 = vld [vmem:[#allocation2 + $0xc0] sm:$0xff]
          %v1335 = vld [vmem:[#allocation2 + $0xc8] sm:$0xff]
          %v1336 = vld [vmem:[#allocation2 + $0xd0] sm:$0xff]
          %v1337 = vld [vmem:[#allocation2 + $0xd8] sm:$0xff]
          %v1338 = vld [vmem:[#allocation2 + $0xe0] sm:$0xff]
          %v1339 = vld [vmem:[#allocation2 + $0xe8] sm:$0xff]
          %v1340 = vld [vmem:[#allocation2 + $0xf0] sm:$0xff]
          %v1341 = vld [vmem:[#allocation2 + $0xf8] sm:$0xff]
          %v1342 = vld [vmem:[#allocation2 + $0x100] sm:$0xff]
          %v1343 = vld [vmem:[#allocation2 + $0x108] sm:$0xff]
          %v1344 = vld [vmem:[#allocation2 + $0x110] sm:$0xff]
          %v1345 = vld [vmem:[#allocation2 + $0x118] sm:$0xff]
          %v1346 = vld [vmem:[#allocation2 + $0x120] sm:$0xff]
          %v1347 = vld [vmem:[#allocation2 + $0x128] sm:$0xff]
          %v1348 = vld [vmem:[#allocation2 + $0x130] sm:$0xff]
          %v1349 = vld [vmem:[#allocation2 + $0x138] sm:$0xff]
          %v1350 = vld [vmem:[#allocation2 + $0x140] sm:$0xff]
          %v1351 = vld [vmem:[#allocation2 + $0x148] sm:$0xff]
          %v1352 = vld [vmem:[#allocation2 + $0x150] sm:$0xff]
          %v1353 = vld [vmem:[#allocation2 + $0x158] sm:$0xff]
          %v1354 = vld [vmem:[#allocation2 + $0x160] sm:$0xff]
          %v1355 = vld [vmem:[#allocation2 + $0x168] sm:$0xff]
          %v1356 = vld [vmem:[#allocation2 + $0x170] sm:$0xff]
          %v1357 = vld [vmem:[#allocation2 + $0x178] sm:$0xff]
          %v1358 = vld [vmem:[%s2] sm:$0x3f]
          %v1360 = vlaneseq
          %v1361 = vshrl.u32 %v1360, 7
          %v1362 = vsub.s32 0, %v1361
          %v1363 = vrot.slane %v1358, %v1362
          %v1364 = vlaneseq
          %v1365 = vshrl.u32 %v1364, 7
          %v1366 = vsub.s32 1, %v1365
          %v1367 = vrot.slane %v1358, %v1366
          %v1368 = vlaneseq
          %v1369 = vshrl.u32 %v1368, 7
          %v1370 = vsub.s32 2, %v1369
          %v1371 = vrot.slane %v1358, %v1370
          %v1372 = vlaneseq
          %v1373 = vshrl.u32 %v1372, 7
          %v1374 = vsub.s32 3, %v1373
          %v1375 = vrot.slane %v1358, %v1374
          %v1376 = vlaneseq
          %v1377 = vshrl.u32 %v1376, 7
          %v1378 = vsub.s32 4, %v1377
          %v1379 = vrot.slane %v1358, %v1378
          %v1380 = vlaneseq
          %v1381 = vshrl.u32 %v1380, 7
          %v1382 = vsub.s32 5, %v1381
          %v1383 = vrot.slane %v1358, %v1382
          %v1390 = vadd.f32 %v1310, %v1363
          %v1391 = vadd.f32 %v1311, %v1367
          %v1392 = vadd.f32 %v1312, %v1371
          %v1393 = vadd.f32 %v1313, %v1375
          %v1394 = vadd.f32 %v1314, %v1379
          %v1395 = vadd.f32 %v1315, %v1383
          %v1396 = vadd.f32 %v1316, %v1363
          %v1397 = vadd.f32 %v1317, %v1367
          %v1398 = vadd.f32 %v1318, %v1371
          %v1399 = vadd.f32 %v1319, %v1375
          %v1400 = vadd.f32 %v1320, %v1379
          %v1401 = vadd.f32 %v1321, %v1383
          %v1402 = vadd.f32 %v1322, %v1363
          %v1403 = vadd.f32 %v1323, %v1367
          %v1404 = vadd.f32 %v1324, %v1371
          %v1405 = vadd.f32 %v1325, %v1375
          %v1406 = vadd.f32 %v1326, %v1379
          %v1407 = vadd.f32 %v1327, %v1383
          %v1408 = vadd.f32 %v1328, %v1363
          %v1409 = vadd.f32 %v1329, %v1367
          %v1410 = vadd.f32 %v1330, %v1371
          %v1411 = vadd.f32 %v1331, %v1375
          %v1412 = vadd.f32 %v1332, %v1379
          %v1413 = vadd.f32 %v1333, %v1383
          %v1414 = vadd.f32 %v1334, %v1363
          %v1415 = vadd.f32 %v1335, %v1367
          %v1416 = vadd.f32 %v1336, %v1371
          %v1417 = vadd.f32 %v1337, %v1375
          %v1418 = vadd.f32 %v1338, %v1379
          %v1419 = vadd.f32 %v1339, %v1383
          %v1420 = vadd.f32 %v1340, %v1363
          %v1421 = vadd.f32 %v1341, %v1367
          %v1422 = vadd.f32 %v1342, %v1371
          %v1423 = vadd.f32 %v1343, %v1375
          %v1424 = vadd.f32 %v1344, %v1379
          %v1425 = vadd.f32 %v1345, %v1383
          %v1426 = vadd.f32 %v1346, %v1363
          %v1427 = vadd.f32 %v1347, %v1367
          %v1428 = vadd.f32 %v1348, %v1371
          %v1429 = vadd.f32 %v1349, %v1375
          %v1430 = vadd.f32 %v1350, %v1379
          %v1431 = vadd.f32 %v1351, %v1383
          %v1432 = vadd.f32 %v1352, %v1363
          %v1433 = vadd.f32 %v1353, %v1367
          %v1434 = vadd.f32 %v1354, %v1371
          %v1435 = vadd.f32 %v1355, %v1375
          %v1436 = vadd.f32 %v1356, %v1379
          %v1437 = vadd.f32 %v1357, %v1383
          %v1438 = vld [vmem:[%s528] sm:$0xff]
          %v1439 = vld [vmem:[%s528 + $0x8] sm:$0xff]
          %v1440 = vld [vmem:[%s528 + $0x10] sm:$0xff]
          %v1441 = vld [vmem:[%s528 + $0x18] sm:$0xff]
          %v1442 = vld [vmem:[%s528 + $0x20] sm:$0xff]
          %v1443 = vld [vmem:[%s528 + $0x28] sm:$0xff]
          %v1444 = vld [vmem:[%s528 + $0x30] sm:$0xff]
          %v1445 = vld [vmem:[%s528 + $0x38] sm:$0xff]
          %v1446 = vld [vmem:[%s528 + $0x40] sm:$0xff]
          %v1447 = vld [vmem:[%s528 + $0x48] sm:$0xff]
          %v1448 = vld [vmem:[%s528 + $0x50] sm:$0xff]
          %v1449 = vld [vmem:[%s528 + $0x58] sm:$0xff]
          %v1450 = vld [vmem:[%s528 + $0x60] sm:$0xff]
          %v1451 = vld [vmem:[%s528 + $0x68] sm:$0xff]
          %v1452 = vld [vmem:[%s528 + $0x70] sm:$0xff]
          %v1453 = vld [vmem:[%s528 + $0x78] sm:$0xff]
          %v1454 = vld [vmem:[%s535] sm:$0xff]
          %v1455 = vld [vmem:[%s535 + $0x8] sm:$0xff]
          %v1456 = vld [vmem:[%s535 + $0x10] sm:$0xff]
          %v1457 = vld [vmem:[%s535 + $0x18] sm:$0xff]
          %v1458 = vld [vmem:[%s535 + $0x20] sm:$0xff]
          %v1459 = vld [vmem:[%s535 + $0x28] sm:$0xff]
          %v1460 = vld [vmem:[%s535 + $0x30] sm:$0xff]
          %v1461 = vld [vmem:[%s535 + $0x38] sm:$0xff]
          %v1462 = vld [vmem:[%s535 + $0x40] sm:$0xff]
          %v1463 = vld [vmem:[%s535 + $0x48] sm:$0xff]
          %v1464 = vld [vmem:[%s535 + $0x50] sm:$0xff]
          %v1465 = vld [vmem:[%s535 + $0x58] sm:$0xff]
          %v1466 = vld [vmem:[%s535 + $0x60] sm:$0xff]
          %v1467 = vld [vmem:[%s535 + $0x68] sm:$0xff]
          %v1468 = vld [vmem:[%s535 + $0x70] sm:$0xff]
          %v1469 = vld [vmem:[%s535 + $0x78] sm:$0xff]
          %v1470 = vlaneseq
          %v1471 = vand.u32 %v1470, 127
          %v1472 = vadd.s32 %v1471, 128
          %vm1473 = vcmp.lt.s32.totalorder %v1471, 0
          %v1474 = vsub.s32 0, %v1471
          %v1475 = vsel %vm1473, %v1474, %v1471
          %v1476 = vshrl.u32 %v1475, 1
          %v1477 = vand.u32 %v1475, 1
          %v1478 = vsub.s32 0, %v1477
          %v1479 = vsel %vm1473, %v1478, %v1477
          %vm1480 = vcmp.lt.s32.totalorder %v1472, 0
          %v1481 = vsub.s32 0, %v1472
          %v1482 = vsel %vm1480, %v1481, %v1472
          %v1483 = vshrl.u32 %v1482, 1
          %v1484 = vand.u32 %v1482, 1
          %v1485 = vsub.s32 0, %v1484
          %v1486 = vsel %vm1480, %v1485, %v1484
          %vm1487 = vcmp.ne.s32.totalorder %v1479, 0
          %vm1488 = vcmp.ne.s32.totalorder %v1486, 0
          %vm1489 = vcmp.lt.s32.totalorder %v1479, 0
          %vm1490 = vcmp.lt.s32.totalorder %v1486, 0
          %vm1491 = vmand %vm1489, %vm1487
          %vm1492 = vmand %vm1490, %vm1488
          %v1493 = vadd.s32 %v1479, 2
          %v1494 = vadd.s32 %v1486, 2
          %v1495 = vsel %vm1491, %v1493, %v1479
          %v1496 = vsel %vm1492, %v1494, %v1486
          %vm1497 = vcmp.eq.s32.totalorder %v1495, 0
          %vm1498 = vcmp.eq.s32.totalorder %v1496, 0
          %v1499 = vld [vmem:[%s3] sm:$0x3]
          %v1500 = vmul.f32 %v1390, %v1390
          %v1501 = vmul.f32 %v1391, %v1391
          %v1502 = vmul.f32 %v1396, %v1396
          %v1503 = vmul.f32 %v1397, %v1397
          %v1504 = vmul.f32 %v1402, %v1402
          %v1505 = vmul.f32 %v1403, %v1403
          %v1506 = vmul.f32 %v1408, %v1408
          %v1507 = vmul.f32 %v1409, %v1409
          %v1508 = vmul.f32 %v1414, %v1414
          %v1509 = vmul.f32 %v1415, %v1415
          %v1510 = vmul.f32 %v1420, %v1420
          %v1511 = vmul.f32 %v1421, %v1421
          %v1512 = vmul.f32 %v1426, %v1426
          %v1513 = vmul.f32 %v1427, %v1427
          %v1514 = vmul.f32 %v1432, %v1432
          %v1515 = vmul.f32 %v1433, %v1433
          %v1516 = vadd.f32 %v1500, %v1501
          %1517 = vadd.xlane.f32.xlu0 %v1516
          %v1518 = vpop.xlane.xlu0 %1517
          %v1519 = vadd.f32 %v1502, %v1503
          %1520 = vadd.xlane.f32.xlu0 %v1519
          %v1521 = vpop.xlane.xlu0 %1520
          %v1522 = vadd.f32 %v1504, %v1505
          %1523 = vadd.xlane.f32.xlu0 %v1522
          %v1524 = vpop.xlane.xlu0 %1523
          %v1525 = vadd.f32 %v1506, %v1507
          %1526 = vadd.xlane.f32.xlu0 %v1525
          %v1527 = vpop.xlane.xlu0 %1526
          %v1528 = vadd.f32 %v1508, %v1509
          %1529 = vadd.xlane.f32.xlu0 %v1528
          %v1530 = vpop.xlane.xlu0 %1529
          %v1531 = vadd.f32 %v1510, %v1511
          %1532 = vadd.xlane.f32.xlu0 %v1531
          %v1533 = vpop.xlane.xlu0 %1532
          %v1534 = vadd.f32 %v1512, %v1513
          %1535 = vadd.xlane.f32.xlu0 %v1534
          %v1536 = vpop.xlane.xlu0 %1535
          %v1537 = vadd.f32 %v1514, %v1515
          %1538 = vadd.xlane.f32.xlu0 %v1537
          %v1539 = vpop.xlane.xlu0 %1538
          %v1540 = vrcp.pop 256.0
          %v1541 = vmul.f32 %v1518, %v1540
          %v1542 = vmul.f32 %v1521, %v1540
          %v1543 = vmul.f32 %v1524, %v1540
          %v1544 = vmul.f32 %v1527, %v1540
          %v1545 = vmul.f32 %v1530, %v1540
          %v1546 = vmul.f32 %v1533, %v1540
          %v1547 = vmul.f32 %v1536, %v1540
          %v1548 = vmul.f32 %v1539, %v1540
          %v1549 = vadd.f32 %v1541, 1e-06
          %v1550 = vadd.f32 %v1542, 1e-06
          %v1551 = vadd.f32 %v1543, 1e-06
          %v1552 = vadd.f32 %v1544, 1e-06
          %v1553 = vadd.f32 %v1545, 1e-06
          %v1554 = vadd.f32 %v1546, 1e-06
          %v1555 = vadd.f32 %v1547, 1e-06
          %v1556 = vadd.f32 %v1548, 1e-06
          %v1557 = vrsqrt.pop %v1549
          %v1558 = vrsqrt.pop %v1550
          %v1559 = vrsqrt.pop %v1551
          %v1560 = vrsqrt.pop %v1552
          %v1561 = vrsqrt.pop %v1553
          %v1562 = vrsqrt.pop %v1554
          %v1563 = vrsqrt.pop %v1555
          %v1564 = vrsqrt.pop %v1556
          %v1565 = vmul.f32 %v1390, %v1557
          %v1566 = vmul.f32 %v1391, %v1557
          %v1567 = vmul.f32 %v1396, %v1558
          %v1568 = vmul.f32 %v1397, %v1558
          %v1569 = vmul.f32 %v1402, %v1559
          %v1570 = vmul.f32 %v1403, %v1559
          %v1571 = vmul.f32 %v1408, %v1560
          %v1572 = vmul.f32 %v1409, %v1560
          %v1573 = vmul.f32 %v1414, %v1561
          %v1574 = vmul.f32 %v1415, %v1561
          %v1575 = vmul.f32 %v1420, %v1562
          %v1576 = vmul.f32 %v1421, %v1562
          %v1577 = vmul.f32 %v1426, %v1563
          %v1578 = vmul.f32 %v1427, %v1563
          %v1579 = vmul.f32 %v1432, %v1564
          %v1580 = vmul.f32 %v1433, %v1564
          %v1582 = vlaneseq
          %v1583 = vshrl.u32 %v1582, 7
          %v1584 = vsub.s32 0, %v1583
          %v1585 = vrot.slane %v1499, %v1584
          %v1586 = vlaneseq
          %v1587 = vshrl.u32 %v1586, 7
          %v1588 = vsub.s32 1, %v1587
          %v1589 = vrot.slane %v1499, %v1588
          %v1592 = vmul.f32 %v1565, %v1585
          %v1593 = vmul.f32 %v1566, %v1589
          %v1594 = vmul.f32 %v1567, %v1585
          %v1595 = vmul.f32 %v1568, %v1589
          %v1596 = vmul.f32 %v1569, %v1585
          %v1597 = vmul.f32 %v1570, %v1589
          %v1598 = vmul.f32 %v1571, %v1585
          %v1599 = vmul.f32 %v1572, %v1589
          %v1600 = vmul.f32 %v1573, %v1585
          %v1601 = vmul.f32 %v1574, %v1589
          %v1602 = vmul.f32 %v1575, %v1585
          %v1603 = vmul.f32 %v1576, %v1589
          %v1604 = vmul.f32 %v1577, %v1585
          %v1605 = vmul.f32 %v1578, %v1589
          %v1606 = vmul.f32 %v1579, %v1585
          %v1607 = vmul.f32 %v1580, %v1589
          %1608 = vrot.lane.b32.xlu0 %v1592, 127
          %v1609 = vpop.permute.xlu0 %1608
          %1610 = vrot.lane.b32.xlu0 %v1594, 127
          %v1611 = vpop.permute.xlu0 %1610
          %1612 = vrot.lane.b32.xlu0 %v1596, 127
          %v1613 = vpop.permute.xlu0 %1612
          %1614 = vrot.lane.b32.xlu0 %v1598, 127
          %v1615 = vpop.permute.xlu0 %1614
          %1616 = vrot.lane.b32.xlu0 %v1600, 127
          %v1617 = vpop.permute.xlu0 %1616
          %1618 = vrot.lane.b32.xlu0 %v1602, 127
          %v1619 = vpop.permute.xlu0 %1618
          %1620 = vrot.lane.b32.xlu0 %v1604, 127
          %v1621 = vpop.permute.xlu0 %1620
          %1622 = vrot.lane.b32.xlu0 %v1606, 127
          %v1623 = vpop.permute.xlu0 %1622
          %1624 = vrot.lane.b32.xlu0 %v1593, 127
          %v1625 = vpop.permute.xlu0 %1624
          %1626 = vrot.lane.b32.xlu0 %v1595, 127
          %v1627 = vpop.permute.xlu0 %1626
          %1628 = vrot.lane.b32.xlu0 %v1597, 127
          %v1629 = vpop.permute.xlu0 %1628
          %1630 = vrot.lane.b32.xlu0 %v1599, 127
          %v1631 = vpop.permute.xlu0 %1630
          %1632 = vrot.lane.b32.xlu0 %v1601, 127
          %v1633 = vpop.permute.xlu0 %1632
          %1634 = vrot.lane.b32.xlu0 %v1603, 127
          %v1635 = vpop.permute.xlu0 %1634
          %1636 = vrot.lane.b32.xlu0 %v1605, 127
          %v1637 = vpop.permute.xlu0 %1636
          %1638 = vrot.lane.b32.xlu0 %v1607, 127
          %v1639 = vpop.permute.xlu0 %1638
          %vm1640 = vcmp.lt.s32.totalorder %v1471, 127
          %v1641 = vsel %vm1640, %v1609, %v1625
          %v1642 = vsel %vm1640, %v1611, %v1627
          %v1643 = vsel %vm1640, %v1613, %v1629
          %v1644 = vsel %vm1640, %v1615, %v1631
          %v1645 = vsel %vm1640, %v1617, %v1633
          %v1646 = vsel %vm1640, %v1619, %v1635
          %v1647 = vsel %vm1640, %v1621, %v1637
          %v1648 = vsel %vm1640, %v1623, %v1639
          %v1649 = vsel %vm1640, %v1625, %v1609
          %v1650 = vsel %vm1640, %v1627, %v1611
          %v1651 = vsel %vm1640, %v1629, %v1613
          %v1652 = vsel %vm1640, %v1631, %v1615
          %v1653 = vsel %vm1640, %v1633, %v1617
          %v1654 = vsel %vm1640, %v1635, %v1619
          %v1655 = vsel %vm1640, %v1637, %v1621
          %v1656 = vsel %vm1640, %v1639, %v1623
          %1657 = vrot.lane.b32.xlu0 %v1592, 1
          %v1658 = vpop.permute.xlu0 %1657
          %1659 = vrot.lane.b32.xlu0 %v1594, 1
          %v1660 = vpop.permute.xlu0 %1659
          %1661 = vrot.lane.b32.xlu0 %v1596, 1
          %v1662 = vpop.permute.xlu0 %1661
          %1663 = vrot.lane.b32.xlu0 %v1598, 1
          %v1664 = vpop.permute.xlu0 %1663
          %1665 = vrot.lane.b32.xlu0 %v1600, 1
          %v1666 = vpop.permute.xlu0 %1665
          %1667 = vrot.lane.b32.xlu0 %v1602, 1
          %v1668 = vpop.permute.xlu0 %1667
          %1669 = vrot.lane.b32.xlu0 %v1604, 1
          %v1670 = vpop.permute.xlu0 %1669
          %1671 = vrot.lane.b32.xlu0 %v1606, 1
          %v1672 = vpop.permute.xlu0 %1671
          %1673 = vrot.lane.b32.xlu0 %v1593, 1
          %v1674 = vpop.permute.xlu0 %1673
          %1675 = vrot.lane.b32.xlu0 %v1595, 1
          %v1676 = vpop.permute.xlu0 %1675
          %1677 = vrot.lane.b32.xlu0 %v1597, 1
          %v1678 = vpop.permute.xlu0 %1677
          %1679 = vrot.lane.b32.xlu0 %v1599, 1
          %v1680 = vpop.permute.xlu0 %1679
          %1681 = vrot.lane.b32.xlu0 %v1601, 1
          %v1682 = vpop.permute.xlu0 %1681
          %1683 = vrot.lane.b32.xlu0 %v1603, 1
          %v1684 = vpop.permute.xlu0 %1683
          %1685 = vrot.lane.b32.xlu0 %v1605, 1
          %v1686 = vpop.permute.xlu0 %1685
          %1687 = vrot.lane.b32.xlu0 %v1607, 1
          %v1688 = vpop.permute.xlu0 %1687
          %vm1689 = vcmp.lt.s32.totalorder %v1471, 1
          %v1690 = vsel %vm1689, %v1658, %v1674
          %v1691 = vsel %vm1689, %v1660, %v1676
          %v1692 = vsel %vm1689, %v1662, %v1678
          %v1693 = vsel %vm1689, %v1664, %v1680
          %v1694 = vsel %vm1689, %v1666, %v1682
          %v1695 = vsel %vm1689, %v1668, %v1684
          %v1696 = vsel %vm1689, %v1670, %v1686
          %v1697 = vsel %vm1689, %v1672, %v1688
          %v1698 = vsel %vm1689, %v1674, %v1658
          %v1699 = vsel %vm1689, %v1676, %v1660
          %v1700 = vsel %vm1689, %v1678, %v1662
          %v1701 = vsel %vm1689, %v1680, %v1664
          %v1702 = vsel %vm1689, %v1682, %v1666
          %v1703 = vsel %vm1689, %v1684, %v1668
          %v1704 = vsel %vm1689, %v1686, %v1670
          %v1705 = vsel %vm1689, %v1688, %v1672
          %v1706 = vsel %vm1497, %v1641, %v1698
          %v1707 = vsel %vm1498, %v1649, %v1690
          %v1708 = vsel %vm1497, %v1642, %v1699
          %v1709 = vsel %vm1498, %v1650, %v1691
          %v1710 = vsel %vm1497, %v1643, %v1700
          %v1711 = vsel %vm1498, %v1651, %v1692
          %v1712 = vsel %vm1497, %v1644, %v1701
          %v1713 = vsel %vm1498, %v1652, %v1693
          %v1714 = vsel %vm1497, %v1645, %v1702
          %v1715 = vsel %vm1498, %v1653, %v1694
          %v1716 = vsel %vm1497, %v1646, %v1703
          %v1717 = vsel %vm1498, %v1654, %v1695
          %v1718 = vsel %vm1497, %v1647, %v1704
          %v1719 = vsel %vm1498, %v1655, %v1696
          %v1720 = vsel %vm1497, %v1648, %v1705
          %v1721 = vsel %vm1498, %v1656, %v1697
          %v1722 = vmul.f32 %v1592, %v1438
          %v1723 = vmul.f32 %v1593, %v1439
          %v1724 = vmul.f32 %v1594, %v1440
          %v1725 = vmul.f32 %v1595, %v1441
          %v1726 = vmul.f32 %v1596, %v1442
          %v1727 = vmul.f32 %v1597, %v1443
          %v1728 = vmul.f32 %v1598, %v1444
          %v1729 = vmul.f32 %v1599, %v1445
          %v1730 = vmul.f32 %v1600, %v1446
          %v1731 = vmul.f32 %v1601, %v1447
          %v1732 = vmul.f32 %v1602, %v1448
          %v1733 = vmul.f32 %v1603, %v1449
          %v1734 = vmul.f32 %v1604, %v1450
          %v1735 = vmul.f32 %v1605, %v1451
          %v1736 = vmul.f32 %v1606, %v1452
          %v1737 = vmul.f32 %v1607, %v1453
          %v1738 = vmul.f32 %v1706, %v1454
          %v1739 = vmul.f32 %v1707, %v1455
          %v1740 = vmul.f32 %v1708, %v1456
          %v1741 = vmul.f32 %v1709, %v1457
          %v1742 = vmul.f32 %v1710, %v1458
          %v1743 = vmul.f32 %v1711, %v1459
          %v1744 = vmul.f32 %v1712, %v1460
          %v1745 = vmul.f32 %v1713, %v1461
          %v1746 = vmul.f32 %v1714, %v1462
          %v1747 = vmul.f32 %v1715, %v1463
          %v1748 = vmul.f32 %v1716, %v1464
          %v1749 = vmul.f32 %v1717, %v1465
          %v1750 = vmul.f32 %v1718, %v1466
          %v1751 = vmul.f32 %v1719, %v1467
          %v1752 = vmul.f32 %v1720, %v1468
          %v1753 = vmul.f32 %v1721, %v1469
          %v1754 = vadd.f32 %v1722, %v1738
          %v1755 = vadd.f32 %v1723, %v1739
          %v1756 = vadd.f32 %v1724, %v1740
          %v1757 = vadd.f32 %v1725, %v1741
          %v1758 = vadd.f32 %v1726, %v1742
          %v1759 = vadd.f32 %v1727, %v1743
          %v1760 = vadd.f32 %v1728, %v1744
          %v1761 = vadd.f32 %v1729, %v1745
          %v1762 = vadd.f32 %v1730, %v1746
          %v1763 = vadd.f32 %v1731, %v1747
          %v1764 = vadd.f32 %v1732, %v1748
          %v1765 = vadd.f32 %v1733, %v1749
          %v1766 = vadd.f32 %v1734, %v1750
          %v1767 = vadd.f32 %v1735, %v1751
          %v1768 = vadd.f32 %v1736, %v1752
          %v1769 = vadd.f32 %v1737, %v1753
          %v1770 = vpack.c.bf16 %v1756, %v1754
          %v1771 = vpack.c.bf16 %v1757, %v1755
          %v1772 = vpack.c.bf16 %v1760, %v1758
          %v1773 = vpack.c.bf16 %v1761, %v1759
          %v1774 = vpack.c.bf16 %v1764, %v1762
          %v1775 = vpack.c.bf16 %v1765, %v1763
          %v1776 = vpack.c.bf16 %v1768, %v1766
          %v1777 = vpack.c.bf16 %v1769, %v1767
          %v1786 = vunpack.c.l.b16 %v1770
          %v1787 = vunpack.c.l.b16 %v1771
          %v1788 = vunpack.c.h.b16 %v1770
          %v1789 = vunpack.c.h.b16 %v1771
          %v1790 = vunpack.c.l.b16 %v1772
          %v1791 = vunpack.c.l.b16 %v1773
          %v1792 = vunpack.c.h.b16 %v1772
          %v1793 = vunpack.c.h.b16 %v1773
          %v1794 = vunpack.c.l.b16 %v1774
          %v1795 = vunpack.c.l.b16 %v1775
          %v1796 = vunpack.c.h.b16 %v1774
          %v1797 = vunpack.c.h.b16 %v1775
          %v1798 = vunpack.c.l.b16 %v1776
          %v1799 = vunpack.c.l.b16 %v1777
          %v1800 = vunpack.c.h.b16 %v1776
          %v1801 = vunpack.c.h.b16 %v1777
          %v1802 = vpack.c.b16 %v1787, %v1786
          %v1803 = vpack.c.b16 %v1789, %v1788
          %v1804 = vpack.c.b16 %v1791, %v1790
          %v1805 = vpack.c.b16 %v1793, %v1792
          %v1806 = vpack.c.b16 %v1795, %v1794
          %v1807 = vpack.c.b16 %v1797, %v1796
          %v1808 = vpack.c.b16 %v1799, %v1798
          %v1809 = vpack.c.b16 %v1801, %v1800
          %1818 = vst [vmem:[%s546] sm:$0xff] %v1802
          %1819 = vst [vmem:[%s546 + $0x8] sm:$0xff] %v1803
          %1820 = vst [vmem:[%s546 + $0x10] sm:$0xff] %v1804
          %1821 = vst [vmem:[%s546 + $0x18] sm:$0xff] %v1805
          %1822 = vst [vmem:[%s546 + $0x20] sm:$0xff] %v1806
          %1823 = vst [vmem:[%s546 + $0x28] sm:$0xff] %v1807
          %1824 = vst [vmem:[%s546 + $0x30] sm:$0xff] %v1808
          %1825 = vst [vmem:[%s546 + $0x38] sm:$0xff] %v1809
          %v1826 = vld [vmem:[%s4] sm:$0x3]
          %v1827 = vmul.f32 %v1392, %v1392
          %v1828 = vmul.f32 %v1393, %v1393
          %v1829 = vmul.f32 %v1398, %v1398
          %v1830 = vmul.f32 %v1399, %v1399
          %v1831 = vmul.f32 %v1404, %v1404
          %v1832 = vmul.f32 %v1405, %v1405
          %v1833 = vmul.f32 %v1410, %v1410
          %v1834 = vmul.f32 %v1411, %v1411
          %v1835 = vmul.f32 %v1416, %v1416
          %v1836 = vmul.f32 %v1417, %v1417
          %v1837 = vmul.f32 %v1422, %v1422
          %v1838 = vmul.f32 %v1423, %v1423
          %v1839 = vmul.f32 %v1428, %v1428
          %v1840 = vmul.f32 %v1429, %v1429
          %v1841 = vmul.f32 %v1434, %v1434
          %v1842 = vmul.f32 %v1435, %v1435
          %v1843 = vadd.f32 %v1827, %v1828
          %1844 = vadd.xlane.f32.xlu0 %v1843
          %v1845 = vpop.xlane.xlu0 %1844
          %v1846 = vadd.f32 %v1829, %v1830
          %1847 = vadd.xlane.f32.xlu0 %v1846
          %v1848 = vpop.xlane.xlu0 %1847
          %v1849 = vadd.f32 %v1831, %v1832
          %1850 = vadd.xlane.f32.xlu0 %v1849
          %v1851 = vpop.xlane.xlu0 %1850
          %v1852 = vadd.f32 %v1833, %v1834
          %1853 = vadd.xlane.f32.xlu0 %v1852
          %v1854 = vpop.xlane.xlu0 %1853
          %v1855 = vadd.f32 %v1835, %v1836
          %1856 = vadd.xlane.f32.xlu0 %v1855
          %v1857 = vpop.xlane.xlu0 %1856
          %v1858 = vadd.f32 %v1837, %v1838
          %1859 = vadd.xlane.f32.xlu0 %v1858
          %v1860 = vpop.xlane.xlu0 %1859
          %v1861 = vadd.f32 %v1839, %v1840
          %1862 = vadd.xlane.f32.xlu0 %v1861
          %v1863 = vpop.xlane.xlu0 %1862
          %v1864 = vadd.f32 %v1841, %v1842
          %1865 = vadd.xlane.f32.xlu0 %v1864
          %v1866 = vpop.xlane.xlu0 %1865
          %v1867 = vmul.f32 %v1845, %v1540
          %v1868 = vmul.f32 %v1848, %v1540
          %v1869 = vmul.f32 %v1851, %v1540
          %v1870 = vmul.f32 %v1854, %v1540
          %v1871 = vmul.f32 %v1857, %v1540
          %v1872 = vmul.f32 %v1860, %v1540
          %v1873 = vmul.f32 %v1863, %v1540
          %v1874 = vmul.f32 %v1866, %v1540
          %v1875 = vadd.f32 %v1867, 1e-06
          %v1876 = vadd.f32 %v1868, 1e-06
          %v1877 = vadd.f32 %v1869, 1e-06
          %v1878 = vadd.f32 %v1870, 1e-06
          %v1879 = vadd.f32 %v1871, 1e-06
          %v1880 = vadd.f32 %v1872, 1e-06
          %v1881 = vadd.f32 %v1873, 1e-06
          %v1882 = vadd.f32 %v1874, 1e-06
          %v1883 = vrsqrt.pop %v1875
          %v1884 = vrsqrt.pop %v1876
          %v1885 = vrsqrt.pop %v1877
          %v1886 = vrsqrt.pop %v1878
          %v1887 = vrsqrt.pop %v1879
          %v1888 = vrsqrt.pop %v1880
          %v1889 = vrsqrt.pop %v1881
          %v1890 = vrsqrt.pop %v1882
          %v1891 = vmul.f32 %v1392, %v1883
          %v1892 = vmul.f32 %v1393, %v1883
          %v1893 = vmul.f32 %v1398, %v1884
          %v1894 = vmul.f32 %v1399, %v1884
          %v1895 = vmul.f32 %v1404, %v1885
          %v1896 = vmul.f32 %v1405, %v1885
          %v1897 = vmul.f32 %v1410, %v1886
          %v1898 = vmul.f32 %v1411, %v1886
          %v1899 = vmul.f32 %v1416, %v1887
          %v1900 = vmul.f32 %v1417, %v1887
          %v1901 = vmul.f32 %v1422, %v1888
          %v1902 = vmul.f32 %v1423, %v1888
          %v1903 = vmul.f32 %v1428, %v1889
          %v1904 = vmul.f32 %v1429, %v1889
          %v1905 = vmul.f32 %v1434, %v1890
          %v1906 = vmul.f32 %v1435, %v1890
          %v1908 = vlaneseq
          %v1909 = vshrl.u32 %v1908, 7
          %v1910 = vsub.s32 0, %v1909
          %v1911 = vrot.slane %v1826, %v1910
          %v1912 = vlaneseq
          %v1913 = vshrl.u32 %v1912, 7
          %v1914 = vsub.s32 1, %v1913
          %v1915 = vrot.slane %v1826, %v1914
          %v1918 = vmul.f32 %v1891, %v1911
          %v1919 = vmul.f32 %v1892, %v1915
          %v1920 = vmul.f32 %v1893, %v1911
          %v1921 = vmul.f32 %v1894, %v1915
          %v1922 = vmul.f32 %v1895, %v1911
          %v1923 = vmul.f32 %v1896, %v1915
          %v1924 = vmul.f32 %v1897, %v1911
          %v1925 = vmul.f32 %v1898, %v1915
          %v1926 = vmul.f32 %v1899, %v1911
          %v1927 = vmul.f32 %v1900, %v1915
          %v1928 = vmul.f32 %v1901, %v1911
          %v1929 = vmul.f32 %v1902, %v1915
          %v1930 = vmul.f32 %v1903, %v1911
          %v1931 = vmul.f32 %v1904, %v1915
          %v1932 = vmul.f32 %v1905, %v1911
          %v1933 = vmul.f32 %v1906, %v1915
          %1934 = vrot.lane.b32.xlu0 %v1918, 127
          %v1935 = vpop.permute.xlu0 %1934
          %1936 = vrot.lane.b32.xlu0 %v1920, 127
          %v1937 = vpop.permute.xlu0 %1936
          %1938 = vrot.lane.b32.xlu0 %v1922, 127
          %v1939 = vpop.permute.xlu0 %1938
          %1940 = vrot.lane.b32.xlu0 %v1924, 127
          %v1941 = vpop.permute.xlu0 %1940
          %1942 = vrot.lane.b32.xlu0 %v1926, 127
          %v1943 = vpop.permute.xlu0 %1942
          %1944 = vrot.lane.b32.xlu0 %v1928, 127
          %v1945 = vpop.permute.xlu0 %1944
          %1946 = vrot.lane.b32.xlu0 %v1930, 127
          %v1947 = vpop.permute.xlu0 %1946
          %1948 = vrot.lane.b32.xlu0 %v1932, 127
          %v1949 = vpop.permute.xlu0 %1948
          %1950 = vrot.lane.b32.xlu0 %v1919, 127
          %v1951 = vpop.permute.xlu0 %1950
          %1952 = vrot.lane.b32.xlu0 %v1921, 127
          %v1953 = vpop.permute.xlu0 %1952
          %1954 = vrot.lane.b32.xlu0 %v1923, 127
          %v1955 = vpop.permute.xlu0 %1954
          %1956 = vrot.lane.b32.xlu0 %v1925, 127
          %v1957 = vpop.permute.xlu0 %1956
          %1958 = vrot.lane.b32.xlu0 %v1927, 127
          %v1959 = vpop.permute.xlu0 %1958
          %1960 = vrot.lane.b32.xlu0 %v1929, 127
          %v1961 = vpop.permute.xlu0 %1960
          %1962 = vrot.lane.b32.xlu0 %v1931, 127
          %v1963 = vpop.permute.xlu0 %1962
          %1964 = vrot.lane.b32.xlu0 %v1933, 127
          %v1965 = vpop.permute.xlu0 %1964
          %v1966 = vsel %vm1640, %v1935, %v1951
          %v1967 = vsel %vm1640, %v1937, %v1953
          %v1968 = vsel %vm1640, %v1939, %v1955
          %v1969 = vsel %vm1640, %v1941, %v1957
          %v1970 = vsel %vm1640, %v1943, %v1959
          %v1971 = vsel %vm1640, %v1945, %v1961
          %v1972 = vsel %vm1640, %v1947, %v1963
          %v1973 = vsel %vm1640, %v1949, %v1965
          %v1974 = vsel %vm1640, %v1951, %v1935
          %v1975 = vsel %vm1640, %v1953, %v1937
          %v1976 = vsel %vm1640, %v1955, %v1939
          %v1977 = vsel %vm1640, %v1957, %v1941
          %v1978 = vsel %vm1640, %v1959, %v1943
          %v1979 = vsel %vm1640, %v1961, %v1945
          %v1980 = vsel %vm1640, %v1963, %v1947
          %v1981 = vsel %vm1640, %v1965, %v1949
          %1982 = vrot.lane.b32.xlu0 %v1918, 1
          %v1983 = vpop.permute.xlu0 %1982
          %1984 = vrot.lane.b32.xlu0 %v1920, 1
          %v1985 = vpop.permute.xlu0 %1984
          %1986 = vrot.lane.b32.xlu0 %v1922, 1
          %v1987 = vpop.permute.xlu0 %1986
          %1988 = vrot.lane.b32.xlu0 %v1924, 1
          %v1989 = vpop.permute.xlu0 %1988
          %1990 = vrot.lane.b32.xlu0 %v1926, 1
          %v1991 = vpop.permute.xlu0 %1990
          %1992 = vrot.lane.b32.xlu0 %v1928, 1
          %v1993 = vpop.permute.xlu0 %1992
          %1994 = vrot.lane.b32.xlu0 %v1930, 1
          %v1995 = vpop.permute.xlu0 %1994
          %1996 = vrot.lane.b32.xlu0 %v1932, 1
          %v1997 = vpop.permute.xlu0 %1996
          %1998 = vrot.lane.b32.xlu0 %v1919, 1
          %v1999 = vpop.permute.xlu0 %1998
          %2000 = vrot.lane.b32.xlu0 %v1921, 1
          %v2001 = vpop.permute.xlu0 %2000
          %2002 = vrot.lane.b32.xlu0 %v1923, 1
          %v2003 = vpop.permute.xlu0 %2002
          %2004 = vrot.lane.b32.xlu0 %v1925, 1
          %v2005 = vpop.permute.xlu0 %2004
          %2006 = vrot.lane.b32.xlu0 %v1927, 1
          %v2007 = vpop.permute.xlu0 %2006
          %2008 = vrot.lane.b32.xlu0 %v1929, 1
          %v2009 = vpop.permute.xlu0 %2008
          %2010 = vrot.lane.b32.xlu0 %v1931, 1
          %v2011 = vpop.permute.xlu0 %2010
          %2012 = vrot.lane.b32.xlu0 %v1933, 1
          %v2013 = vpop.permute.xlu0 %2012
          %v2014 = vsel %vm1689, %v1983, %v1999
          %v2015 = vsel %vm1689, %v1985, %v2001
          %v2016 = vsel %vm1689, %v1987, %v2003
          %v2017 = vsel %vm1689, %v1989, %v2005
          %v2018 = vsel %vm1689, %v1991, %v2007
          %v2019 = vsel %vm1689, %v1993, %v2009
          %v2020 = vsel %vm1689, %v1995, %v2011
          %v2021 = vsel %vm1689, %v1997, %v2013
          %v2022 = vsel %vm1689, %v1999, %v1983
          %v2023 = vsel %vm1689, %v2001, %v1985
          %v2024 = vsel %vm1689, %v2003, %v1987
          %v2025 = vsel %vm1689, %v2005, %v1989
          %v2026 = vsel %vm1689, %v2007, %v1991
          %v2027 = vsel %vm1689, %v2009, %v1993
          %v2028 = vsel %vm1689, %v2011, %v1995
          %v2029 = vsel %vm1689, %v2013, %v1997
          %v2030 = vsel %vm1497, %v1966, %v2022
          %v2031 = vsel %vm1498, %v1974, %v2014
          %v2032 = vsel %vm1497, %v1967, %v2023
          %v2033 = vsel %vm1498, %v1975, %v2015
          %v2034 = vsel %vm1497, %v1968, %v2024
          %v2035 = vsel %vm1498, %v1976, %v2016
          %v2036 = vsel %vm1497, %v1969, %v2025
          %v2037 = vsel %vm1498, %v1977, %v2017
          %v2038 = vsel %vm1497, %v1970, %v2026
          %v2039 = vsel %vm1498, %v1978, %v2018
          %v2040 = vsel %vm1497, %v1971, %v2027
          %v2041 = vsel %vm1498, %v1979, %v2019
          %v2042 = vsel %vm1497, %v1972, %v2028
          %v2043 = vsel %vm1498, %v1980, %v2020
          %v2044 = vsel %vm1497, %v1973, %v2029
          %v2045 = vsel %vm1498, %v1981, %v2021
          %v2046 = vmul.f32 %v1918, %v1438
          %v2047 = vmul.f32 %v1919, %v1439
          %v2048 = vmul.f32 %v1920, %v1440
          %v2049 = vmul.f32 %v1921, %v1441
          %v2050 = vmul.f32 %v1922, %v1442
          %v2051 = vmul.f32 %v1923, %v1443
          %v2052 = vmul.f32 %v1924, %v1444
          %v2053 = vmul.f32 %v1925, %v1445
          %v2054 = vmul.f32 %v1926, %v1446
          %v2055 = vmul.f32 %v1927, %v1447
          %v2056 = vmul.f32 %v1928, %v1448
          %v2057 = vmul.f32 %v1929, %v1449
          %v2058 = vmul.f32 %v1930, %v1450
          %v2059 = vmul.f32 %v1931, %v1451
          %v2060 = vmul.f32 %v1932, %v1452
          %v2061 = vmul.f32 %v1933, %v1453
          %v2062 = vmul.f32 %v2030, %v1454
          %v2063 = vmul.f32 %v2031, %v1455
          %v2064 = vmul.f32 %v2032, %v1456
          %v2065 = vmul.f32 %v2033, %v1457
          %v2066 = vmul.f32 %v2034, %v1458
          %v2067 = vmul.f32 %v2035, %v1459
          %v2068 = vmul.f32 %v2036, %v1460
          %v2069 = vmul.f32 %v2037, %v1461
          %v2070 = vmul.f32 %v2038, %v1462
          %v2071 = vmul.f32 %v2039, %v1463
          %v2072 = vmul.f32 %v2040, %v1464
          %v2073 = vmul.f32 %v2041, %v1465
          %v2074 = vmul.f32 %v2042, %v1466
          %v2075 = vmul.f32 %v2043, %v1467
          %v2076 = vmul.f32 %v2044, %v1468
          %v2077 = vmul.f32 %v2045, %v1469
          %v2078 = vadd.f32 %v2046, %v2062
          %v2079 = vadd.f32 %v2047, %v2063
          %v2080 = vadd.f32 %v2048, %v2064
          %v2081 = vadd.f32 %v2049, %v2065
          %v2082 = vadd.f32 %v2050, %v2066
          %v2083 = vadd.f32 %v2051, %v2067
          %v2084 = vadd.f32 %v2052, %v2068
          %v2085 = vadd.f32 %v2053, %v2069
          %v2086 = vadd.f32 %v2054, %v2070
          %v2087 = vadd.f32 %v2055, %v2071
          %v2088 = vadd.f32 %v2056, %v2072
          %v2089 = vadd.f32 %v2057, %v2073
          %v2090 = vadd.f32 %v2058, %v2074
          %v2091 = vadd.f32 %v2059, %v2075
          %v2092 = vadd.f32 %v2060, %v2076
          %v2093 = vadd.f32 %v2061, %v2077
          %v2094 = vpack.c.bf16 %v2080, %v2078
          %v2095 = vpack.c.bf16 %v2081, %v2079
          %v2096 = vpack.c.bf16 %v2084, %v2082
          %v2097 = vpack.c.bf16 %v2085, %v2083
          %v2098 = vpack.c.bf16 %v2088, %v2086
          %v2099 = vpack.c.bf16 %v2089, %v2087
          %v2100 = vpack.c.bf16 %v2092, %v2090
          %v2101 = vpack.c.bf16 %v2093, %v2091
          %v2110 = vunpack.c.l.b16 %v2094
          %v2111 = vunpack.c.l.b16 %v2095
          %v2112 = vunpack.c.h.b16 %v2094
          %v2113 = vunpack.c.h.b16 %v2095
          %v2114 = vunpack.c.l.b16 %v2096
          %v2115 = vunpack.c.l.b16 %v2097
          %v2116 = vunpack.c.h.b16 %v2096
          %v2117 = vunpack.c.h.b16 %v2097
          %v2118 = vunpack.c.l.b16 %v2098
          %v2119 = vunpack.c.l.b16 %v2099
          %v2120 = vunpack.c.h.b16 %v2098
          %v2121 = vunpack.c.h.b16 %v2099
          %v2122 = vunpack.c.l.b16 %v2100
          %v2123 = vunpack.c.l.b16 %v2101
          %v2124 = vunpack.c.h.b16 %v2100
          %v2125 = vunpack.c.h.b16 %v2101
          %v2126 = vpack.c.b16 %v2111, %v2110
          %v2127 = vpack.c.b16 %v2113, %v2112
          %v2128 = vpack.c.b16 %v2115, %v2114
          %v2129 = vpack.c.b16 %v2117, %v2116
          %v2130 = vpack.c.b16 %v2119, %v2118
          %v2131 = vpack.c.b16 %v2121, %v2120
          %v2132 = vpack.c.b16 %v2123, %v2122
          %v2133 = vpack.c.b16 %v2125, %v2124
          %2142 = vst [vmem:[%s557] sm:$0xff] %v2126
          %2143 = vst [vmem:[%s557 + $0x8] sm:$0xff] %v2127
          %2144 = vst [vmem:[%s557 + $0x10] sm:$0xff] %v2128
          %2145 = vst [vmem:[%s557 + $0x18] sm:$0xff] %v2129
          %2146 = vst [vmem:[%s557 + $0x20] sm:$0xff] %v2130
          %2147 = vst [vmem:[%s557 + $0x28] sm:$0xff] %v2131
          %2148 = vst [vmem:[%s557 + $0x30] sm:$0xff] %v2132
          %2149 = vst [vmem:[%s557 + $0x38] sm:$0xff] %v2133
          %v2150 = vpack.c.bf16 %v1400, %v1394
          %v2151 = vpack.c.bf16 %v1401, %v1395
          %v2152 = vpack.c.bf16 %v1412, %v1406
          %v2153 = vpack.c.bf16 %v1413, %v1407
          %v2154 = vpack.c.bf16 %v1424, %v1418
          %v2155 = vpack.c.bf16 %v1425, %v1419
          %v2156 = vpack.c.bf16 %v1436, %v1430
          %v2157 = vpack.c.bf16 %v1437, %v1431
          %v2166 = vunpack.c.l.b16 %v2150
          %v2167 = vunpack.c.l.b16 %v2151
          %v2168 = vunpack.c.h.b16 %v2150
          %v2169 = vunpack.c.h.b16 %v2151
          %v2170 = vunpack.c.l.b16 %v2152
          %v2171 = vunpack.c.l.b16 %v2153
          %v2172 = vunpack.c.h.b16 %v2152
          %v2173 = vunpack.c.h.b16 %v2153
          %v2174 = vunpack.c.l.b16 %v2154
          %v2175 = vunpack.c.l.b16 %v2155
          %v2176 = vunpack.c.h.b16 %v2154
          %v2177 = vunpack.c.h.b16 %v2155
          %v2178 = vunpack.c.l.b16 %v2156
          %v2179 = vunpack.c.l.b16 %v2157
          %v2180 = vunpack.c.h.b16 %v2156
          %v2181 = vunpack.c.h.b16 %v2157
          %v2182 = vpack.c.b16 %v2167, %v2166
          %v2183 = vpack.c.b16 %v2169, %v2168
          %v2184 = vpack.c.b16 %v2171, %v2170
          %v2185 = vpack.c.b16 %v2173, %v2172
          %v2186 = vpack.c.b16 %v2175, %v2174
          %v2187 = vpack.c.b16 %v2177, %v2176
          %v2188 = vpack.c.b16 %v2179, %v2178
          %v2189 = vpack.c.b16 %v2181, %v2180
          %2198 = vst [vmem:[%s568] sm:$0xff] %v2182
          %2199 = vst [vmem:[%s568 + $0x8] sm:$0xff] %v2183
          %2200 = vst [vmem:[%s568 + $0x10] sm:$0xff] %v2184
          %2201 = vst [vmem:[%s568 + $0x18] sm:$0xff] %v2185
          %2202 = vst [vmem:[%s568 + $0x20] sm:$0xff] %v2186
          %2203 = vst [vmem:[%s568 + $0x28] sm:$0xff] %v2187
          %2204 = vst [vmem:[%s568 + $0x30] sm:$0xff] %v2188
          %2205 = vst [vmem:[%s568 + $0x38] sm:$0xff] %v2189
        $region97: #{wan_self_attention.2} parent=84 // pred_fallthru
          _
        %s2206 = smul.u32 8, %s27
        %p2207 = scmp.lt.s32.totalorder %s26, 1
        %s2208 = scalar_select %p2207, %s26, 1
        %p2209 = scmp.lt.s32.totalorder %s2206, 15
        %s2210 = scalar_select %p2209, %s2206, 15
        %s2211 = smul.addr %s2210, 2
        %s2212 = smul.addr %s2208, 32
        %s2213 = sadd.s32 %s2211, %s2212
        %s2214 = smul.addr %s2213, 4
        %s2215 = scalar_lea.vmem %s7, %s2214
        %s2216 = smul.u32 8, %s27
        %p2217 = scmp.lt.s32.totalorder %s26, 1
        %s2218 = scalar_select %p2217, %s26, 1
        %p2219 = scmp.lt.s32.totalorder %s2216, 15
        %s2220 = scalar_select %p2219, %s2216, 15
        %s2221 = smul.addr %s2220, 2
        %s2222 = smul.addr %s2218, 32
        %s2223 = sadd.s32 %s2221, %s2222
        %s2224 = smul.addr %s2223, 4
        %s2225 = scalar_lea.vmem %s8, %s2224
        %s2226 = smul.u32 8, %s27
        %p2227 = scmp.lt.s32.totalorder %s26, 1
        %s2228 = scalar_select %p2227, %s26, 1
        %p2229 = scmp.lt.s32.totalorder %s2226, 15
        %s2230 = scalar_select %p2229, %s2226, 15
        %s2231 = smul.addr %s2230, 2
        %s2232 = smul.addr %s2228, 32
        %s2233 = sadd.s32 %s2231, %s2232
        %s2234 = smul.addr %s2233, 4
        %s2235 = scalar_lea.vmem %s9, %s2234
        // Predicated region
        $region98: #{wan_self_attention.2} parent=84 // pred_check
          %p2236 = pneg %p231
        $region99: #{wan_self_attention.2} parent=84 // pred_check_branch
          %2238 = sbr.rel (%p2236) target = $region101
        $region100: #{wan_self_attention.2} parent=84 // pred_region
          %s2239 = smul.u32 8, %s27
        $region101: #{wan_self_attention.2} parent=84 // pred_fallthru
          _
        // Predicated region
        $region102: #{wan_self_attention.2} parent=84 // pred_check
          %p2240 = pneg %p259
        $region103: #{wan_self_attention.2} parent=84 // pred_check_branch
          %2242 = sbr.rel (%p2240) target = $region105
        $region104: #{wan_self_attention.2} parent=84 // pred_region
          %s2243 = smul.u32 8, %s27
        $region105: #{wan_self_attention.2} parent=84 // pred_fallthru
          _
        // Predicated region
        $region106: #{wan_self_attention.2} parent=84 // pred_check
          %p2244 = pneg %p287
        $region107: #{wan_self_attention.2} parent=84 // pred_check_branch
          %2246 = sbr.rel (%p2244) target = $region109
        $region108: #{wan_self_attention.2} parent=84 // pred_region
          %s2247 = smul.u32 8, %s27
        $region109: #{wan_self_attention.2} parent=84 // pred_fallthru
          _
      $region85: #{wan_self_attention.2} parent=5 // pred_fallthru
        _
      %p2248 = scmp.le.s32.totalorder 2, %s16
      // Predicated region
      $region110: #{wan_self_attention.2} parent=5 // pred_check
        %p2249 = pneg %p2248
      $region111: #{wan_self_attention.2} parent=5 // pred_check_branch
        %2251 = sbr.rel (%p2249) target = $region113
      $region112: #{wan_self_attention.2} parent=5 // pred_region
        %s2252 = ssub.s32 %s16, 2
        // Predicated region
        $region114: #{wan_self_attention.2} parent=112 // pred_check
          %p2253 = pneg %p237
        $region115: #{wan_self_attention.2} parent=112 // pred_check_branch
          %2255 = sbr.rel (%p2253) target = $region117
        $region116: #{wan_self_attention.2} parent=112 // pred_region
          %s2256 = smul.u32 8, %s30
          %p2257 = scmp.lt.s32.totalorder %s29, 1
          %s2258 = scalar_select %p2257, %s29, 1
          %p2259 = scmp.lt.s32.totalorder %s2256, 15
          %s2260 = scalar_select %p2259, %s2256, 15
          %s2261 = smul.addr %s2260, 2
          %s2262 = smul.addr %s2258, 32
          %s2263 = sadd.s32 %s2261, %s2262
          %s2264 = smul.addr %s2263, 4
          %s2265 = scalar_lea.vmem %s7, %s2264
        $region117: #{wan_self_attention.2} parent=112 // pred_fallthru
          _
        // Predicated region
        $region118: #{wan_self_attention.2} parent=112 // pred_check
          %p2266 = pneg %p265
        $region119: #{wan_self_attention.2} parent=112 // pred_check_branch
          %2268 = sbr.rel (%p2266) target = $region121
        $region120: #{wan_self_attention.2} parent=112 // pred_region
          %s2269 = smul.u32 8, %s30
          %p2270 = scmp.lt.s32.totalorder %s29, 1
          %s2271 = scalar_select %p2270, %s29, 1
          %p2272 = scmp.lt.s32.totalorder %s2269, 15
          %s2273 = scalar_select %p2272, %s2269, 15
          %s2274 = smul.addr %s2273, 2
          %s2275 = smul.addr %s2271, 32
          %s2276 = sadd.s32 %s2274, %s2275
          %s2277 = smul.addr %s2276, 4
          %s2278 = scalar_lea.vmem %s8, %s2277
        $region121: #{wan_self_attention.2} parent=112 // pred_fallthru
          _
        // Predicated region
        $region122: #{wan_self_attention.2} parent=112 // pred_check
          %p2279 = pneg %p293
        $region123: #{wan_self_attention.2} parent=112 // pred_check_branch
          %2281 = sbr.rel (%p2279) target = $region125
        $region124: #{wan_self_attention.2} parent=112 // pred_region
          %s2282 = smul.u32 8, %s30
          %p2283 = scmp.lt.s32.totalorder %s29, 1
          %s2284 = scalar_select %p2283, %s29, 1
          %p2285 = scmp.lt.s32.totalorder %s2282, 15
          %s2286 = scalar_select %p2285, %s2282, 15
          %s2287 = smul.addr %s2286, 2
          %s2288 = smul.addr %s2284, 32
          %s2289 = sadd.s32 %s2287, %s2288
          %s2290 = smul.addr %s2289, 4
          %s2291 = scalar_lea.vmem %s9, %s2290
        $region125: #{wan_self_attention.2} parent=112 // pred_fallthru
          _
      $region113: #{wan_self_attention.2} parent=5 // pred_fallthru
        _
    $region6: #{wan_self_attention.2} parent=1 // loop_footer
      %s20 = sadd.s32 1, %s16
    $region7: #{wan_self_attention.2} parent=1 // loop_footer_branch
      %15 = sbr.rel target = $region3
    $region8: #{wan_self_attention.2} parent=1 // loop_exit
      _

// kernel: wan_self_attention.3
$region0: #{wan_self_attention.3}
  #allocation0 [shape = 'u32[]', space=smem, size = 0x4, offset = 0x4, fixed_abs, tag = 'smem constant byte address 0x4 - core index']
  #allocation1 [shape = 'u32[144,128]{1,0:T(1,128)}', space=vmem, size = 0x12000, scoped, tag = 'internal scratch']
  #allocation2 [shape = 'f32[2,128,1]{2,1,0:T(8,128)}', space=vmem, size = 0x20000, scoped, tag = 'scratch operand']
  #allocation3 [shape = 'f32[2,128,1]{2,1,0:T(8,128)}', space=vmem, size = 0x20000, scoped, tag = 'scratch operand']
  #allocation4 [shape = 'f32[128,256]{1,0:T(8,128)}', space=vmem, size = 0x20000, scoped, tag = 'scratch operand']
  %s0 = inlined_call_operand.vmem [shape: bf16[2,128,256], index: 0, kind: input, shape index: {}]
  %s1 = inlined_call_operand.vmem [shape: bf16[2,128,256], index: 1, kind: input, shape index: {}]
  %s2 = inlined_call_operand.vmem [shape: bf16[2,128,256], index: 2, kind: input, shape index: {}]
  %s3 = inlined_call_operand.vmem [shape: bf16[256,256], index: 3, kind: input, shape index: {}]
  %s4 = inlined_call_operand.vmem [shape: f32[1,256], index: 4, kind: input, shape index: {}]
  %s5 = inlined_call_operand.hbm [shape: bf16[2,128,256], index: 5, kind: output, shape index: {}]
  %s6 = sld [smem:[#allocation0]]
  $region61: #{wan_self_attention.3} parent=0
    _
  %s8 = ssub.s32 1, %s6
  %s9 = scalar_select 0, %s8, %s6
  $region1: #{wan_self_attention.3} parent=0
    #allocation5 [shape = 'u8[131072]{0}', space=vmem, size = 0x20000, scoped, tag = 'output window, operand 0']
    #allocation6 [shape = 's32[2]{0}', space=sflag, size = 0x8, scoped, tag = 'scoped memory for wan_self_attention.3']
    %10 = vsyncpa [#allocation6], 0
    %s11 = scalar_lea.sflag [#allocation6], 1
    %12 = vsyncpa %s11, 0
    loop: start=0, step=1, limit=4
    $region2: #{wan_self_attention.3} parent=1 // loop_pre_header
      _
    $region3: #{wan_self_attention.3} parent=1 // loop_header
      %s14 = sphi 0, %s18
      %p15 = scmp.ge.s32.totalorder %s14, 4
      %s21 = sphi 0, %s40
      %s22 = sphi 0, %s36
      %s23 = sphi 0, %s32
      %s24 = sphi 0, %s21
      %s25 = sphi 0, %s22
      %s26 = sphi 0, %s23
      %s27 = sphi 0, %s24
      %s28 = sphi 0, %s25
      %s29 = sphi 0, %s26
      %s45 = sphi 0, %s47
      %s48 = sphi 0, %s45
      %s49 = sphi 0, %s48
      %s65 = sphi 0, %s49
      %s73 = sphi 0, %s75
      %s76 = sphi 0, %s73
      %s77 = sphi 0, %s76
      %s93 = sphi 0, %s77
      %s101 = sphi 0, %s103
      %s104 = sphi 0, %s101
      %s105 = sphi 0, %s104
      %s121 = sphi 0, %s105
      %s125 = sphi 0, %s125
      %s127 = sphi 0, %s125
      %s128 = sphi 0, %s127
      %s142 = sphi 0, %s128
      %s146 = sphi 0, %s146
      %s148 = sphi 0, %s146
      %s149 = sphi 0, %s148
      %s163 = sphi 0, %s149
      %s171 = sphi 0, %s173
      %s174 = sphi 0, %s171
      %s175 = sphi 0, %s174
      %s191 = sphi 0, %s175
    $region4: #{wan_self_attention.3} parent=1 // loop_header_branch
      %17 = sbr.rel (%p15) target = $region8
    $region5: #{wan_self_attention.3} parent=1 // loop_body
      %s19 = ssub.s32 %s14, 1
      %s20 = ssub.s32 %s14, 2
      %s30 = sadd.s32 1, %s23
      %p31 = scmp.ge.s32.totalorder %s30, 1
      %s32 = scalar_select %p31, 0, %s30
      %s33 = sadd.s32 1, %s22
      %s34 = scalar_select %p31, %s33, %s22
      %p35 = scmp.ge.s32.totalorder %s34, 1
      %s36 = scalar_select %p35, 0, %s34
      %s37 = sadd.s32 1, %s21
      %s38 = scalar_select %p35, %s37, %s21
      %p39 = scmp.ge.s32.totalorder %s38, 2
      %s40 = scalar_select %p39, 0, %s38
      %s41 = ssub.s32 %s21, %s40
      %s42 = ssub.s32 %s22, %s36
      %s43 = sor.u32 %s41, %s42
      %p44 = scmp.eq.s32.totalorder %s43, 0
      %s46 = sadd.s32 %s45, 1
      %s47 = scalar_select %p44, %s45, %s46
      %p50 = pneg %p44
      %p51 = scmp.eq.s32.totalorder %s14, 1
      %p52 = por %p50, %p51
      %p53 = scmp.ne.s32.totalorder %s45, %s48
      %p54 = scmp.eq.s32.totalorder %s14, 0
      %p55 = por %p53, %p54
      %p56 = scmp.ne.s32.totalorder %s45, %s48
      %p57 = scmp.eq.s32.totalorder %s19, 1
      %p58 = por %p56, %p57
      %p59 = scmp.ne.s32.totalorder %s48, %s49
      %p60 = scmp.eq.s32.totalorder %s19, 0
      %p61 = por %p59, %p60
      %p62 = scmp.ne.s32.totalorder %s48, %s49
      %p63 = scmp.eq.s32.totalorder %s20, 1
      %p64 = por %p62, %p63
      %p66 = scmp.ne.s32.totalorder %s49, %s65
      %p67 = scmp.eq.s32.totalorder %s20, 0
      %p68 = por %p66, %p67
      %s69 = ssub.s32 %s21, %s40
      %s70 = ssub.s32 %s23, %s32
      %s71 = sor.u32 %s69, %s70
      %p72 = scmp.eq.s32.totalorder %s71, 0
      %s74 = sadd.s32 %s73, 1
      %s75 = scalar_select %p72, %s73, %s74
      %p78 = pneg %p72
      %p79 = scmp.eq.s32.totalorder %s14, 1
      %p80 = por %p78, %p79
      %p81 = scmp.ne.s32.totalorder %s73, %s76
      %p82 = scmp.eq.s32.totalorder %s14, 0
      %p83 = por %p81, %p82
      %p84 = scmp.ne.s32.totalorder %s73, %s76
      %p85 = scmp.eq.s32.totalorder %s19, 1
      %p86 = por %p84, %p85
      %p87 = scmp.ne.s32.totalorder %s76, %s77
      %p88 = scmp.eq.s32.totalorder %s19, 0
      %p89 = por %p87, %p88
      %p90 = scmp.ne.s32.totalorder %s76, %s77
      %p91 = scmp.eq.s32.totalorder %s20, 1
      %p92 = por %p90, %p91
      %p94 = scmp.ne.s32.totalorder %s77, %s93
      %p95 = scmp.eq.s32.totalorder %s20, 0
      %p96 = por %p94, %p95
      %s97 = ssub.s32 %s21, %s40
      %s98 = ssub.s32 %s23, %s32
      %s99 = sor.u32 %s97, %s98
      %p100 = scmp.eq.s32.totalorder %s99, 0
      %s102 = sadd.s32 %s101, 1
      %s103 = scalar_select %p100, %s101, %s102
      %p106 = pneg %p100
      %p107 = scmp.eq.s32.totalorder %s14, 1
      %p108 = por %p106, %p107
      %p109 = scmp.ne.s32.totalorder %s101, %s104
      %p110 = scmp.eq.s32.totalorder %s14, 0
      %p111 = por %p109, %p110
      %p112 = scmp.ne.s32.totalorder %s101, %s104
      %p113 = scmp.eq.s32.totalorder %s19, 1
      %p114 = por %p112, %p113
      %p115 = scmp.ne.s32.totalorder %s104, %s105
      %p116 = scmp.eq.s32.totalorder %s19, 0
      %p117 = por %p115, %p116
      %p118 = scmp.ne.s32.totalorder %s104, %s105
      %p119 = scmp.eq.s32.totalorder %s20, 1
      %p120 = por %p118, %p119
      %p122 = scmp.ne.s32.totalorder %s105, %s121
      %p123 = scmp.eq.s32.totalorder %s20, 0
      %p124 = por %p122, %p123
      %s126 = sadd.s32 %s125, 1
      %p129 = scmp.eq.s32.totalorder %s14, 1
      %p130 = scmp.ne.s32.totalorder %s125, %s127
      %p131 = scmp.eq.s32.totalorder %s14, 0
      %p132 = por %p130, %p131
      %p133 = scmp.ne.s32.totalorder %s125, %s127
      %p134 = scmp.eq.s32.totalorder %s19, 1
      %p135 = por %p133, %p134
      %p136 = scmp.ne.s32.totalorder %s127, %s128
      %p137 = scmp.eq.s32.totalorder %s19, 0
      %p138 = por %p136, %p137
      %p139 = scmp.ne.s32.totalorder %s127, %s128
      %p140 = scmp.eq.s32.totalorder %s20, 1
      %p141 = por %p139, %p140
      %p143 = scmp.ne.s32.totalorder %s128, %s142
      %p144 = scmp.eq.s32.totalorder %s20, 0
      %p145 = por %p143, %p144
      %s147 = sadd.s32 %s146, 1
      %p150 = scmp.eq.s32.totalorder %s14, 1
      %p151 = scmp.ne.s32.totalorder %s146, %s148
      %p152 = scmp.eq.s32.totalorder %s14, 0
      %p153 = por %p151, %p152
      %p154 = scmp.ne.s32.totalorder %s146, %s148
      %p155 = scmp.eq.s32.totalorder %s19, 1
      %p156 = por %p154, %p155
      %p157 = scmp.ne.s32.totalorder %s148, %s149
      %p158 = scmp.eq.s32.totalorder %s19, 0
      %p159 = por %p157, %p158
      %p160 = scmp.ne.s32.totalorder %s148, %s149
      %p161 = scmp.eq.s32.totalorder %s20, 1
      %p162 = por %p160, %p161
      %p164 = scmp.ne.s32.totalorder %s149, %s163
      %p165 = scmp.eq.s32.totalorder %s20, 0
      %p166 = por %p164, %p165
      %s167 = ssub.s32 %s21, %s40
      %s168 = ssub.s32 %s22, %s36
      %s169 = sor.u32 %s167, %s168
      %p170 = scmp.eq.s32.totalorder %s169, 0
      %s172 = sadd.s32 %s171, 1
      %s173 = scalar_select %p170, %s171, %s172
      %p176 = pneg %p170
      %p177 = scmp.eq.s32.totalorder %s14, 1
      %p178 = por %p176, %p177
      %p179 = scmp.ne.s32.totalorder %s171, %s174
      %p180 = scmp.eq.s32.totalorder %s14, 0
      %p181 = por %p179, %p180
      %p182 = scmp.ne.s32.totalorder %s171, %s174
      %p183 = scmp.eq.s32.totalorder %s19, 1
      %p184 = por %p182, %p183
      %p185 = scmp.ne.s32.totalorder %s174, %s175
      %p186 = scmp.eq.s32.totalorder %s19, 0
      %p187 = por %p185, %p186
      %p188 = scmp.ne.s32.totalorder %s174, %s175
      %p189 = scmp.eq.s32.totalorder %s20, 1
      %p190 = por %p188, %p189
      %p192 = scmp.ne.s32.totalorder %s175, %s191
      %p193 = scmp.eq.s32.totalorder %s20, 0
      %p194 = por %p192, %p193
      %p195 = scmp.le.s32.totalorder 1, %s14
      %p196 = scmp.lt.s32.totalorder %s14, 3
      %p197 = pnand %p195, %p196
      %p198 = pneg %p197
      // Predicated region
      $region9: #{wan_self_attention.3} parent=5 // pred_check
        _
      $region10: #{wan_self_attention.3} parent=5 // pred_check_branch
        %200 = sbr.rel (%p197) target = $region12
      $region11: #{wan_self_attention.3} parent=5 // pred_region
        %s201 = ssub.s32 %s14, 1
        // Predicated region
        $region13: #{wan_self_attention.3} parent=11 // pred_check
          %p202 = pneg %p138
        $region14: #{wan_self_attention.3} parent=11 // pred_check_branch
          %204 = sbr.rel (%p202) target = $region16
        $region15: #{wan_self_attention.3} parent=11 // pred_region
          _
        $region16: #{wan_self_attention.3} parent=11 // pred_fallthru
          _
        // Predicated region
        $region17: #{wan_self_attention.3} parent=11 // pred_check
          %p205 = pneg %p159
        $region18: #{wan_self_attention.3} parent=11 // pred_check_branch
          %207 = sbr.rel (%p205) target = $region20
        $region19: #{wan_self_attention.3} parent=11 // pred_region
          _
        $region20: #{wan_self_attention.3} parent=11 // pred_fallthru
          _
      $region12: #{wan_self_attention.3} parent=5 // pred_fallthru
        _
      %p208 = scmp.lt.s32.totalorder %s14, 2
      // Predicated region
      $region21: #{wan_self_attention.3} parent=5 // pred_check
        %p209 = pneg %p208
      $region22: #{wan_self_attention.3} parent=5 // pred_check_branch
        %211 = sbr.rel (%p209) target = $region24
      $region23: #{wan_self_attention.3} parent=5 // pred_region
        // Predicated region
        $region25: #{wan_self_attention.3} parent=23 // pred_check
          %p212 = pneg %p55
        $region26: #{wan_self_attention.3} parent=23 // pred_check_branch
          %214 = sbr.rel (%p212) target = $region28
        $region27: #{wan_self_attention.3} parent=23 // pred_region
          %s215 = smul.u32 16, %s22
          %p216 = scmp.lt.s32.totalorder %s21, 1
          %s217 = scalar_select %p216, %s21, 1
          %p218 = scmp.lt.s32.totalorder %s215, 15
          %s219 = scalar_select %p218, %s215, 15
          %s220 = smul.addr %s219, 2
          %s221 = smul.addr %s217, 32
          %s222 = sadd.s32 %s220, %s221
          %s223 = smul.addr %s222, 4
          %s224 = scalar_lea.vmem %s0, %s223
          %s225 = smul.u32 16, %s22
        $region28: #{wan_self_attention.3} parent=23 // pred_fallthru
          _
        // Predicated region
        $region29: #{wan_self_attention.3} parent=23 // pred_check
          %p226 = pneg %p83
        $region30: #{wan_self_attention.3} parent=23 // pred_check_branch
          %228 = sbr.rel (%p226) target = $region32
        $region31: #{wan_self_attention.3} parent=23 // pred_region
          %s229 = smul.u32 16, %s23
          %p230 = scmp.lt.s32.totalorder %s21, 1
          %s231 = scalar_select %p230, %s21, 1
          %p232 = scmp.lt.s32.totalorder %s229, 15
          %s233 = scalar_select %p232, %s229, 15
          %s234 = smul.addr %s233, 2
          %s235 = smul.addr %s231, 32
          %s236 = sadd.s32 %s234, %s235
          %s237 = smul.addr %s236, 4
          %s238 = scalar_lea.vmem %s1, %s237
          %s239 = smul.u32 16, %s23
        $region32: #{wan_self_attention.3} parent=23 // pred_fallthru
          _
        // Predicated region
        $region33: #{wan_self_attention.3} parent=23 // pred_check
          %p240 = pneg %p111
        $region34: #{wan_self_attention.3} parent=23 // pred_check_branch
          %242 = sbr.rel (%p240) target = $region36
        $region35: #{wan_self_attention.3} parent=23 // pred_region
          %s243 = smul.u32 16, %s23
          %p244 = scmp.lt.s32.totalorder %s21, 1
          %s245 = scalar_select %p244, %s21, 1
          %p246 = scmp.lt.s32.totalorder %s243, 15
          %s247 = scalar_select %p246, %s243, 15
          %s248 = smul.addr %s247, 2
          %s249 = smul.addr %s245, 32
          %s250 = sadd.s32 %s248, %s249
          %s251 = smul.addr %s250, 4
          %s252 = scalar_lea.vmem %s2, %s251
          %s253 = smul.u32 16, %s23
        $region36: #{wan_self_attention.3} parent=23 // pred_fallthru
          _
      $region24: #{wan_self_attention.3} parent=5 // pred_fallthru
        _
      %p254 = scmp.le.s32.totalorder 1, %s14
      %p255 = scmp.lt.s32.totalorder %s14, 3
      %p256 = pnand %p254, %p255
      %p257 = pneg %p256
      // Predicated region
      $region37: #{wan_self_attention.3} parent=5 // pred_check
        _
      $region38: #{wan_self_attention.3} parent=5 // pred_check_branch
        %259 = sbr.rel (%p256) target = $region40
      $region39: #{wan_self_attention.3} parent=5 // pred_region
        %s260 = ssub.s32 %s14, 1
        %s261 = smul.u32 16, %s25
        %p262 = scmp.lt.s32.totalorder %s24, 1
        %s263 = scalar_select %p262, %s24, 1
        %p264 = scmp.lt.s32.totalorder %s261, 15
        %s265 = scalar_select %p264, %s261, 15
        %s266 = smul.addr %s265, 2
        %s267 = smul.addr %s263, 32
        %s268 = sadd.s32 %s266, %s267
        %s269 = smul.addr %s268, 4
        %s270 = scalar_lea.vmem %s0, %s269
        %p271 = pneg %p61
        %p272 = pneg %p58
        %s273 = smul.u32 16, %s26
        %p274 = scmp.lt.s32.totalorder %s24, 1
        %s275 = scalar_select %p274, %s24, 1
        %p276 = scmp.lt.s32.totalorder %s273, 15
        %s277 = scalar_select %p276, %s273, 15
        %s278 = smul.addr %s277, 2
        %s279 = smul.addr %s275, 32
        %s280 = sadd.s32 %s278, %s279
        %s281 = smul.addr %s280, 4
        %s282 = scalar_lea.vmem %s1, %s281
        %p283 = pneg %p89
        %p284 = pneg %p86
        %s285 = smul.u32 16, %s26
        %p286 = scmp.lt.s32.totalorder %s24, 1
        %s287 = scalar_select %p286, %s24, 1
        %p288 = scmp.lt.s32.totalorder %s285, 15
        %s289 = scalar_select %p288, %s285, 15
        %s290 = smul.addr %s289, 2
        %s291 = smul.addr %s287, 32
        %s292 = sadd.s32 %s290, %s291
        %s293 = smul.addr %s292, 4
        %s294 = scalar_lea.vmem %s2, %s293
        %p295 = pneg %p117
        %p296 = pneg %p114
        %p297 = pneg %p138
        %p298 = pneg %p135
        %p299 = pneg %p159
        %p300 = pneg %p156
        %p301 = pneg %p187
        %p302 = pneg %p184
        %s303 = sand.u32 %s174, 1
        %s304 = scalar_lea.sflag [#allocation6], %s303
        %s305 = sand.u32 %s174, 1
        %s306 = smul.addr %s305, 128
        %s307 = scalar_lea.vmem [#allocation5], %s306
        %s308 = smul.u32 16, %s25
        %p309 = scmp.lt.s32.totalorder %s24, 1
        %s310 = scalar_select %p309, %s24, 1
        %p311 = scmp.lt.s32.totalorder %s308, 15
        %s312 = scalar_select %p311, %s308, 15
        %s313 = smul.addr %s312, 2
        %s314 = smul.addr %s310, 32
        %s315 = sadd.s32 %s313, %s314
        %s316 = smul.addr %s315, 4
        %s317 = scalar_lea.vmem %s0, %s316
        %s318 = smul.u32 16, %s25
        %s319 = smul.u32 16, %s26
        %p320 = scmp.lt.s32.totalorder %s24, 1
        %s321 = scalar_select %p320, %s24, 1
        %p322 = scmp.lt.s32.totalorder %s319, 15
        %s323 = scalar_select %p322, %s319, 15
        %s324 = smul.addr %s323, 2
        %s325 = smul.addr %s321, 32
        %s326 = sadd.s32 %s324, %s325
        %s327 = smul.addr %s326, 4
        %s328 = scalar_lea.vmem %s1, %s327
        %s329 = smul.u32 16, %s26
        %s330 = smul.u32 16, %s26
        %p331 = scmp.lt.s32.totalorder %s24, 1
        %s332 = scalar_select %p331, %s24, 1
        %p333 = scmp.lt.s32.totalorder %s330, 15
        %s334 = scalar_select %p333, %s330, 15
        %s335 = smul.addr %s334, 2
        %s336 = smul.addr %s332, 32
        %s337 = sadd.s32 %s335, %s336
        %s338 = smul.addr %s337, 4
        %s339 = scalar_lea.vmem %s2, %s338
        %s340 = smul.u32 16, %s26
        %s341 = smul.u32 16, %s25
        %p343 = scmp.eq.s32.totalorder %s26, 0
        // Predicated region
        $region41: #{wan_self_attention.3} parent=39 // pred_check
          %p344 = pneg %p343
        $region42: #{wan_self_attention.3} parent=39 // pred_check_branch
          %346 = sbr.rel (%p344) target = $region44
        $region43: #{wan_self_attention.3} parent=39 // pred_region
          %vm347 = vcmask 7168
          %348 = vst.msk [vmem:[#allocation2] sm:$0xff] %vm347, -inf
          %349 = vst.msk [vmem:[#allocation2 + $0x8] sm:$0xff] %vm347, -inf
          %350 = vst.msk [vmem:[#allocation2 + $0x10] sm:$0xff] %vm347, -inf
          %351 = vst.msk [vmem:[#allocation2 + $0x18] sm:$0xff] %vm347, -inf
          %352 = vst.msk [vmem:[#allocation2 + $0x20] sm:$0xff] %vm347, -inf
          %353 = vst.msk [vmem:[#allocation2 + $0x28] sm:$0xff] %vm347, -inf
          %354 = vst.msk [vmem:[#allocation2 + $0x30] sm:$0xff] %vm347, -inf
          %355 = vst.msk [vmem:[#allocation2 + $0x38] sm:$0xff] %vm347, -inf
          %356 = vst.msk [vmem:[#allocation2 + $0x40] sm:$0xff] %vm347, -inf
          %357 = vst.msk [vmem:[#allocation2 + $0x48] sm:$0xff] %vm347, -inf
          %358 = vst.msk [vmem:[#allocation2 + $0x50] sm:$0xff] %vm347, -inf
          %359 = vst.msk [vmem:[#allocation2 + $0x58] sm:$0xff] %vm347, -inf
          %360 = vst.msk [vmem:[#allocation2 + $0x60] sm:$0xff] %vm347, -inf
          %361 = vst.msk [vmem:[#allocation2 + $0x68] sm:$0xff] %vm347, -inf
          %362 = vst.msk [vmem:[#allocation2 + $0x70] sm:$0xff] %vm347, -inf
          %363 = vst.msk [vmem:[#allocation2 + $0x78] sm:$0xff] %vm347, -inf
          %364 = vst.msk [vmem:[#allocation2 + $0x80] sm:$0xff] %vm347, -inf
          %365 = vst.msk [vmem:[#allocation2 + $0x88] sm:$0xff] %vm347, -inf
          %366 = vst.msk [vmem:[#allocation2 + $0x90] sm:$0xff] %vm347, -inf
          %367 = vst.msk [vmem:[#allocation2 + $0x98] sm:$0xff] %vm347, -inf
          %368 = vst.msk [vmem:[#allocation2 + $0xa0] sm:$0xff] %vm347, -inf
          %369 = vst.msk [vmem:[#allocation2 + $0xa8] sm:$0xff] %vm347, -inf
          %370 = vst.msk [vmem:[#allocation2 + $0xb0] sm:$0xff] %vm347, -inf
          %371 = vst.msk [vmem:[#allocation2 + $0xb8] sm:$0xff] %vm347, -inf
          %372 = vst.msk [vmem:[#allocation2 + $0xc0] sm:$0xff] %vm347, -inf
          %373 = vst.msk [vmem:[#allocation2 + $0xc8] sm:$0xff] %vm347, -inf
          %374 = vst.msk [vmem:[#allocation2 + $0xd0] sm:$0xff] %vm347, -inf
          %375 = vst.msk [vmem:[#allocation2 + $0xd8] sm:$0xff] %vm347, -inf
          %376 = vst.msk [vmem:[#allocation2 + $0xe0] sm:$0xff] %vm347, -inf
          %377 = vst.msk [vmem:[#allocation2 + $0xe8] sm:$0xff] %vm347, -inf
          %378 = vst.msk [vmem:[#allocation2 + $0xf0] sm:$0xff] %vm347, -inf
          %379 = vst.msk [vmem:[#allocation2 + $0xf8] sm:$0xff] %vm347, -inf
          %380 = vst.msk [vmem:[#allocation3] sm:$0xff] %vm347, 0.0
          %381 = vst.msk [vmem:[#allocation3 + $0x8] sm:$0xff] %vm347, 0.0
          %382 = vst.msk [vmem:[#allocation3 + $0x10] sm:$0xff] %vm347, 0.0
          %383 = vst.msk [vmem:[#allocation3 + $0x18] sm:$0xff] %vm347, 0.0
          %384 = vst.msk [vmem:[#allocation3 + $0x20] sm:$0xff] %vm347, 0.0
          %385 = vst.msk [vmem:[#allocation3 + $0x28] sm:$0xff] %vm347, 0.0
          %386 = vst.msk [vmem:[#allocation3 + $0x30] sm:$0xff] %vm347, 0.0
          %387 = vst.msk [vmem:[#allocation3 + $0x38] sm:$0xff] %vm347, 0.0
          %388 = vst.msk [vmem:[#allocation3 + $0x40] sm:$0xff] %vm347, 0.0
          %389 = vst.msk [vmem:[#allocation3 + $0x48] sm:$0xff] %vm347, 0.0
          %390 = vst.msk [vmem:[#allocation3 + $0x50] sm:$0xff] %vm347, 0.0
          %391 = vst.msk [vmem:[#allocation3 + $0x58] sm:$0xff] %vm347, 0.0
          %392 = vst.msk [vmem:[#allocation3 + $0x60] sm:$0xff] %vm347, 0.0
          %393 = vst.msk [vmem:[#allocation3 + $0x68] sm:$0xff] %vm347, 0.0
          %394 = vst.msk [vmem:[#allocation3 + $0x70] sm:$0xff] %vm347, 0.0
          %395 = vst.msk [vmem:[#allocation3 + $0x78] sm:$0xff] %vm347, 0.0
          %396 = vst.msk [vmem:[#allocation3 + $0x80] sm:$0xff] %vm347, 0.0
          %397 = vst.msk [vmem:[#allocation3 + $0x88] sm:$0xff] %vm347, 0.0
          %398 = vst.msk [vmem:[#allocation3 + $0x90] sm:$0xff] %vm347, 0.0
          %399 = vst.msk [vmem:[#allocation3 + $0x98] sm:$0xff] %vm347, 0.0
          %400 = vst.msk [vmem:[#allocation3 + $0xa0] sm:$0xff] %vm347, 0.0
          %401 = vst.msk [vmem:[#allocation3 + $0xa8] sm:$0xff] %vm347, 0.0
          %402 = vst.msk [vmem:[#allocation3 + $0xb0] sm:$0xff] %vm347, 0.0
          %403 = vst.msk [vmem:[#allocation3 + $0xb8] sm:$0xff] %vm347, 0.0
          %404 = vst.msk [vmem:[#allocation3 + $0xc0] sm:$0xff] %vm347, 0.0
          %405 = vst.msk [vmem:[#allocation3 + $0xc8] sm:$0xff] %vm347, 0.0
          %406 = vst.msk [vmem:[#allocation3 + $0xd0] sm:$0xff] %vm347, 0.0
          %407 = vst.msk [vmem:[#allocation3 + $0xd8] sm:$0xff] %vm347, 0.0
          %408 = vst.msk [vmem:[#allocation3 + $0xe0] sm:$0xff] %vm347, 0.0
          %409 = vst.msk [vmem:[#allocation3 + $0xe8] sm:$0xff] %vm347, 0.0
          %410 = vst.msk [vmem:[#allocation3 + $0xf0] sm:$0xff] %vm347, 0.0
          %411 = vst.msk [vmem:[#allocation3 + $0xf8] sm:$0xff] %vm347, 0.0
          %412 = vst [vmem:[#allocation4] sm:$0xff] 0.0
          %413 = vst [vmem:[#allocation4 + $0x8] sm:$0xff] 0.0
          %414 = vst [vmem:[#allocation4 + $0x10] sm:$0xff] 0.0
          %415 = vst [vmem:[#allocation4 + $0x18] sm:$0xff] 0.0
          %416 = vst [vmem:[#allocation4 + $0x20] sm:$0xff] 0.0
          %417 = vst [vmem:[#allocation4 + $0x28] sm:$0xff] 0.0
          %418 = vst [vmem:[#allocation4 + $0x30] sm:$0xff] 0.0
          %419 = vst [vmem:[#allocation4 + $0x38] sm:$0xff] 0.0
          %420 = vst [vmem:[#allocation4 + $0x40] sm:$0xff] 0.0
          %421 = vst [vmem:[#allocation4 + $0x48] sm:$0xff] 0.0
          %422 = vst [vmem:[#allocation4 + $0x50] sm:$0xff] 0.0
          %423 = vst [vmem:[#allocation4 + $0x58] sm:$0xff] 0.0
          %424 = vst [vmem:[#allocation4 + $0x60] sm:$0xff] 0.0
          %425 = vst [vmem:[#allocation4 + $0x68] sm:$0xff] 0.0
          %426 = vst [vmem:[#allocation4 + $0x70] sm:$0xff] 0.0
          %427 = vst [vmem:[#allocation4 + $0x78] sm:$0xff] 0.0
          %428 = vst [vmem:[#allocation4 + $0x80] sm:$0xff] 0.0
          %429 = vst [vmem:[#allocation4 + $0x88] sm:$0xff] 0.0
          %430 = vst [vmem:[#allocation4 + $0x90] sm:$0xff] 0.0
          %431 = vst [vmem:[#allocation4 + $0x98] sm:$0xff] 0.0
          %432 = vst [vmem:[#allocation4 + $0xa0] sm:$0xff] 0.0
          %433 = vst [vmem:[#allocation4 + $0xa8] sm:$0xff] 0.0
          %434 = vst [vmem:[#allocation4 + $0xb0] sm:$0xff] 0.0
          %435 = vst [vmem:[#allocation4 + $0xb8] sm:$0xff] 0.0
          %436 = vst [vmem:[#allocation4 + $0xc0] sm:$0xff] 0.0
          %437 = vst [vmem:[#allocation4 + $0xc8] sm:$0xff] 0.0
          %438 = vst [vmem:[#allocation4 + $0xd0] sm:$0xff] 0.0
          %439 = vst [vmem:[#allocation4 + $0xd8] sm:$0xff] 0.0
          %440 = vst [vmem:[#allocation4 + $0xe0] sm:$0xff] 0.0
          %441 = vst [vmem:[#allocation4 + $0xe8] sm:$0xff] 0.0
          %442 = vst [vmem:[#allocation4 + $0xf0] sm:$0xff] 0.0
          %443 = vst [vmem:[#allocation4 + $0xf8] sm:$0xff] 0.0
        $region44: #{wan_self_attention.3} parent=39 // pred_fallthru
          _
        %v444 = vld [vmem:[%s317] sm:$0xff]
        %v445 = vld [vmem:[%s317 + $0x8] sm:$0xff]
        %v446 = vld [vmem:[%s317 + $0x10] sm:$0xff]
        %v447 = vld [vmem:[%s317 + $0x18] sm:$0xff]
        %v448 = vld [vmem:[%s317 + $0x20] sm:$0xff]
        %v449 = vld [vmem:[%s317 + $0x28] sm:$0xff]
        %v450 = vld [vmem:[%s317 + $0x30] sm:$0xff]
        %v451 = vld [vmem:[%s317 + $0x38] sm:$0xff]
        %v452 = vld [vmem:[%s317 + $0x40] sm:$0xff]
        %v453 = vld [vmem:[%s317 + $0x48] sm:$0xff]
        %v454 = vld [vmem:[%s317 + $0x50] sm:$0xff]
        %v455 = vld [vmem:[%s317 + $0x58] sm:$0xff]
        %v456 = vld [vmem:[%s317 + $0x60] sm:$0xff]
        %v457 = vld [vmem:[%s317 + $0x68] sm:$0xff]
        %v458 = vld [vmem:[%s317 + $0x70] sm:$0xff]
        %v459 = vld [vmem:[%s317 + $0x78] sm:$0xff]
        %v460 = vld [vmem:[%s328] sm:$0xff]
        %v461 = vld [vmem:[%s328 + $0x8] sm:$0xff]
        %v462 = vld [vmem:[%s328 + $0x10] sm:$0xff]
        %v463 = vld [vmem:[%s328 + $0x18] sm:$0xff]
        %v464 = vld [vmem:[%s328 + $0x20] sm:$0xff]
        %v465 = vld [vmem:[%s328 + $0x28] sm:$0xff]
        %v466 = vld [vmem:[%s328 + $0x30] sm:$0xff]
        %v467 = vld [vmem:[%s328 + $0x38] sm:$0xff]
        %v468 = vld [vmem:[%s328 + $0x40] sm:$0xff]
        %v469 = vld [vmem:[%s328 + $0x48] sm:$0xff]
        %v470 = vld [vmem:[%s328 + $0x50] sm:$0xff]
        %v471 = vld [vmem:[%s328 + $0x58] sm:$0xff]
        %v472 = vld [vmem:[%s328 + $0x60] sm:$0xff]
        %v473 = vld [vmem:[%s328 + $0x68] sm:$0xff]
        %v474 = vld [vmem:[%s328 + $0x70] sm:$0xff]
        %v475 = vld [vmem:[%s328 + $0x78] sm:$0xff]
        %v476 = vld [vmem:[%s339] sm:$0xff]
        %v477 = vld [vmem:[%s339 + $0x8] sm:$0xff]
        %v478 = vld [vmem:[%s339 + $0x10] sm:$0xff]
        %v479 = vld [vmem:[%s339 + $0x18] sm:$0xff]
        %v480 = vld [vmem:[%s339 + $0x20] sm:$0xff]
        %v481 = vld [vmem:[%s339 + $0x28] sm:$0xff]
        %v482 = vld [vmem:[%s339 + $0x30] sm:$0xff]
        %v483 = vld [vmem:[%s339 + $0x38] sm:$0xff]
        %v484 = vld [vmem:[%s339 + $0x40] sm:$0xff]
        %v485 = vld [vmem:[%s339 + $0x48] sm:$0xff]
        %v486 = vld [vmem:[%s339 + $0x50] sm:$0xff]
        %v487 = vld [vmem:[%s339 + $0x58] sm:$0xff]
        %v488 = vld [vmem:[%s339 + $0x60] sm:$0xff]
        %v489 = vld [vmem:[%s339 + $0x68] sm:$0xff]
        %v490 = vld [vmem:[%s339 + $0x70] sm:$0xff]
        %v491 = vld [vmem:[%s339 + $0x78] sm:$0xff]
        %v508 = vunpack.c.l.b16 %v444
        %v509 = vunpack.c.l.b16 %v445
        %v510 = vunpack.c.l.b16 %v446
        %v511 = vunpack.c.l.b16 %v447
        %v512 = vunpack.c.l.b16 %v448
        %v513 = vunpack.c.l.b16 %v449
        %v514 = vunpack.c.l.b16 %v450
        %v515 = vunpack.c.l.b16 %v451
        %v516 = vunpack.c.l.b16 %v452
        %v517 = vunpack.c.l.b16 %v453
        %v518 = vunpack.c.l.b16 %v454
        %v519 = vunpack.c.l.b16 %v455
        %v520 = vunpack.c.l.b16 %v456
        %v521 = vunpack.c.l.b16 %v457
        %v522 = vunpack.c.l.b16 %v458
        %v523 = vunpack.c.l.b16 %v459
        %v524 = vpack.c.b16 %v509, %v508
        %v525 = vpack.c.b16 %v511, %v510
        %v526 = vpack.c.b16 %v513, %v512
        %v527 = vpack.c.b16 %v515, %v514
        %v528 = vpack.c.b16 %v517, %v516
        %v529 = vpack.c.b16 %v519, %v518
        %v530 = vpack.c.b16 %v521, %v520
        %v531 = vpack.c.b16 %v523, %v522
        %v556 = vunpack.c.l.b16 %v460
        %v557 = vunpack.c.l.b16 %v461
        %v558 = vunpack.c.l.b16 %v462
        %v559 = vunpack.c.l.b16 %v463
        %v560 = vunpack.c.l.b16 %v464
        %v561 = vunpack.c.l.b16 %v465
        %v562 = vunpack.c.l.b16 %v466
        %v563 = vunpack.c.l.b16 %v467
        %v564 = vunpack.c.l.b16 %v468
        %v565 = vunpack.c.l.b16 %v469
        %v566 = vunpack.c.l.b16 %v470
        %v567 = vunpack.c.l.b16 %v471
        %v568 = vunpack.c.l.b16 %v472
        %v569 = vunpack.c.l.b16 %v473
        %v570 = vunpack.c.l.b16 %v474
        %v571 = vunpack.c.l.b16 %v475
        %v572 = vpack.c.b16 %v557, %v556
        %v573 = vpack.c.b16 %v559, %v558
        %v574 = vpack.c.b16 %v561, %v560
        %v575 = vpack.c.b16 %v563, %v562
        %v576 = vpack.c.b16 %v565, %v564
        %v577 = vpack.c.b16 %v567, %v566
        %v578 = vpack.c.b16 %v569, %v568
        %v579 = vpack.c.b16 %v571, %v570
        %588 = vmatprep.subr.bf16.mxu0 0
        %589 = vmatpush1.bf16.xpose.msra.mxu0 %v572
        %590 = vmatprep.subr.bf16.mxu0 0
        %591 = vmatpush1.bf16.xpose.msra.mxu0 %v573
        %592 = vmatprep.subr.bf16.mxu0 0
        %593 = vmatpush1.bf16.xpose.msra.mxu0 %v574
        %594 = vmatprep.subr.bf16.mxu0 0
        %595 = vmatpush1.bf16.xpose.msra.mxu0 %v575
        %596 = vmatprep.subr.bf16.mxu0 0
        %597 = vmatpush1.bf16.xpose.msra.mxu0 %v576
        %598 = vmatprep.subr.bf16.mxu0 0
        %599 = vmatpush1.bf16.xpose.msra.mxu0 %v577
        %600 = vmatprep.subr.bf16.mxu0 0
        %601 = vmatpush1.bf16.xpose.msra.mxu0 %v578
        %602 = vmatprep.subr.bf16.mxu0 0
        %603 = vmatpush1.bf16.xpose.msra.mxu0 %v579
        %604 = vmatprep.subr.bf16.mxu0 0
        %605 = vmatpush1.bf16.xpose.msra.mxu0 0
        %606 = vmatprep.subr.bf16.mxu0 0
        %607 = vmatpush1.bf16.xpose.msra.mxu0 0
        %608 = vmatprep.subr.bf16.mxu0 0
        %609 = vmatpush1.bf16.xpose.msra.mxu0 0
        %610 = vmatprep.subr.bf16.mxu0 0
        %611 = vmatpush1.bf16.xpose.msra.mxu0 0
        %612 = vmatprep.subr.bf16.mxu0 0
        %613 = vmatpush1.bf16.xpose.msra.mxu0 0
        %614 = vmatprep.subr.bf16.mxu0 0
        %615 = vmatpush1.bf16.xpose.msra.mxu0 0
        %616 = vmatprep.subr.bf16.mxu0 0
        %617 = vmatpush1.bf16.xpose.msra.mxu0 0
        %618 = vmatprep.subr.bf16.mxu0 0
        %619 = vmatpush1.bf16.xpose.msra.mxu0 0
        %620 = vmatprep.mubr.bf16.mxu0 0
        %621 = vmatmul.mubr.bf16.gmra.mrb[0].mxu0 %v524
        %v622 = vpop.f32.mrb[0].mxu0
        %v623 = vadd.f32 0.0, %v622
        %v624 = vpop.f32.mrb[0].mxu0
        %v625 = vpop.f32.mrb[0].mxu0
        %v626 = vadd.f32 0.0, %v625
        %v627 = vpop.f32.mrb[0].mxu0
        %628 = vmatprep.mubr.bf16.mxu0 0
        %629 = vmatmul.mubr.bf16.gmra.mrb[0].mxu0 %v525
        %v630 = vpop.f32.mrb[0].mxu0
        %v631 = vadd.f32 0.0, %v630
        %v632 = vpop.f32.mrb[0].mxu0
        %v633 = vpop.f32.mrb[0].mxu0
        %v634 = vadd.f32 0.0, %v633
        %v635 = vpop.f32.mrb[0].mxu0
        %636 = vmatprep.mubr.bf16.mxu0 0
        %637 = vmatmul.mubr.bf16.gmra.mrb[0].mxu0 %v526
        %v638 = vpop.f32.mrb[0].mxu0
        %v639 = vadd.f32 0.0, %v638
        %v640 = vpop.f32.mrb[0].mxu0
        %v641 = vpop.f32.mrb[0].mxu0
        %v642 = vadd.f32 0.0, %v641
        %v643 = vpop.f32.mrb[0].mxu0
        %644 = vmatprep.mubr.bf16.mxu0 0
        %645 = vmatmul.mubr.bf16.gmra.mrb[0].mxu0 %v527
        %v646 = vpop.f32.mrb[0].mxu0
        %v647 = vadd.f32 0.0, %v646
        %v648 = vpop.f32.mrb[0].mxu0
        %v649 = vpop.f32.mrb[0].mxu0
        %v650 = vadd.f32 0.0, %v649
        %v651 = vpop.f32.mrb[0].mxu0
        %652 = vmatprep.mubr.bf16.mxu0 0
        %653 = vmatmul.mubr.bf16.gmra.mrb[0].mxu0 %v528
        %v654 = vpop.f32.mrb[0].mxu0
        %v655 = vadd.f32 0.0, %v654
        %v656 = vpop.f32.mrb[0].mxu0
        %v657 = vpop.f32.mrb[0].mxu0
        %v658 = vadd.f32 0.0, %v657
        %v659 = vpop.f32.mrb[0].mxu0
        %660 = vmatprep.mubr.bf16.mxu0 0
        %661 = vmatmul.mubr.bf16.gmra.mrb[0].mxu0 %v529
        %v662 = vpop.f32.mrb[0].mxu0
        %v663 = vadd.f32 0.0, %v662
        %v664 = vpop.f32.mrb[0].mxu0
        %v665 = vpop.f32.mrb[0].mxu0
        %v666 = vadd.f32 0.0, %v665
        %v667 = vpop.f32.mrb[0].mxu0
        %668 = vmatprep.mubr.bf16.mxu0 0
        %669 = vmatmul.mubr.bf16.gmra.mrb[0].mxu0 %v530
        %v670 = vpop.f32.mrb[0].mxu0
        %v671 = vadd.f32 0.0, %v670
        %v672 = vpop.f32.mrb[0].mxu0
        %v673 = vpop.f32.mrb[0].mxu0
        %v674 = vadd.f32 0.0, %v673
        %v675 = vpop.f32.mrb[0].mxu0
        %676 = vmatprep.mubr.bf16.mxu0 0
        %677 = vmatmul.mubr.bf16.gmra.mrb[0].mxu0 %v531
        %v678 = vpop.f32.mrb[0].mxu0
        %v679 = vadd.f32 0.0, %v678
        %v680 = vpop.f32.mrb[0].mxu0
        %v681 = vpop.f32.mrb[0].mxu0
        %v682 = vadd.f32 0.0, %v681
        %v683 = vpop.f32.mrb[0].mxu0
        %684 = vdwg.mxu0
        %v685 = vld [vmem:[#allocation2] sm:$0xff]
        %v686 = vld [vmem:[#allocation2 + $0x8] sm:$0xff]
        %v687 = vld [vmem:[#allocation2 + $0x10] sm:$0xff]
        %v688 = vld [vmem:[#allocation2 + $0x18] sm:$0xff]
        %v689 = vld [vmem:[#allocation2 + $0x20] sm:$0xff]
        %v690 = vld [vmem:[#allocation2 + $0x28] sm:$0xff]
        %v691 = vld [vmem:[#allocation2 + $0x30] sm:$0xff]
        %v692 = vld [vmem:[#allocation2 + $0x38] sm:$0xff]
        %v693 = vld [vmem:[#allocation2 + $0x40] sm:$0xff]
        %v694 = vld [vmem:[#allocation2 + $0x48] sm:$0xff]
        %v695 = vld [vmem:[#allocation2 + $0x50] sm:$0xff]
        %v696 = vld [vmem:[#allocation2 + $0x58] sm:$0xff]
        %v697 = vld [vmem:[#allocation2 + $0x60] sm:$0xff]
        %v698 = vld [vmem:[#allocation2 + $0x68] sm:$0xff]
        %v699 = vld [vmem:[#allocation2 + $0x70] sm:$0xff]
        %v700 = vld [vmem:[#allocation2 + $0x78] sm:$0xff]
        %701 = vmax.xlane.f32.xlu0 %v623
        %v702 = vpop.xlane.xlu0 %701
        %703 = vmax.xlane.f32.xlu0 %v626
        %v704 = vpop.xlane.xlu0 %703
        %705 = vmax.xlane.f32.xlu0 %v631
        %v706 = vpop.xlane.xlu0 %705
        %707 = vmax.xlane.f32.xlu0 %v634
        %v708 = vpop.xlane.xlu0 %707
        %709 = vmax.xlane.f32.xlu0 %v639
        %v710 = vpop.xlane.xlu0 %709
        %711 = vmax.xlane.f32.xlu0 %v642
        %v712 = vpop.xlane.xlu0 %711
        %713 = vmax.xlane.f32.xlu0 %v647
        %v714 = vpop.xlane.xlu0 %713
        %715 = vmax.xlane.f32.xlu0 %v650
        %v716 = vpop.xlane.xlu0 %715
        %717 = vmax.xlane.f32.xlu0 %v655
        %v718 = vpop.xlane.xlu0 %717
        %719 = vmax.xlane.f32.xlu0 %v658
        %v720 = vpop.xlane.xlu0 %719
        %721 = vmax.xlane.f32.xlu0 %v663
        %v722 = vpop.xlane.xlu0 %721
        %723 = vmax.xlane.f32.xlu0 %v666
        %v724 = vpop.xlane.xlu0 %723
        %725 = vmax.xlane.f32.xlu0 %v671
        %v726 = vpop.xlane.xlu0 %725
        %727 = vmax.xlane.f32.xlu0 %v674
        %v728 = vpop.xlane.xlu0 %727
        %729 = vmax.xlane.f32.xlu0 %v679
        %v730 = vpop.xlane.xlu0 %729
        %731 = vmax.xlane.f32.xlu0 %v682
        %v732 = vpop.xlane.xlu0 %731
        %v733 = vmax.f32 %v685, %v702
        %v734 = vmax.f32 %v686, %v704
        %v735 = vmax.f32 %v687, %v706
        %v736 = vmax.f32 %v688, %v708
        %v737 = vmax.f32 %v689, %v710
        %v738 = vmax.f32 %v690, %v712
        %v739 = vmax.f32 %v691, %v714
        %v740 = vmax.f32 %v692, %v716
        %v741 = vmax.f32 %v693, %v718
        %v742 = vmax.f32 %v694, %v720
        %v743 = vmax.f32 %v695, %v722
        %v744 = vmax.f32 %v696, %v724
        %v745 = vmax.f32 %v697, %v726
        %v746 = vmax.f32 %v698, %v728
        %v747 = vmax.f32 %v699, %v730
        %v748 = vmax.f32 %v700, %v732
        %v749 = vsub.f32 %v685, %v733
        %v750 = vsub.f32 %v686, %v734
        %v751 = vsub.f32 %v687, %v735
        %v752 = vsub.f32 %v688, %v736
        %v753 = vsub.f32 %v689, %v737
        %v754 = vsub.f32 %v690, %v738
        %v755 = vsub.f32 %v691, %v739
        %v756 = vsub.f32 %v692, %v740
        %v757 = vsub.f32 %v693, %v741
        %v758 = vsub.f32 %v694, %v742
        %v759 = vsub.f32 %v695, %v743
        %v760 = vsub.f32 %v696, %v744
        %v761 = vsub.f32 %v697, %v745
        %v762 = vsub.f32 %v698, %v746
        %v763 = vsub.f32 %v699, %v747
        %v764 = vsub.f32 %v700, %v748
        %v765 = vmul.f32 %v749, 1.442695
        %v766 = vpow.pop %v765
        %v767 = vmul.f32 %v750, 1.442695
        %v768 = vpow.pop %v767
        %v769 = vmul.f32 %v751, 1.442695
        %v770 = vpow.pop %v769
        %v771 = vmul.f32 %v752, 1.442695
        %v772 = vpow.pop %v771
        %v773 = vmul.f32 %v753, 1.442695
        %v774 = vpow.pop %v773
        %v775 = vmul.f32 %v754, 1.442695
        %v776 = vpow.pop %v775
        %v777 = vmul.f32 %v755, 1.442695
        %v778 = vpow.pop %v777
        %v779 = vmul.f32 %v756, 1.442695
        %v780 = vpow.pop %v779
        %v781 = vmul.f32 %v757, 1.442695
        %v782 = vpow.pop %v781
        %v783 = vmul.f32 %v758, 1.442695
        %v784 = vpow.pop %v783
        %v785 = vmul.f32 %v759, 1.442695
        %v786 = vpow.pop %v785
        %v787 = vmul.f32 %v760, 1.442695
        %v788 = vpow.pop %v787
        %v789 = vmul.f32 %v761, 1.442695
        %v790 = vpow.pop %v789
        %v791 = vmul.f32 %v762, 1.442695
        %v792 = vpow.pop %v791
        %v793 = vmul.f32 %v763, 1.442695
        %v794 = vpow.pop %v793
        %v795 = vmul.f32 %v764, 1.442695
        %v796 = vpow.pop %v795
        %798 = vset.pattern.permute.xlu0 0
        %799 = vperm.xlu0 %798, %v733
        %v800 = vpop.permute.xlu0 %799
        %803 = vset.pattern.permute.xlu0 0
        %804 = vperm.xlu0 %803, %v734
        %v805 = vpop.permute.xlu0 %804
        %808 = vset.pattern.permute.xlu0 0
        %809 = vperm.xlu0 %808, %v735
        %v810 = vpop.permute.xlu0 %809
        %813 = vset.pattern.permute.xlu0 0
        %814 = vperm.xlu0 %813, %v736
        %v815 = vpop.permute.xlu0 %814
        %818 = vset.pattern.permute.xlu0 0
        %819 = vperm.xlu0 %818, %v737
        %v820 = vpop.permute.xlu0 %819
        %823 = vset.pattern.permute.xlu0 0
        %824 = vperm.xlu0 %823, %v738
        %v825 = vpop.permute.xlu0 %824
        %828 = vset.pattern.permute.xlu0 0
        %829 = vperm.xlu0 %828, %v739
        %v830 = vpop.permute.xlu0 %829
        %833 = vset.pattern.permute.xlu0 0
        %834 = vperm.xlu0 %833, %v740
        %v835 = vpop.permute.xlu0 %834
        %838 = vset.pattern.permute.xlu0 0
        %839 = vperm.xlu0 %838, %v741
        %v840 = vpop.permute.xlu0 %839
        %843 = vset.pattern.permute.xlu0 0
        %844 = vperm.xlu0 %843, %v742
        %v845 = vpop.permute.xlu0 %844
        %848 = vset.pattern.permute.xlu0 0
        %849 = vperm.xlu0 %848, %v743
        %v850 = vpop.permute.xlu0 %849
        %853 = vset.pattern.permute.xlu0 0
        %854 = vperm.xlu0 %853, %v744
        %v855 = vpop.permute.xlu0 %854
        %858 = vset.pattern.permute.xlu0 0
        %859 = vperm.xlu0 %858, %v745
        %v860 = vpop.permute.xlu0 %859
        %863 = vset.pattern.permute.xlu0 0
        %864 = vperm.xlu0 %863, %v746
        %v865 = vpop.permute.xlu0 %864
        %868 = vset.pattern.permute.xlu0 0
        %869 = vperm.xlu0 %868, %v747
        %v870 = vpop.permute.xlu0 %869
        %873 = vset.pattern.permute.xlu0 0
        %874 = vperm.xlu0 %873, %v748
        %v875 = vpop.permute.xlu0 %874
        %v877 = vsub.f32 %v623, %v800
        %v878 = vsub.f32 %v626, %v805
        %v879 = vsub.f32 %v631, %v810
        %v880 = vsub.f32 %v634, %v815
        %v881 = vsub.f32 %v639, %v820
        %v882 = vsub.f32 %v642, %v825
        %v883 = vsub.f32 %v647, %v830
        %v884 = vsub.f32 %v650, %v835
        %v885 = vsub.f32 %v655, %v840
        %v886 = vsub.f32 %v658, %v845
        %v887 = vsub.f32 %v663, %v850
        %v888 = vsub.f32 %v666, %v855
        %v889 = vsub.f32 %v671, %v860
        %v890 = vsub.f32 %v674, %v865
        %v891 = vsub.f32 %v679, %v870
        %v892 = vsub.f32 %v682, %v875
        %v893 = vmul.f32 %v877, 1.442695
        %v894 = vpow.pop %v893
        %v895 = vmul.f32 %v878, 1.442695
        %v896 = vpow.pop %v895
        %v897 = vmul.f32 %v879, 1.442695
        %v898 = vpow.pop %v897
        %v899 = vmul.f32 %v880, 1.442695
        %v900 = vpow.pop %v899
        %v901 = vmul.f32 %v881, 1.442695
        %v902 = vpow.pop %v901
        %v903 = vmul.f32 %v882, 1.442695
        %v904 = vpow.pop %v903
        %v905 = vmul.f32 %v883, 1.442695
        %v906 = vpow.pop %v905
        %v907 = vmul.f32 %v884, 1.442695
        %v908 = vpow.pop %v907
        %v909 = vmul.f32 %v885, 1.442695
        %v910 = vpow.pop %v909
        %v911 = vmul.f32 %v886, 1.442695
        %v912 = vpow.pop %v911
        %v913 = vmul.f32 %v887, 1.442695
        %v914 = vpow.pop %v913
        %v915 = vmul.f32 %v888, 1.442695
        %v916 = vpow.pop %v915
        %v917 = vmul.f32 %v889, 1.442695
        %v918 = vpow.pop %v917
        %v919 = vmul.f32 %v890, 1.442695
        %v920 = vpow.pop %v919
        %v921 = vmul.f32 %v891, 1.442695
        %v922 = vpow.pop %v921
        %v923 = vmul.f32 %v892, 1.442695
        %v924 = vpow.pop %v923
        %v925 = vld [vmem:[#allocation3] sm:$0xff]
        %v926 = vld [vmem:[#allocation3 + $0x8] sm:$0xff]
        %v927 = vld [vmem:[#allocation3 + $0x10] sm:$0xff]
        %v928 = vld [vmem:[#allocation3 + $0x18] sm:$0xff]
        %v929 = vld [vmem:[#allocation3 + $0x20] sm:$0xff]
        %v930 = vld [vmem:[#allocation3 + $0x28] sm:$0xff]
        %v931 = vld [vmem:[#allocation3 + $0x30] sm:$0xff]
        %v932 = vld [vmem:[#allocation3 + $0x38] sm:$0xff]
        %v933 = vld [vmem:[#allocation3 + $0x40] sm:$0xff]
        %v934 = vld [vmem:[#allocation3 + $0x48] sm:$0xff]
        %v935 = vld [vmem:[#allocation3 + $0x50] sm:$0xff]
        %v936 = vld [vmem:[#allocation3 + $0x58] sm:$0xff]
        %v937 = vld [vmem:[#allocation3 + $0x60] sm:$0xff]
        %v938 = vld [vmem:[#allocation3 + $0x68] sm:$0xff]
        %v939 = vld [vmem:[#allocation3 + $0x70] sm:$0xff]
        %v940 = vld [vmem:[#allocation3 + $0x78] sm:$0xff]
        %v941 = vmul.f32 %v766, %v925
        %v942 = vmul.f32 %v768, %v926
        %v943 = vmul.f32 %v770, %v927
        %v944 = vmul.f32 %v772, %v928
        %v945 = vmul.f32 %v774, %v929
        %v946 = vmul.f32 %v776, %v930
        %v947 = vmul.f32 %v778, %v931
        %v948 = vmul.f32 %v780, %v932
        %v949 = vmul.f32 %v782, %v933
        %v950 = vmul.f32 %v784, %v934
        %v951 = vmul.f32 %v786, %v935
        %v952 = vmul.f32 %v788, %v936
        %v953 = vmul.f32 %v790, %v937
        %v954 = vmul.f32 %v792, %v938
        %v955 = vmul.f32 %v794, %v939
        %v956 = vmul.f32 %v796, %v940
        %957 = vadd.xlane.f32.xlu0 %v894
        %v958 = vpop.xlane.xlu0 %957
        %959 = vadd.xlane.f32.xlu0 %v896
        %v960 = vpop.xlane.xlu0 %959
        %961 = vadd.xlane.f32.xlu0 %v898
        %v962 = vpop.xlane.xlu0 %961
        %963 = vadd.xlane.f32.xlu0 %v900
        %v964 = vpop.xlane.xlu0 %963
        %965 = vadd.xlane.f32.xlu0 %v902
        %v966 = vpop.xlane.xlu0 %965
        %967 = vadd.xlane.f32.xlu0 %v904
        %v968 = vpop.xlane.xlu0 %967
        %969 = vadd.xlane.f32.xlu0 %v906
        %v970 = vpop.xlane.xlu0 %969
        %971 = vadd.xlane.f32.xlu0 %v908
        %v972 = vpop.xlane.xlu0 %971
        %973 = vadd.xlane.f32.xlu0 %v910
        %v974 = vpop.xlane.xlu0 %973
        %975 = vadd.xlane.f32.xlu0 %v912
        %v976 = vpop.xlane.xlu0 %975
        %977 = vadd.xlane.f32.xlu0 %v914
        %v978 = vpop.xlane.xlu0 %977
        %979 = vadd.xlane.f32.xlu0 %v916
        %v980 = vpop.xlane.xlu0 %979
        %981 = vadd.xlane.f32.xlu0 %v918
        %v982 = vpop.xlane.xlu0 %981
        %983 = vadd.xlane.f32.xlu0 %v920
        %v984 = vpop.xlane.xlu0 %983
        %985 = vadd.xlane.f32.xlu0 %v922
        %v986 = vpop.xlane.xlu0 %985
        %987 = vadd.xlane.f32.xlu0 %v924
        %v988 = vpop.xlane.xlu0 %987
        %v989 = vadd.f32 %v941, %v958
        %v990 = vadd.f32 %v942, %v960
        %v991 = vadd.f32 %v943, %v962
        %v992 = vadd.f32 %v944, %v964
        %v993 = vadd.f32 %v945, %v966
        %v994 = vadd.f32 %v946, %v968
        %v995 = vadd.f32 %v947, %v970
        %v996 = vadd.f32 %v948, %v972
        %v997 = vadd.f32 %v949, %v974
        %v998 = vadd.f32 %v950, %v976
        %v999 = vadd.f32 %v951, %v978
        %v1000 = vadd.f32 %v952, %v980
        %v1001 = vadd.f32 %v953, %v982
        %v1002 = vadd.f32 %v954, %v984
        %v1003 = vadd.f32 %v955, %v986
        %v1004 = vadd.f32 %v956, %v988
        %vm1005 = vcmask 7168
        %1006 = vst.msk [vmem:[#allocation3] sm:$0xff] %vm1005, %v989
        %1007 = vst.msk [vmem:[#allocation3 + $0x8] sm:$0xff] %vm1005, %v990
        %1008 = vst.msk [vmem:[#allocation3 + $0x10] sm:$0xff] %vm1005, %v991
        %1009 = vst.msk [vmem:[#allocation3 + $0x18] sm:$0xff] %vm1005, %v992
        %1010 = vst.msk [vmem:[#allocation3 + $0x20] sm:$0xff] %vm1005, %v993
        %1011 = vst.msk [vmem:[#allocation3 + $0x28] sm:$0xff] %vm1005, %v994
        %1012 = vst.msk [vmem:[#allocation3 + $0x30] sm:$0xff] %vm1005, %v995
        %1013 = vst.msk [vmem:[#allocation3 + $0x38] sm:$0xff] %vm1005, %v996
        %1014 = vst.msk [vmem:[#allocation3 + $0x40] sm:$0xff] %vm1005, %v997
        %1015 = vst.msk [vmem:[#allocation3 + $0x48] sm:$0xff] %vm1005, %v998
        %1016 = vst.msk [vmem:[#allocation3 + $0x50] sm:$0xff] %vm1005, %v999
        %1017 = vst.msk [vmem:[#allocation3 + $0x58] sm:$0xff] %vm1005, %v1000
        %1018 = vst.msk [vmem:[#allocation3 + $0x60] sm:$0xff] %vm1005, %v1001
        %1019 = vst.msk [vmem:[#allocation3 + $0x68] sm:$0xff] %vm1005, %v1002
        %1020 = vst.msk [vmem:[#allocation3 + $0x70] sm:$0xff] %vm1005, %v1003
        %1021 = vst.msk [vmem:[#allocation3 + $0x78] sm:$0xff] %vm1005, %v1004
        %v1022 = vpack.c.bf16 %v896, %v894
        %v1023 = vpack.c.bf16 %v900, %v898
        %v1024 = vpack.c.bf16 %v904, %v902
        %v1025 = vpack.c.bf16 %v908, %v906
        %v1026 = vpack.c.bf16 %v912, %v910
        %v1027 = vpack.c.bf16 %v916, %v914
        %v1028 = vpack.c.bf16 %v920, %v918
        %v1029 = vpack.c.bf16 %v924, %v922
        %v1046 = vunpack.c.l.b16 %v476
        %v1047 = vunpack.c.l.b16 %v477
        %v1048 = vunpack.c.l.b16 %v478
        %v1049 = vunpack.c.l.b16 %v479
        %v1050 = vunpack.c.l.b16 %v480
        %v1051 = vunpack.c.l.b16 %v481
        %v1052 = vunpack.c.l.b16 %v482
        %v1053 = vunpack.c.l.b16 %v483
        %v1054 = vunpack.c.l.b16 %v484
        %v1055 = vunpack.c.l.b16 %v485
        %v1056 = vunpack.c.l.b16 %v486
        %v1057 = vunpack.c.l.b16 %v487
        %v1058 = vunpack.c.l.b16 %v488
        %v1059 = vunpack.c.l.b16 %v489
        %v1060 = vunpack.c.l.b16 %v490
        %v1061 = vunpack.c.l.b16 %v491
        %v1062 = vpack.c.b16 %v1047, %v1046
        %v1063 = vpack.c.b16 %v1049, %v1048
        %v1064 = vpack.c.b16 %v1051, %v1050
        %v1065 = vpack.c.b16 %v1053, %v1052
        %v1066 = vpack.c.b16 %v1055, %v1054
        %v1067 = vpack.c.b16 %v1057, %v1056
        %v1068 = vpack.c.b16 %v1059, %v1058
        %v1069 = vpack.c.b16 %v1061, %v1060
        %1078 = vmatprep.subr.bf16.mxu0 0
        %1079 = vmatpush1.bf16.msra.mxu0 %v1062
        %1080 = vmatprep.subr.bf16.mxu0 0
        %1081 = vmatpush1.bf16.msra.mxu0 %v1063
        %1082 = vmatprep.subr.bf16.mxu0 0
        %1083 = vmatpush1.bf16.msra.mxu0 %v1064
        %1084 = vmatprep.subr.bf16.mxu0 0
        %1085 = vmatpush1.bf16.msra.mxu0 %v1065
        %1086 = vmatprep.subr.bf16.mxu0 0
        %1087 = vmatpush1.bf16.msra.mxu0 %v1066
        %1088 = vmatprep.subr.bf16.mxu0 0
        %1089 = vmatpush1.bf16.msra.mxu0 %v1067
        %1090 = vmatprep.subr.bf16.mxu0 0
        %1091 = vmatpush1.bf16.msra.mxu0 %v1068
        %1092 = vmatprep.subr.bf16.mxu0 0
        %1093 = vmatpush1.bf16.msra.mxu0 %v1069
        %1094 = vmatprep.subr.bf16.mxu0 0
        %1095 = vmatpush1.bf16.msra.mxu0 0
        %1096 = vmatprep.subr.bf16.mxu0 0
        %1097 = vmatpush1.bf16.msra.mxu0 0
        %1098 = vmatprep.subr.bf16.mxu0 0
        %1099 = vmatpush1.bf16.msra.mxu0 0
        %1100 = vmatprep.subr.bf16.mxu0 0
        %1101 = vmatpush1.bf16.msra.mxu0 0
        %1102 = vmatprep.subr.bf16.mxu0 0
        %1103 = vmatpush1.bf16.msra.mxu0 0
        %1104 = vmatprep.subr.bf16.mxu0 0
        %1105 = vmatpush1.bf16.msra.mxu0 0
        %1106 = vmatprep.subr.bf16.mxu0 0
        %1107 = vmatpush1.bf16.msra.mxu0 0
        %1108 = vmatprep.subr.bf16.mxu0 0
        %1109 = vmatpush1.bf16.msra.mxu0 0
        %1110 = vmatprep.mubr.bf16.mxu0 0
        %1111 = vmatmul.mubr.bf16.gmra.mrb[0].mxu0 %v1022
        %v1112 = vpop.f32.mrb[0].mxu0
        %v1113 = vadd.f32 0.0, %v1112
        %v1114 = vpop.f32.mrb[0].mxu0
        %v1115 = vpop.f32.mrb[0].mxu0
        %v1116 = vadd.f32 0.0, %v1115
        %v1117 = vpop.f32.mrb[0].mxu0
        %1118 = vmatprep.mubr.bf16.mxu0 0
        %1119 = vmatmul.mubr.bf16.gmra.mrb[0].mxu0 %v1023
        %v1120 = vpop.f32.mrb[0].mxu0
        %v1121 = vadd.f32 0.0, %v1120
        %v1122 = vpop.f32.mrb[0].mxu0
        %v1123 = vpop.f32.mrb[0].mxu0
        %v1124 = vadd.f32 0.0, %v1123
        %v1125 = vpop.f32.mrb[0].mxu0
        %1126 = vmatprep.mubr.bf16.mxu0 0
        %1127 = vmatmul.mubr.bf16.gmra.mrb[0].mxu0 %v1024
        %v1128 = vpop.f32.mrb[0].mxu0
        %v1129 = vadd.f32 0.0, %v1128
        %v1130 = vpop.f32.mrb[0].mxu0
        %v1131 = vpop.f32.mrb[0].mxu0
        %v1132 = vadd.f32 0.0, %v1131
        %v1133 = vpop.f32.mrb[0].mxu0
        %1134 = vmatprep.mubr.bf16.mxu0 0
        %1135 = vmatmul.mubr.bf16.gmra.mrb[0].mxu0 %v1025
        %v1136 = vpop.f32.mrb[0].mxu0
        %v1137 = vadd.f32 0.0, %v1136
        %v1138 = vpop.f32.mrb[0].mxu0
        %v1139 = vpop.f32.mrb[0].mxu0
        %v1140 = vadd.f32 0.0, %v1139
        %v1141 = vpop.f32.mrb[0].mxu0
        %1142 = vmatprep.mubr.bf16.mxu0 0
        %1143 = vmatmul.mubr.bf16.gmra.mrb[0].mxu0 %v1026
        %v1144 = vpop.f32.mrb[0].mxu0
        %v1145 = vadd.f32 0.0, %v1144
        %v1146 = vpop.f32.mrb[0].mxu0
        %v1147 = vpop.f32.mrb[0].mxu0
        %v1148 = vadd.f32 0.0, %v1147
        %v1149 = vpop.f32.mrb[0].mxu0
        %1150 = vmatprep.mubr.bf16.mxu0 0
        %1151 = vmatmul.mubr.bf16.gmra.mrb[0].mxu0 %v1027
        %v1152 = vpop.f32.mrb[0].mxu0
        %v1153 = vadd.f32 0.0, %v1152
        %v1154 = vpop.f32.mrb[0].mxu0
        %v1155 = vpop.f32.mrb[0].mxu0
        %v1156 = vadd.f32 0.0, %v1155
        %v1157 = vpop.f32.mrb[0].mxu0
        %1158 = vmatprep.mubr.bf16.mxu0 0
        %1159 = vmatmul.mubr.bf16.gmra.mrb[0].mxu0 %v1028
        %v1160 = vpop.f32.mrb[0].mxu0
        %v1161 = vadd.f32 0.0, %v1160
        %v1162 = vpop.f32.mrb[0].mxu0
        %v1163 = vpop.f32.mrb[0].mxu0
        %v1164 = vadd.f32 0.0, %v1163
        %v1165 = vpop.f32.mrb[0].mxu0
        %1166 = vmatprep.mubr.bf16.mxu0 0
        %1167 = vmatmul.mubr.bf16.gmra.mrb[0].mxu0 %v1029
        %v1168 = vpop.f32.mrb[0].mxu0
        %v1169 = vadd.f32 0.0, %v1168
        %v1170 = vpop.f32.mrb[0].mxu0
        %v1171 = vpop.f32.mrb[0].mxu0
        %v1172 = vadd.f32 0.0, %v1171
        %v1173 = vpop.f32.mrb[0].mxu0
        %1174 = vdwg.mxu0
        %v1175 = vld [vmem:[#allocation4] sm:$0xff]
        %v1176 = vld [vmem:[#allocation4 + $0x10] sm:$0xff]
        %v1177 = vld [vmem:[#allocation4 + $0x20] sm:$0xff]
        %v1178 = vld [vmem:[#allocation4 + $0x30] sm:$0xff]
        %v1179 = vld [vmem:[#allocation4 + $0x40] sm:$0xff]
        %v1180 = vld [vmem:[#allocation4 + $0x50] sm:$0xff]
        %v1181 = vld [vmem:[#allocation4 + $0x60] sm:$0xff]
        %v1182 = vld [vmem:[#allocation4 + $0x70] sm:$0xff]
        %v1183 = vld [vmem:[#allocation4 + $0x80] sm:$0xff]
        %v1184 = vld [vmem:[#allocation4 + $0x90] sm:$0xff]
        %v1185 = vld [vmem:[#allocation4 + $0xa0] sm:$0xff]
        %v1186 = vld [vmem:[#allocation4 + $0xb0] sm:$0xff]
        %v1187 = vld [vmem:[#allocation4 + $0xc0] sm:$0xff]
        %v1188 = vld [vmem:[#allocation4 + $0xd0] sm:$0xff]
        %v1189 = vld [vmem:[#allocation4 + $0xe0] sm:$0xff]
        %v1190 = vld [vmem:[#allocation4 + $0xf0] sm:$0xff]
        %1192 = vset.pattern.permute.xlu0 0
        %1193 = vperm.xlu0 %1192, %v766
        %v1194 = vpop.permute.xlu0 %1193
        %1197 = vset.pattern.permute.xlu0 0
        %1198 = vperm.xlu0 %1197, %v768
        %v1199 = vpop.permute.xlu0 %1198
        %1202 = vset.pattern.permute.xlu0 0
        %1203 = vperm.xlu0 %1202, %v770
        %v1204 = vpop.permute.xlu0 %1203
        %1207 = vset.pattern.permute.xlu0 0
        %1208 = vperm.xlu0 %1207, %v772
        %v1209 = vpop.permute.xlu0 %1208
        %1212 = vset.pattern.permute.xlu0 0
        %1213 = vperm.xlu0 %1212, %v774
        %v1214 = vpop.permute.xlu0 %1213
        %1217 = vset.pattern.permute.xlu0 0
        %1218 = vperm.xlu0 %1217, %v776
        %v1219 = vpop.permute.xlu0 %1218
        %1222 = vset.pattern.permute.xlu0 0
        %1223 = vperm.xlu0 %1222, %v778
        %v1224 = vpop.permute.xlu0 %1223
        %1227 = vset.pattern.permute.xlu0 0
        %1228 = vperm.xlu0 %1227, %v780
        %v1229 = vpop.permute.xlu0 %1228
        %1232 = vset.pattern.permute.xlu0 0
        %1233 = vperm.xlu0 %1232, %v782
        %v1234 = vpop.permute.xlu0 %1233
        %1237 = vset.pattern.permute.xlu0 0
        %1238 = vperm.xlu0 %1237, %v784
        %v1239 = vpop.permute.xlu0 %1238
        %1242 = vset.pattern.permute.xlu0 0
        %1243 = vperm.xlu0 %1242, %v786
        %v1244 = vpop.permute.xlu0 %1243
        %1247 = vset.pattern.permute.xlu0 0
        %1248 = vperm.xlu0 %1247, %v788
        %v1249 = vpop.permute.xlu0 %1248
        %1252 = vset.pattern.permute.xlu0 0
        %1253 = vperm.xlu0 %1252, %v790
        %v1254 = vpop.permute.xlu0 %1253
        %1257 = vset.pattern.permute.xlu0 0
        %1258 = vperm.xlu0 %1257, %v792
        %v1259 = vpop.permute.xlu0 %1258
        %1262 = vset.pattern.permute.xlu0 0
        %1263 = vperm.xlu0 %1262, %v794
        %v1264 = vpop.permute.xlu0 %1263
        %1267 = vset.pattern.permute.xlu0 0
        %1268 = vperm.xlu0 %1267, %v796
        %v1269 = vpop.permute.xlu0 %1268
        %v1271 = vmul.f32 %v1194, %v1175
        %v1272 = vmul.f32 %v1199, %v1176
        %v1273 = vmul.f32 %v1204, %v1177
        %v1274 = vmul.f32 %v1209, %v1178
        %v1275 = vmul.f32 %v1214, %v1179
        %v1276 = vmul.f32 %v1219, %v1180
        %v1277 = vmul.f32 %v1224, %v1181
        %v1278 = vmul.f32 %v1229, %v1182
        %v1279 = vmul.f32 %v1234, %v1183
        %v1280 = vmul.f32 %v1239, %v1184
        %v1281 = vmul.f32 %v1244, %v1185
        %v1282 = vmul.f32 %v1249, %v1186
        %v1283 = vmul.f32 %v1254, %v1187
        %v1284 = vmul.f32 %v1259, %v1188
        %v1285 = vmul.f32 %v1264, %v1189
        %v1286 = vmul.f32 %v1269, %v1190
        %v1287 = vadd.f32 %v1271, %v1113
        %v1288 = vadd.f32 %v1272, %v1116
        %v1289 = vadd.f32 %v1273, %v1121
        %v1290 = vadd.f32 %v1274, %v1124
        %v1291 = vadd.f32 %v1275, %v1129
        %v1292 = vadd.f32 %v1276, %v1132
        %v1293 = vadd.f32 %v1277, %v1137
        %v1294 = vadd.f32 %v1278, %v1140
        %v1295 = vadd.f32 %v1279, %v1145
        %v1296 = vadd.f32 %v1280, %v1148
        %v1297 = vadd.f32 %v1281, %v1153
        %v1298 = vadd.f32 %v1282, %v1156
        %v1299 = vadd.f32 %v1283, %v1161
        %v1300 = vadd.f32 %v1284, %v1164
        %v1301 = vadd.f32 %v1285, %v1169
        %v1302 = vadd.f32 %v1286, %v1172
        %1303 = vst [vmem:[#allocation4] sm:$0xff] %v1287
        %1304 = vst [vmem:[#allocation4 + $0x10] sm:$0xff] %v1288
        %1305 = vst [vmem:[#allocation4 + $0x20] sm:$0xff] %v1289
        %1306 = vst [vmem:[#allocation4 + $0x30] sm:$0xff] %v1290
        %1307 = vst [vmem:[#allocation4 + $0x40] sm:$0xff] %v1291
        %1308 = vst [vmem:[#allocation4 + $0x50] sm:$0xff] %v1292
        %1309 = vst [vmem:[#allocation4 + $0x60] sm:$0xff] %v1293
        %1310 = vst [vmem:[#allocation4 + $0x70] sm:$0xff] %v1294
        %1311 = vst [vmem:[#allocation4 + $0x80] sm:$0xff] %v1295
        %1312 = vst [vmem:[#allocation4 + $0x90] sm:$0xff] %v1296
        %1313 = vst [vmem:[#allocation4 + $0xa0] sm:$0xff] %v1297
        %1314 = vst [vmem:[#allocation4 + $0xb0] sm:$0xff] %v1298
        %1315 = vst [vmem:[#allocation4 + $0xc0] sm:$0xff] %v1299
        %1316 = vst [vmem:[#allocation4 + $0xd0] sm:$0xff] %v1300
        %1317 = vst [vmem:[#allocation4 + $0xe0] sm:$0xff] %v1301
        %1318 = vst [vmem:[#allocation4 + $0xf0] sm:$0xff] %v1302
        %1319 = vst.msk [vmem:[#allocation2] sm:$0xff] %vm1005, %v733
        %1320 = vst.msk [vmem:[#allocation2 + $0x8] sm:$0xff] %vm1005, %v734
        %1321 = vst.msk [vmem:[#allocation2 + $0x10] sm:$0xff] %vm1005, %v735
        %1322 = vst.msk [vmem:[#allocation2 + $0x18] sm:$0xff] %vm1005, %v736
        %1323 = vst.msk [vmem:[#allocation2 + $0x20] sm:$0xff] %vm1005, %v737
        %1324 = vst.msk [vmem:[#allocation2 + $0x28] sm:$0xff] %vm1005, %v738
        %1325 = vst.msk [vmem:[#allocation2 + $0x30] sm:$0xff] %vm1005, %v739
        %1326 = vst.msk [vmem:[#allocation2 + $0x38] sm:$0xff] %vm1005, %v740
        %1327 = vst.msk [vmem:[#allocation2 + $0x40] sm:$0xff] %vm1005, %v741
        %1328 = vst.msk [vmem:[#allocation2 + $0x48] sm:$0xff] %vm1005, %v742
        %1329 = vst.msk [vmem:[#allocation2 + $0x50] sm:$0xff] %vm1005, %v743
        %1330 = vst.msk [vmem:[#allocation2 + $0x58] sm:$0xff] %vm1005, %v744
        %1331 = vst.msk [vmem:[#allocation2 + $0x60] sm:$0xff] %vm1005, %v745
        %1332 = vst.msk [vmem:[#allocation2 + $0x68] sm:$0xff] %vm1005, %v746
        %1333 = vst.msk [vmem:[#allocation2 + $0x70] sm:$0xff] %vm1005, %v747
        %1334 = vst.msk [vmem:[#allocation2 + $0x78] sm:$0xff] %vm1005, %v748
        %v1335 = vunpack.c.h.b16 %v444
        %v1336 = vunpack.c.h.b16 %v445
        %v1337 = vunpack.c.h.b16 %v446
        %v1338 = vunpack.c.h.b16 %v447
        %v1339 = vunpack.c.h.b16 %v448
        %v1340 = vunpack.c.h.b16 %v449
        %v1341 = vunpack.c.h.b16 %v450
        %v1342 = vunpack.c.h.b16 %v451
        %v1343 = vunpack.c.h.b16 %v452
        %v1344 = vunpack.c.h.b16 %v453
        %v1345 = vunpack.c.h.b16 %v454
        %v1346 = vunpack.c.h.b16 %v455
        %v1347 = vunpack.c.h.b16 %v456
        %v1348 = vunpack.c.h.b16 %v457
        %v1349 = vunpack.c.h.b16 %v458
        %v1350 = vunpack.c.h.b16 %v459
        %v1351 = vpack.c.b16 %v1336, %v1335
        %v1352 = vpack.c.b16 %v1338, %v1337
        %v1353 = vpack.c.b16 %v1340, %v1339
        %v1354 = vpack.c.b16 %v1342, %v1341
        %v1355 = vpack.c.b16 %v1344, %v1343
        %v1356 = vpack.c.b16 %v1346, %v1345
        %v1357 = vpack.c.b16 %v1348, %v1347
        %v1358 = vpack.c.b16 %v1350, %v1349
        %v1367 = vunpack.c.h.b16 %v460
        %v1368 = vunpack.c.h.b16 %v461
        %v1369 = vunpack.c.h.b16 %v462
        %v1370 = vunpack.c.h.b16 %v463
        %v1371 = vunpack.c.h.b16 %v464
        %v1372 = vunpack.c.h.b16 %v465
        %v1373 = vunpack.c.h.b16 %v466
        %v1374 = vunpack.c.h.b16 %v467
        %v1375 = vunpack.c.h.b16 %v468
        %v1376 = vunpack.c.h.b16 %v469
        %v1377 = vunpack.c.h.b16 %v470
        %v1378 = vunpack.c.h.b16 %v471
        %v1379 = vunpack.c.h.b16 %v472
        %v1380 = vunpack.c.h.b16 %v473
        %v1381 = vunpack.c.h.b16 %v474
        %v1382 = vunpack.c.h.b16 %v475
        %v1383 = vpack.c.b16 %v1368, %v1367
        %v1384 = vpack.c.b16 %v1370, %v1369
        %v1385 = vpack.c.b16 %v1372, %v1371
        %v1386 = vpack.c.b16 %v1374, %v1373
        %v1387 = vpack.c.b16 %v1376, %v1375
        %v1388 = vpack.c.b16 %v1378, %v1377
        %v1389 = vpack.c.b16 %v1380, %v1379
        %v1390 = vpack.c.b16 %v1382, %v1381
        %1399 = vmatprep.subr.bf16.mxu0 0
        %1400 = vmatpush1.bf16.xpose.msra.mxu0 %v1383
        %1401 = vmatprep.subr.bf16.mxu0 0
        %1402 = vmatpush1.bf16.xpose.msra.mxu0 %v1384
        %1403 = vmatprep.subr.bf16.mxu0 0
        %1404 = vmatpush1.bf16.xpose.msra.mxu0 %v1385
        %1405 = vmatprep.subr.bf16.mxu0 0
        %1406 = vmatpush1.bf16.xpose.msra.mxu0 %v1386
        %1407 = vmatprep.subr.bf16.mxu0 0
        %1408 = vmatpush1.bf16.xpose.msra.mxu0 %v1387
        %1409 = vmatprep.subr.bf16.mxu0 0
        %1410 = vmatpush1.bf16.xpose.msra.mxu0 %v1388
        %1411 = vmatprep.subr.bf16.mxu0 0
        %1412 = vmatpush1.bf16.xpose.msra.mxu0 %v1389
        %1413 = vmatprep.subr.bf16.mxu0 0
        %1414 = vmatpush1.bf16.xpose.msra.mxu0 %v1390
        %1415 = vmatprep.subr.bf16.mxu0 0
        %1416 = vmatpush1.bf16.xpose.msra.mxu0 0
        %1417 = vmatprep.subr.bf16.mxu0 0
        %1418 = vmatpush1.bf16.xpose.msra.mxu0 0
        %1419 = vmatprep.subr.bf16.mxu0 0
        %1420 = vmatpush1.bf16.xpose.msra.mxu0 0
        %1421 = vmatprep.subr.bf16.mxu0 0
        %1422 = vmatpush1.bf16.xpose.msra.mxu0 0
        %1423 = vmatprep.subr.bf16.mxu0 0
        %1424 = vmatpush1.bf16.xpose.msra.mxu0 0
        %1425 = vmatprep.subr.bf16.mxu0 0
        %1426 = vmatpush1.bf16.xpose.msra.mxu0 0
        %1427 = vmatprep.subr.bf16.mxu0 0
        %1428 = vmatpush1.bf16.xpose.msra.mxu0 0
        %1429 = vmatprep.subr.bf16.mxu0 0
        %1430 = vmatpush1.bf16.xpose.msra.mxu0 0
        %1431 = vmatprep.mubr.bf16.mxu0 0
        %1432 = vmatmul.mubr.bf16.gmra.mrb[0].mxu0 %v1351
        %v1433 = vpop.f32.mrb[0].mxu0
        %v1434 = vadd.f32 0.0, %v1433
        %v1435 = vpop.f32.mrb[0].mxu0
        %v1436 = vpop.f32.mrb[0].mxu0
        %v1437 = vadd.f32 0.0, %v1436
        %v1438 = vpop.f32.mrb[0].mxu0
        %1439 = vmatprep.mubr.bf16.mxu0 0
        %1440 = vmatmul.mubr.bf16.gmra.mrb[0].mxu0 %v1352
        %v1441 = vpop.f32.mrb[0].mxu0
        %v1442 = vadd.f32 0.0, %v1441
        %v1443 = vpop.f32.mrb[0].mxu0
        %v1444 = vpop.f32.mrb[0].mxu0
        %v1445 = vadd.f32 0.0, %v1444
        %v1446 = vpop.f32.mrb[0].mxu0
        %1447 = vmatprep.mubr.bf16.mxu0 0
        %1448 = vmatmul.mubr.bf16.gmra.mrb[0].mxu0 %v1353
        %v1449 = vpop.f32.mrb[0].mxu0
        %v1450 = vadd.f32 0.0, %v1449
        %v1451 = vpop.f32.mrb[0].mxu0
        %v1452 = vpop.f32.mrb[0].mxu0
        %v1453 = vadd.f32 0.0, %v1452
        %v1454 = vpop.f32.mrb[0].mxu0
        %1455 = vmatprep.mubr.bf16.mxu0 0
        %1456 = vmatmul.mubr.bf16.gmra.mrb[0].mxu0 %v1354
        %v1457 = vpop.f32.mrb[0].mxu0
        %v1458 = vadd.f32 0.0, %v1457
        %v1459 = vpop.f32.mrb[0].mxu0
        %v1460 = vpop.f32.mrb[0].mxu0
        %v1461 = vadd.f32 0.0, %v1460
        %v1462 = vpop.f32.mrb[0].mxu0
        %1463 = vmatprep.mubr.bf16.mxu0 0
        %1464 = vmatmul.mubr.bf16.gmra.mrb[0].mxu0 %v1355
        %v1465 = vpop.f32.mrb[0].mxu0
        %v1466 = vadd.f32 0.0, %v1465
        %v1467 = vpop.f32.mrb[0].mxu0
        %v1468 = vpop.f32.mrb[0].mxu0
        %v1469 = vadd.f32 0.0, %v1468
        %v1470 = vpop.f32.mrb[0].mxu0
        %1471 = vmatprep.mubr.bf16.mxu0 0
        %1472 = vmatmul.mubr.bf16.gmra.mrb[0].mxu0 %v1356
        %v1473 = vpop.f32.mrb[0].mxu0
        %v1474 = vadd.f32 0.0, %v1473
        %v1475 = vpop.f32.mrb[0].mxu0
        %v1476 = vpop.f32.mrb[0].mxu0
        %v1477 = vadd.f32 0.0, %v1476
        %v1478 = vpop.f32.mrb[0].mxu0
        %1479 = vmatprep.mubr.bf16.mxu0 0
        %1480 = vmatmul.mubr.bf16.gmra.mrb[0].mxu0 %v1357
        %v1481 = vpop.f32.mrb[0].mxu0
        %v1482 = vadd.f32 0.0, %v1481
        %v1483 = vpop.f32.mrb[0].mxu0
        %v1484 = vpop.f32.mrb[0].mxu0
        %v1485 = vadd.f32 0.0, %v1484
        %v1486 = vpop.f32.mrb[0].mxu0
        %1487 = vmatprep.mubr.bf16.mxu0 0
        %1488 = vmatmul.mubr.bf16.gmra.mrb[0].mxu0 %v1358
        %v1489 = vpop.f32.mrb[0].mxu0
        %v1490 = vadd.f32 0.0, %v1489
        %v1491 = vpop.f32.mrb[0].mxu0
        %v1492 = vpop.f32.mrb[0].mxu0
        %v1493 = vadd.f32 0.0, %v1492
        %v1494 = vpop.f32.mrb[0].mxu0
        %1495 = vdwg.mxu0
        %s1496 = scalar_lea.vmem [#allocation2], 128
        %v1497 = vld [vmem:[%s1496] sm:$0xff]
        %v1498 = vld [vmem:[%s1496 + $0x8] sm:$0xff]
        %v1499 = vld [vmem:[%s1496 + $0x10] sm:$0xff]
        %v1500 = vld [vmem:[%s1496 + $0x18] sm:$0xff]
        %v1501 = vld [vmem:[%s1496 + $0x20] sm:$0xff]
        %v1502 = vld [vmem:[%s1496 + $0x28] sm:$0xff]
        %v1503 = vld [vmem:[%s1496 + $0x30] sm:$0xff]
        %v1504 = vld [vmem:[%s1496 + $0x38] sm:$0xff]
        %v1505 = vld [vmem:[%s1496 + $0x40] sm:$0xff]
        %v1506 = vld [vmem:[%s1496 + $0x48] sm:$0xff]
        %v1507 = vld [vmem:[%s1496 + $0x50] sm:$0xff]
        %v1508 = vld [vmem:[%s1496 + $0x58] sm:$0xff]
        %v1509 = vld [vmem:[%s1496 + $0x60] sm:$0xff]
        %v1510 = vld [vmem:[%s1496 + $0x68] sm:$0xff]
        %v1511 = vld [vmem:[%s1496 + $0x70] sm:$0xff]
        %v1512 = vld [vmem:[%s1496 + $0x78] sm:$0xff]
        %1513 = vmax.xlane.f32.xlu0 %v1434
        %v1514 = vpop.xlane.xlu0 %1513
        %1515 = vmax.xlane.f32.xlu0 %v1437
        %v1516 = vpop.xlane.xlu0 %1515
        %1517 = vmax.xlane.f32.xlu0 %v1442
        %v1518 = vpop.xlane.xlu0 %1517
        %1519 = vmax.xlane.f32.xlu0 %v1445
        %v1520 = vpop.xlane.xlu0 %1519
        %1521 = vmax.xlane.f32.xlu0 %v1450
        %v1522 = vpop.xlane.xlu0 %1521
        %1523 = vmax.xlane.f32.xlu0 %v1453
        %v1524 = vpop.xlane.xlu0 %1523
        %1525 = vmax.xlane.f32.xlu0 %v1458
        %v1526 = vpop.xlane.xlu0 %1525
        %1527 = vmax.xlane.f32.xlu0 %v1461
        %v1528 = vpop.xlane.xlu0 %1527
        %1529 = vmax.xlane.f32.xlu0 %v1466
        %v1530 = vpop.xlane.xlu0 %1529
        %1531 = vmax.xlane.f32.xlu0 %v1469
        %v1532 = vpop.xlane.xlu0 %1531
        %1533 = vmax.xlane.f32.xlu0 %v1474
        %v1534 = vpop.xlane.xlu0 %1533
        %1535 = vmax.xlane.f32.xlu0 %v1477
        %v1536 = vpop.xlane.xlu0 %1535
        %1537 = vmax.xlane.f32.xlu0 %v1482
        %v1538 = vpop.xlane.xlu0 %1537
        %1539 = vmax.xlane.f32.xlu0 %v1485
        %v1540 = vpop.xlane.xlu0 %1539
        %1541 = vmax.xlane.f32.xlu0 %v1490
        %v1542 = vpop.xlane.xlu0 %1541
        %1543 = vmax.xlane.f32.xlu0 %v1493
        %v1544 = vpop.xlane.xlu0 %1543
        %v1545 = vmax.f32 %v1497, %v1514
        %v1546 = vmax.f32 %v1498, %v1516
        %v1547 = vmax.f32 %v1499, %v1518
        %v1548 = vmax.f32 %v1500, %v1520
        %v1549 = vmax.f32 %v1501, %v1522
        %v1550 = vmax.f32 %v1502, %v1524
        %v1551 = vmax.f32 %v1503, %v1526
        %v1552 = vmax.f32 %v1504, %v1528
        %v1553 = vmax.f32 %v1505, %v1530
        %v1554 = vmax.f32 %v1506, %v1532
        %v1555 = vmax.f32 %v1507, %v1534
        %v1556 = vmax.f32 %v1508, %v1536
        %v1557 = vmax.f32 %v1509, %v1538
        %v1558 = vmax.f32 %v1510, %v1540
        %v1559 = vmax.f32 %v1511, %v1542
        %v1560 = vmax.f32 %v1512, %v1544
        %v1561 = vsub.f32 %v1497, %v1545
        %v1562 = vsub.f32 %v1498, %v1546
        %v1563 = vsub.f32 %v1499, %v1547
        %v1564 = vsub.f32 %v1500, %v1548
        %v1565 = vsub.f32 %v1501, %v1549
        %v1566 = vsub.f32 %v1502, %v1550
        %v1567 = vsub.f32 %v1503, %v1551
        %v1568 = vsub.f32 %v1504, %v1552
        %v1569 = vsub.f32 %v1505, %v1553
        %v1570 = vsub.f32 %v1506, %v1554
        %v1571 = vsub.f32 %v1507, %v1555
        %v1572 = vsub.f32 %v1508, %v1556
        %v1573 = vsub.f32 %v1509, %v1557
        %v1574 = vsub.f32 %v1510, %v1558
        %v1575 = vsub.f32 %v1511, %v1559
        %v1576 = vsub.f32 %v1512, %v1560
        %v1577 = vmul.f32 %v1561, 1.442695
        %v1578 = vpow.pop %v1577
        %v1579 = vmul.f32 %v1562, 1.442695
        %v1580 = vpow.pop %v1579
        %v1581 = vmul.f32 %v1563, 1.442695
        %v1582 = vpow.pop %v1581
        %v1583 = vmul.f32 %v1564, 1.442695
        %v1584 = vpow.pop %v1583
        %v1585 = vmul.f32 %v1565, 1.442695
        %v1586 = vpow.pop %v1585
        %v1587 = vmul.f32 %v1566, 1.442695
        %v1588 = vpow.pop %v1587
        %v1589 = vmul.f32 %v1567, 1.442695
        %v1590 = vpow.pop %v1589
        %v1591 = vmul.f32 %v1568, 1.442695
        %v1592 = vpow.pop %v1591
        %v1593 = vmul.f32 %v1569, 1.442695
        %v1594 = vpow.pop %v1593
        %v1595 = vmul.f32 %v1570, 1.442695
        %v1596 = vpow.pop %v1595
        %v1597 = vmul.f32 %v1571, 1.442695
        %v1598 = vpow.pop %v1597
        %v1599 = vmul.f32 %v1572, 1.442695
        %v1600 = vpow.pop %v1599
        %v1601 = vmul.f32 %v1573, 1.442695
        %v1602 = vpow.pop %v1601
        %v1603 = vmul.f32 %v1574, 1.442695
        %v1604 = vpow.pop %v1603
        %v1605 = vmul.f32 %v1575, 1.442695
        %v1606 = vpow.pop %v1605
        %v1607 = vmul.f32 %v1576, 1.442695
        %v1608 = vpow.pop %v1607
        %1610 = vset.pattern.permute.xlu0 0
        %1611 = vperm.xlu0 %1610, %v1545
        %v1612 = vpop.permute.xlu0 %1611
        %1615 = vset.pattern.permute.xlu0 0
        %1616 = vperm.xlu0 %1615, %v1546
        %v1617 = vpop.permute.xlu0 %1616
        %1620 = vset.pattern.permute.xlu0 0
        %1621 = vperm.xlu0 %1620, %v1547
        %v1622 = vpop.permute.xlu0 %1621
        %1625 = vset.pattern.permute.xlu0 0
        %1626 = vperm.xlu0 %1625, %v1548
        %v1627 = vpop.permute.xlu0 %1626
        %1630 = vset.pattern.permute.xlu0 0
        %1631 = vperm.xlu0 %1630, %v1549
        %v1632 = vpop.permute.xlu0 %1631
        %1635 = vset.pattern.permute.xlu0 0
        %1636 = vperm.xlu0 %1635, %v1550
        %v1637 = vpop.permute.xlu0 %1636
        %1640 = vset.pattern.permute.xlu0 0
        %1641 = vperm.xlu0 %1640, %v1551
        %v1642 = vpop.permute.xlu0 %1641
        %1645 = vset.pattern.permute.xlu0 0
        %1646 = vperm.xlu0 %1645, %v1552
        %v1647 = vpop.permute.xlu0 %1646
        %1650 = vset.pattern.permute.xlu0 0
        %1651 = vperm.xlu0 %1650, %v1553
        %v1652 = vpop.permute.xlu0 %1651
        %1655 = vset.pattern.permute.xlu0 0
        %1656 = vperm.xlu0 %1655, %v1554
        %v1657 = vpop.permute.xlu0 %1656
        %1660 = vset.pattern.permute.xlu0 0
        %1661 = vperm.xlu0 %1660, %v1555
        %v1662 = vpop.permute.xlu0 %1661
        %1665 = vset.pattern.permute.xlu0 0
        %1666 = vperm.xlu0 %1665, %v1556
        %v1667 = vpop.permute.xlu0 %1666
        %1670 = vset.pattern.permute.xlu0 0
        %1671 = vperm.xlu0 %1670, %v1557
        %v1672 = vpop.permute.xlu0 %1671
        %1675 = vset.pattern.permute.xlu0 0
        %1676 = vperm.xlu0 %1675, %v1558
        %v1677 = vpop.permute.xlu0 %1676
        %1680 = vset.pattern.permute.xlu0 0
        %1681 = vperm.xlu0 %1680, %v1559
        %v1682 = vpop.permute.xlu0 %1681
        %1685 = vset.pattern.permute.xlu0 0
        %1686 = vperm.xlu0 %1685, %v1560
        %v1687 = vpop.permute.xlu0 %1686
        %v1689 = vsub.f32 %v1434, %v1612
        %v1690 = vsub.f32 %v1437, %v1617
        %v1691 = vsub.f32 %v1442, %v1622
        %v1692 = vsub.f32 %v1445, %v1627
        %v1693 = vsub.f32 %v1450, %v1632
        %v1694 = vsub.f32 %v1453, %v1637
        %v1695 = vsub.f32 %v1458, %v1642
        %v1696 = vsub.f32 %v1461, %v1647
        %v1697 = vsub.f32 %v1466, %v1652
        %v1698 = vsub.f32 %v1469, %v1657
        %v1699 = vsub.f32 %v1474, %v1662
        %v1700 = vsub.f32 %v1477, %v1667
        %v1701 = vsub.f32 %v1482, %v1672
        %v1702 = vsub.f32 %v1485, %v1677
        %v1703 = vsub.f32 %v1490, %v1682
        %v1704 = vsub.f32 %v1493, %v1687
        %v1705 = vmul.f32 %v1689, 1.442695
        %v1706 = vpow.pop %v1705
        %v1707 = vmul.f32 %v1690, 1.442695
        %v1708 = vpow.pop %v1707
        %v1709 = vmul.f32 %v1691, 1.442695
        %v1710 = vpow.pop %v1709
        %v1711 = vmul.f32 %v1692, 1.442695
        %v1712 = vpow.pop %v1711
        %v1713 = vmul.f32 %v1693, 1.442695
        %v1714 = vpow.pop %v1713
        %v1715 = vmul.f32 %v1694, 1.442695
        %v1716 = vpow.pop %v1715
        %v1717 = vmul.f32 %v1695, 1.442695
        %v1718 = vpow.pop %v1717
        %v1719 = vmul.f32 %v1696, 1.442695
        %v1720 = vpow.pop %v1719
        %v1721 = vmul.f32 %v1697, 1.442695
        %v1722 = vpow.pop %v1721
        %v1723 = vmul.f32 %v1698, 1.442695
        %v1724 = vpow.pop %v1723
        %v1725 = vmul.f32 %v1699, 1.442695
        %v1726 = vpow.pop %v1725
        %v1727 = vmul.f32 %v1700, 1.442695
        %v1728 = vpow.pop %v1727
        %v1729 = vmul.f32 %v1701, 1.442695
        %v1730 = vpow.pop %v1729
        %v1731 = vmul.f32 %v1702, 1.442695
        %v1732 = vpow.pop %v1731
        %v1733 = vmul.f32 %v1703, 1.442695
        %v1734 = vpow.pop %v1733
        %v1735 = vmul.f32 %v1704, 1.442695
        %v1736 = vpow.pop %v1735
        %s1737 = scalar_lea.vmem [#allocation3], 128
        %v1738 = vld [vmem:[%s1737] sm:$0xff]
        %v1739 = vld [vmem:[%s1737 + $0x8] sm:$0xff]
        %v1740 = vld [vmem:[%s1737 + $0x10] sm:$0xff]
        %v1741 = vld [vmem:[%s1737 + $0x18] sm:$0xff]
        %v1742 = vld [vmem:[%s1737 + $0x20] sm:$0xff]
        %v1743 = vld [vmem:[%s1737 + $0x28] sm:$0xff]
        %v1744 = vld [vmem:[%s1737 + $0x30] sm:$0xff]
        %v1745 = vld [vmem:[%s1737 + $0x38] sm:$0xff]
        %v1746 = vld [vmem:[%s1737 + $0x40] sm:$0xff]
        %v1747 = vld [vmem:[%s1737 + $0x48] sm:$0xff]
        %v1748 = vld [vmem:[%s1737 + $0x50] sm:$0xff]
        %v1749 = vld [vmem:[%s1737 + $0x58] sm:$0xff]
        %v1750 = vld [vmem:[%s1737 + $0x60] sm:$0xff]
        %v1751 = vld [vmem:[%s1737 + $0x68] sm:$0xff]
        %v1752 = vld [vmem:[%s1737 + $0x70] sm:$0xff]
        %v1753 = vld [vmem:[%s1737 + $0x78] sm:$0xff]
        %v1754 = vmul.f32 %v1578, %v1738
        %v1755 = vmul.f32 %v1580, %v1739
        %v1756 = vmul.f32 %v1582, %v1740
        %v1757 = vmul.f32 %v1584, %v1741
        %v1758 = vmul.f32 %v1586, %v1742
        %v1759 = vmul.f32 %v1588, %v1743
        %v1760 = vmul.f32 %v1590, %v1744
        %v1761 = vmul.f32 %v1592, %v1745
        %v1762 = vmul.f32 %v1594, %v1746
        %v1763 = vmul.f32 %v1596, %v1747
        %v1764 = vmul.f32 %v1598, %v1748
        %v1765 = vmul.f32 %v1600, %v1749
        %v1766 = vmul.f32 %v1602, %v1750
        %v1767 = vmul.f32 %v1604, %v1751
        %v1768 = vmul.f32 %v1606, %v1752
        %v1769 = vmul.f32 %v1608, %v1753
        %1770 = vadd.xlane.f32.xlu0 %v1706
        %v1771 = vpop.xlane.xlu0 %1770
        %1772 = vadd.xlane.f32.xlu0 %v1708
        %v1773 = vpop.xlane.xlu0 %1772
        %1774 = vadd.xlane.f32.xlu0 %v1710
        %v1775 = vpop.xlane.xlu0 %1774
        %1776 = vadd.xlane.f32.xlu0 %v1712
        %v1777 = vpop.xlane.xlu0 %1776
        %1778 = vadd.xlane.f32.xlu0 %v1714
        %v1779 = vpop.xlane.xlu0 %1778
        %1780 = vadd.xlane.f32.xlu0 %v1716
        %v1781 = vpop.xlane.xlu0 %1780
        %1782 = vadd.xlane.f32.xlu0 %v1718
        %v1783 = vpop.xlane.xlu0 %1782
        %1784 = vadd.xlane.f32.xlu0 %v1720
        %v1785 = vpop.xlane.xlu0 %1784
        %1786 = vadd.xlane.f32.xlu0 %v1722
        %v1787 = vpop.xlane.xlu0 %1786
        %1788 = vadd.xlane.f32.xlu0 %v1724
        %v1789 = vpop.xlane.xlu0 %1788
        %1790 = vadd.xlane.f32.xlu0 %v1726
        %v1791 = vpop.xlane.xlu0 %1790
        %1792 = vadd.xlane.f32.xlu0 %v1728
        %v1793 = vpop.xlane.xlu0 %1792
        %1794 = vadd.xlane.f32.xlu0 %v1730
        %v1795 = vpop.xlane.xlu0 %1794
        %1796 = vadd.xlane.f32.xlu0 %v1732
        %v1797 = vpop.xlane.xlu0 %1796
        %1798 = vadd.xlane.f32.xlu0 %v1734
        %v1799 = vpop.xlane.xlu0 %1798
        %1800 = vadd.xlane.f32.xlu0 %v1736
        %v1801 = vpop.xlane.xlu0 %1800
        %v1802 = vadd.f32 %v1754, %v1771
        %v1803 = vadd.f32 %v1755, %v1773
        %v1804 = vadd.f32 %v1756, %v1775
        %v1805 = vadd.f32 %v1757, %v1777
        %v1806 = vadd.f32 %v1758, %v1779
        %v1807 = vadd.f32 %v1759, %v1781
        %v1808 = vadd.f32 %v1760, %v1783
        %v1809 = vadd.f32 %v1761, %v1785
        %v1810 = vadd.f32 %v1762, %v1787
        %v1811 = vadd.f32 %v1763, %v1789
        %v1812 = vadd.f32 %v1764, %v1791
        %v1813 = vadd.f32 %v1765, %v1793
        %v1814 = vadd.f32 %v1766, %v1795
        %v1815 = vadd.f32 %v1767, %v1797
        %v1816 = vadd.f32 %v1768, %v1799
        %v1817 = vadd.f32 %v1769, %v1801
        %1818 = vst.msk [vmem:[%s1737] sm:$0xff] %vm1005, %v1802
        %1819 = vst.msk [vmem:[%s1737 + $0x8] sm:$0xff] %vm1005, %v1803
        %1820 = vst.msk [vmem:[%s1737 + $0x10] sm:$0xff] %vm1005, %v1804
        %1821 = vst.msk [vmem:[%s1737 + $0x18] sm:$0xff] %vm1005, %v1805
        %1822 = vst.msk [vmem:[%s1737 + $0x20] sm:$0xff] %vm1005, %v1806
        %1823 = vst.msk [vmem:[%s1737 + $0x28] sm:$0xff] %vm1005, %v1807
        %1824 = vst.msk [vmem:[%s1737 + $0x30] sm:$0xff] %vm1005, %v1808
        %1825 = vst.msk [vmem:[%s1737 + $0x38] sm:$0xff] %vm1005, %v1809
        %1826 = vst.msk [vmem:[%s1737 + $0x40] sm:$0xff] %vm1005, %v1810
        %1827 = vst.msk [vmem:[%s1737 + $0x48] sm:$0xff] %vm1005, %v1811
        %1828 = vst.msk [vmem:[%s1737 + $0x50] sm:$0xff] %vm1005, %v1812
        %1829 = vst.msk [vmem:[%s1737 + $0x58] sm:$0xff] %vm1005, %v1813
        %1830 = vst.msk [vmem:[%s1737 + $0x60] sm:$0xff] %vm1005, %v1814
        %1831 = vst.msk [vmem:[%s1737 + $0x68] sm:$0xff] %vm1005, %v1815
        %1832 = vst.msk [vmem:[%s1737 + $0x70] sm:$0xff] %vm1005, %v1816
        %1833 = vst.msk [vmem:[%s1737 + $0x78] sm:$0xff] %vm1005, %v1817
        %v1834 = vpack.c.bf16 %v1708, %v1706
        %v1835 = vpack.c.bf16 %v1712, %v1710
        %v1836 = vpack.c.bf16 %v1716, %v1714
        %v1837 = vpack.c.bf16 %v1720, %v1718
        %v1838 = vpack.c.bf16 %v1724, %v1722
        %v1839 = vpack.c.bf16 %v1728, %v1726
        %v1840 = vpack.c.bf16 %v1732, %v1730
        %v1841 = vpack.c.bf16 %v1736, %v1734
        %v1842 = vunpack.c.h.b16 %v476
        %v1843 = vunpack.c.h.b16 %v477
        %v1844 = vunpack.c.h.b16 %v478
        %v1845 = vunpack.c.h.b16 %v479
        %v1846 = vunpack.c.h.b16 %v480
        %v1847 = vunpack.c.h.b16 %v481
        %v1848 = vunpack.c.h.b16 %v482
        %v1849 = vunpack.c.h.b16 %v483
        %v1850 = vunpack.c.h.b16 %v484
        %v1851 = vunpack.c.h.b16 %v485
        %v1852 = vunpack.c.h.b16 %v486
        %v1853 = vunpack.c.h.b16 %v487
        %v1854 = vunpack.c.h.b16 %v488
        %v1855 = vunpack.c.h.b16 %v489
        %v1856 = vunpack.c.h.b16 %v490
        %v1857 = vunpack.c.h.b16 %v491
        %v1858 = vpack.c.b16 %v1843, %v1842
        %v1859 = vpack.c.b16 %v1845, %v1844
        %v1860 = vpack.c.b16 %v1847, %v1846
        %v1861 = vpack.c.b16 %v1849, %v1848
        %v1862 = vpack.c.b16 %v1851, %v1850
        %v1863 = vpack.c.b16 %v1853, %v1852
        %v1864 = vpack.c.b16 %v1855, %v1854
        %v1865 = vpack.c.b16 %v1857, %v1856
        %1874 = vmatprep.subr.bf16.mxu0 0
        %1875 = vmatpush1.bf16.msra.mxu0 %v1858
        %1876 = vmatprep.subr.bf16.mxu0 0
        %1877 = vmatpush1.bf16.msra.mxu0 %v1859
        %1878 = vmatprep.subr.bf16.mxu0 0
        %1879 = vmatpush1.bf16.msra.mxu0 %v1860
        %1880 = vmatprep.subr.bf16.mxu0 0
        %1881 = vmatpush1.bf16.msra.mxu0 %v1861
        %1882 = vmatprep.subr.bf16.mxu0 0
        %1883 = vmatpush1.bf16.msra.mxu0 %v1862
        %1884 = vmatprep.subr.bf16.mxu0 0
        %1885 = vmatpush1.bf16.msra.mxu0 %v1863
        %1886 = vmatprep.subr.bf16.mxu0 0
        %1887 = vmatpush1.bf16.msra.mxu0 %v1864
        %1888 = vmatprep.subr.bf16.mxu0 0
        %1889 = vmatpush1.bf16.msra.mxu0 %v1865
        %1890 = vmatprep.subr.bf16.mxu0 0
        %1891 = vmatpush1.bf16.msra.mxu0 0
        %1892 = vmatprep.subr.bf16.mxu0 0
        %1893 = vmatpush1.bf16.msra.mxu0 0
        %1894 = vmatprep.subr.bf16.mxu0 0
        %1895 = vmatpush1.bf16.msra.mxu0 0
        %1896 = vmatprep.subr.bf16.mxu0 0
        %1897 = vmatpush1.bf16.msra.mxu0 0
        %1898 = vmatprep.subr.bf16.mxu0 0
        %1899 = vmatpush1.bf16.msra.mxu0 0
        %1900 = vmatprep.subr.bf16.mxu0 0
        %1901 = vmatpush1.bf16.msra.mxu0 0
        %1902 = vmatprep.subr.bf16.mxu0 0
        %1903 = vmatpush1.bf16.msra.mxu0 0
        %1904 = vmatprep.subr.bf16.mxu0 0
        %1905 = vmatpush1.bf16.msra.mxu0 0
        %1906 = vmatprep.mubr.bf16.mxu0 0
        %1907 = vmatmul.mubr.bf16.gmra.mrb[0].mxu0 %v1834
        %v1908 = vpop.f32.mrb[0].mxu0
        %v1909 = vadd.f32 0.0, %v1908
        %v1910 = vpop.f32.mrb[0].mxu0
        %v1911 = vpop.f32.mrb[0].mxu0
        %v1912 = vadd.f32 0.0, %v1911
        %v1913 = vpop.f32.mrb[0].mxu0
        %1914 = vmatprep.mubr.bf16.mxu0 0
        %1915 = vmatmul.mubr.bf16.gmra.mrb[0].mxu0 %v1835
        %v1916 = vpop.f32.mrb[0].mxu0
        %v1917 = vadd.f32 0.0, %v1916
        %v1918 = vpop.f32.mrb[0].mxu0
        %v1919 = vpop.f32.mrb[0].mxu0
        %v1920 = vadd.f32 0.0, %v1919
        %v1921 = vpop.f32.mrb[0].mxu0
        %1922 = vmatprep.mubr.bf16.mxu0 0
        %1923 = vmatmul.mubr.bf16.gmra.mrb[0].mxu0 %v1836
        %v1924 = vpop.f32.mrb[0].mxu0
        %v1925 = vadd.f32 0.0, %v1924
        %v1926 = vpop.f32.mrb[0].mxu0
        %v1927 = vpop.f32.mrb[0].mxu0
        %v1928 = vadd.f32 0.0, %v1927
        %v1929 = vpop.f32.mrb[0].mxu0
        %1930 = vmatprep.mubr.bf16.mxu0 0
        %1931 = vmatmul.mubr.bf16.gmra.mrb[0].mxu0 %v1837
        %v1932 = vpop.f32.mrb[0].mxu0
        %v1933 = vadd.f32 0.0, %v1932
        %v1934 = vpop.f32.mrb[0].mxu0
        %v1935 = vpop.f32.mrb[0].mxu0
        %v1936 = vadd.f32 0.0, %v1935
        %v1937 = vpop.f32.mrb[0].mxu0
        %1938 = vmatprep.mubr.bf16.mxu0 0
        %1939 = vmatmul.mubr.bf16.gmra.mrb[0].mxu0 %v1838
        %v1940 = vpop.f32.mrb[0].mxu0
        %v1941 = vadd.f32 0.0, %v1940
        %v1942 = vpop.f32.mrb[0].mxu0
        %v1943 = vpop.f32.mrb[0].mxu0
        %v1944 = vadd.f32 0.0, %v1943
        %v1945 = vpop.f32.mrb[0].mxu0
        %1946 = vmatprep.mubr.bf16.mxu0 0
        %1947 = vmatmul.mubr.bf16.gmra.mrb[0].mxu0 %v1839
        %v1948 = vpop.f32.mrb[0].mxu0
        %v1949 = vadd.f32 0.0, %v1948
        %v1950 = vpop.f32.mrb[0].mxu0
        %v1951 = vpop.f32.mrb[0].mxu0
        %v1952 = vadd.f32 0.0, %v1951
        %v1953 = vpop.f32.mrb[0].mxu0
        %1954 = vmatprep.mubr.bf16.mxu0 0
        %1955 = vmatmul.mubr.bf16.gmra.mrb[0].mxu0 %v1840
        %v1956 = vpop.f32.mrb[0].mxu0
        %v1957 = vadd.f32 0.0, %v1956
        %v1958 = vpop.f32.mrb[0].mxu0
        %v1959 = vpop.f32.mrb[0].mxu0
        %v1960 = vadd.f32 0.0, %v1959
        %v1961 = vpop.f32.mrb[0].mxu0
        %1962 = vmatprep.mubr.bf16.mxu0 0
        %1963 = vmatmul.mubr.bf16.gmra.mrb[0].mxu0 %v1841
        %v1964 = vpop.f32.mrb[0].mxu0
        %v1965 = vadd.f32 0.0, %v1964
        %v1966 = vpop.f32.mrb[0].mxu0
        %v1967 = vpop.f32.mrb[0].mxu0
        %v1968 = vadd.f32 0.0, %v1967
        %v1969 = vpop.f32.mrb[0].mxu0
        %1970 = vdwg.mxu0
        %v1971 = vld [vmem:[#allocation4 + $0x8] sm:$0xff]
        %v1972 = vld [vmem:[#allocation4 + $0x18] sm:$0xff]
        %v1973 = vld [vmem:[#allocation4 + $0x28] sm:$0xff]
        %v1974 = vld [vmem:[#allocation4 + $0x38] sm:$0xff]
        %v1975 = vld [vmem:[#allocation4 + $0x48] sm:$0xff]
        %v1976 = vld [vmem:[#allocation4 + $0x58] sm:$0xff]
        %v1977 = vld [vmem:[#allocation4 + $0x68] sm:$0xff]
        %v1978 = vld [vmem:[#allocation4 + $0x78] sm:$0xff]
        %v1979 = vld [vmem:[#allocation4 + $0x88] sm:$0xff]
        %v1980 = vld [vmem:[#allocation4 + $0x98] sm:$0xff]
        %v1981 = vld [vmem:[#allocation4 + $0xa8] sm:$0xff]
        %v1982 = vld [vmem:[#allocation4 + $0xb8] sm:$0xff]
        %v1983 = vld [vmem:[#allocation4 + $0xc8] sm:$0xff]
        %v1984 = vld [vmem:[#allocation4 + $0xd8] sm:$0xff]
        %v1985 = vld [vmem:[#allocation4 + $0xe8] sm:$0xff]
        %v1986 = vld [vmem:[#allocation4 + $0xf8] sm:$0xff]
        %1988 = vset.pattern.permute.xlu0 0
        %1989 = vperm.xlu0 %1988, %v1578
        %v1990 = vpop.permute.xlu0 %1989
        %1993 = vset.pattern.permute.xlu0 0
        %1994 = vperm.xlu0 %1993, %v1580
        %v1995 = vpop.permute.xlu0 %1994
        %1998 = vset.pattern.permute.xlu0 0
        %1999 = vperm.xlu0 %1998, %v1582
        %v2000 = vpop.permute.xlu0 %1999
        %2003 = vset.pattern.permute.xlu0 0
        %2004 = vperm.xlu0 %2003, %v1584
        %v2005 = vpop.permute.xlu0 %2004
        %2008 = vset.pattern.permute.xlu0 0
        %2009 = vperm.xlu0 %2008, %v1586
        %v2010 = vpop.permute.xlu0 %2009
        %2013 = vset.pattern.permute.xlu0 0
        %2014 = vperm.xlu0 %2013, %v1588
        %v2015 = vpop.permute.xlu0 %2014
        %2018 = vset.pattern.permute.xlu0 0
        %2019 = vperm.xlu0 %2018, %v1590
        %v2020 = vpop.permute.xlu0 %2019
        %2023 = vset.pattern.permute.xlu0 0
        %2024 = vperm.xlu0 %2023, %v1592
        %v2025 = vpop.permute.xlu0 %2024
        %2028 = vset.pattern.permute.xlu0 0
        %2029 = vperm.xlu0 %2028, %v1594
        %v2030 = vpop.permute.xlu0 %2029
        %2033 = vset.pattern.permute.xlu0 0
        %2034 = vperm.xlu0 %2033, %v1596
        %v2035 = vpop.permute.xlu0 %2034
        %2038 = vset.pattern.permute.xlu0 0
        %2039 = vperm.xlu0 %2038, %v1598
        %v2040 = vpop.permute.xlu0 %2039
        %2043 = vset.pattern.permute.xlu0 0
        %2044 = vperm.xlu0 %2043, %v1600
        %v2045 = vpop.permute.xlu0 %2044
        %2048 = vset.pattern.permute.xlu0 0
        %2049 = vperm.xlu0 %2048, %v1602
        %v2050 = vpop.permute.xlu0 %2049
        %2053 = vset.pattern.permute.xlu0 0
        %2054 = vperm.xlu0 %2053, %v1604
        %v2055 = vpop.permute.xlu0 %2054
        %2058 = vset.pattern.permute.xlu0 0
        %2059 = vperm.xlu0 %2058, %v1606
        %v2060 = vpop.permute.xlu0 %2059
        %2063 = vset.pattern.permute.xlu0 0
        %2064 = vperm.xlu0 %2063, %v1608
        %v2065 = vpop.permute.xlu0 %2064
        %v2067 = vmul.f32 %v1990, %v1971
        %v2068 = vmul.f32 %v1995, %v1972
        %v2069 = vmul.f32 %v2000, %v1973
        %v2070 = vmul.f32 %v2005, %v1974
        %v2071 = vmul.f32 %v2010, %v1975
        %v2072 = vmul.f32 %v2015, %v1976
        %v2073 = vmul.f32 %v2020, %v1977
        %v2074 = vmul.f32 %v2025, %v1978
        %v2075 = vmul.f32 %v2030, %v1979
        %v2076 = vmul.f32 %v2035, %v1980
        %v2077 = vmul.f32 %v2040, %v1981
        %v2078 = vmul.f32 %v2045, %v1982
        %v2079 = vmul.f32 %v2050, %v1983
        %v2080 = vmul.f32 %v2055, %v1984
        %v2081 = vmul.f32 %v2060, %v1985
        %v2082 = vmul.f32 %v2065, %v1986
        %v2083 = vadd.f32 %v2067, %v1909
        %v2084 = vadd.f32 %v2068, %v1912
        %v2085 = vadd.f32 %v2069, %v1917
        %v2086 = vadd.f32 %v2070, %v1920
        %v2087 = vadd.f32 %v2071, %v1925
        %v2088 = vadd.f32 %v2072, %v1928
        %v2089 = vadd.f32 %v2073, %v1933
        %v2090 = vadd.f32 %v2074, %v1936
        %v2091 = vadd.f32 %v2075, %v1941
        %v2092 = vadd.f32 %v2076, %v1944
        %v2093 = vadd.f32 %v2077, %v1949
        %v2094 = vadd.f32 %v2078, %v1952
        %v2095 = vadd.f32 %v2079, %v1957
        %v2096 = vadd.f32 %v2080, %v1960
        %v2097 = vadd.f32 %v2081, %v1965
        %v2098 = vadd.f32 %v2082, %v1968
        %2099 = vst [vmem:[#allocation4 + $0x8] sm:$0xff] %v2083
        %2100 = vst [vmem:[#allocation4 + $0x18] sm:$0xff] %v2084
        %2101 = vst [vmem:[#allocation4 + $0x28] sm:$0xff] %v2085
        %2102 = vst [vmem:[#allocation4 + $0x38] sm:$0xff] %v2086
        %2103 = vst [vmem:[#allocation4 + $0x48] sm:$0xff] %v2087
        %2104 = vst [vmem:[#allocation4 + $0x58] sm:$0xff] %v2088
        %2105 = vst [vmem:[#allocation4 + $0x68] sm:$0xff] %v2089
        %2106 = vst [vmem:[#allocation4 + $0x78] sm:$0xff] %v2090
        %2107 = vst [vmem:[#allocation4 + $0x88] sm:$0xff] %v2091
        %2108 = vst [vmem:[#allocation4 + $0x98] sm:$0xff] %v2092
        %2109 = vst [vmem:[#allocation4 + $0xa8] sm:$0xff] %v2093
        %2110 = vst [vmem:[#allocation4 + $0xb8] sm:$0xff] %v2094
        %2111 = vst [vmem:[#allocation4 + $0xc8] sm:$0xff] %v2095
        %2112 = vst [vmem:[#allocation4 + $0xd8] sm:$0xff] %v2096
        %2113 = vst [vmem:[#allocation4 + $0xe8] sm:$0xff] %v2097
        %2114 = vst [vmem:[#allocation4 + $0xf8] sm:$0xff] %v2098
        %2115 = vst.msk [vmem:[%s1496] sm:$0xff] %vm1005, %v1545
        %2116 = vst.msk [vmem:[%s1496 + $0x8] sm:$0xff] %vm1005, %v1546
        %2117 = vst.msk [vmem:[%s1496 + $0x10] sm:$0xff] %vm1005, %v1547
        %2118 = vst.msk [vmem:[%s1496 + $0x18] sm:$0xff] %vm1005, %v1548
        %2119 = vst.msk [vmem:[%s1496 + $0x20] sm:$0xff] %vm1005, %v1549
        %2120 = vst.msk [vmem:[%s1496 + $0x28] sm:$0xff] %vm1005, %v1550
        %2121 = vst.msk [vmem:[%s1496 + $0x30] sm:$0xff] %vm1005, %v1551
        %2122 = vst.msk [vmem:[%s1496 + $0x38] sm:$0xff] %vm1005, %v1552
        %2123 = vst.msk [vmem:[%s1496 + $0x40] sm:$0xff] %vm1005, %v1553
        %2124 = vst.msk [vmem:[%s1496 + $0x48] sm:$0xff] %vm1005, %v1554
        %2125 = vst.msk [vmem:[%s1496 + $0x50] sm:$0xff] %vm1005, %v1555
        %2126 = vst.msk [vmem:[%s1496 + $0x58] sm:$0xff] %vm1005, %v1556
        %2127 = vst.msk [vmem:[%s1496 + $0x60] sm:$0xff] %vm1005, %v1557
        %2128 = vst.msk [vmem:[%s1496 + $0x68] sm:$0xff] %vm1005, %v1558
        %2129 = vst.msk [vmem:[%s1496 + $0x70] sm:$0xff] %vm1005, %v1559
        %2130 = vst.msk [vmem:[%s1496 + $0x78] sm:$0xff] %vm1005, %v1560
        // Predicated region
        $region45: #{wan_self_attention.3} parent=39 // pred_check
          %p2131 = pneg %p343
        $region46: #{wan_self_attention.3} parent=39 // pred_check_branch
          %2133 = sbr.rel (%p2131) target = $region48
        $region47: #{wan_self_attention.3} parent=39 // pred_region
          %v2134 = vld [vmem:[#allocation4] sm:$0xff]
          %v2135 = vld [vmem:[#allocation4 + $0x10] sm:$0xff]
          %v2136 = vld [vmem:[#allocation4 + $0x20] sm:$0xff]
          %v2137 = vld [vmem:[#allocation4 + $0x30] sm:$0xff]
          %v2138 = vld [vmem:[#allocation4 + $0x40] sm:$0xff]
          %v2139 = vld [vmem:[#allocation4 + $0x50] sm:$0xff]
          %v2140 = vld [vmem:[#allocation4 + $0x60] sm:$0xff]
          %v2141 = vld [vmem:[#allocation4 + $0x70] sm:$0xff]
          %v2142 = vld [vmem:[#allocation4 + $0x80] sm:$0xff]
          %v2143 = vld [vmem:[#allocation4 + $0x90] sm:$0xff]
          %v2144 = vld [vmem:[#allocation4 + $0xa0] sm:$0xff]
          %v2145 = vld [vmem:[#allocation4 + $0xb0] sm:$0xff]
          %v2146 = vld [vmem:[#allocation4 + $0xc0] sm:$0xff]
          %v2147 = vld [vmem:[#allocation4 + $0xd0] sm:$0xff]
          %v2148 = vld [vmem:[#allocation4 + $0xe0] sm:$0xff]
          %v2149 = vld [vmem:[#allocation4 + $0xf0] sm:$0xff]
          %v2150 = vld [vmem:[#allocation3] sm:$0xff]
          %v2151 = vld [vmem:[#allocation3 + $0x8] sm:$0xff]
          %v2152 = vld [vmem:[#allocation3 + $0x10] sm:$0xff]
          %v2153 = vld [vmem:[#allocation3 + $0x18] sm:$0xff]
          %v2154 = vld [vmem:[#allocation3 + $0x20] sm:$0xff]
          %v2155 = vld [vmem:[#allocation3 + $0x28] sm:$0xff]
          %v2156 = vld [vmem:[#allocation3 + $0x30] sm:$0xff]
          %v2157 = vld [vmem:[#allocation3 + $0x38] sm:$0xff]
          %v2158 = vld [vmem:[#allocation3 + $0x40] sm:$0xff]
          %v2159 = vld [vmem:[#allocation3 + $0x48] sm:$0xff]
          %v2160 = vld [vmem:[#allocation3 + $0x50] sm:$0xff]
          %v2161 = vld [vmem:[#allocation3 + $0x58] sm:$0xff]
          %v2162 = vld [vmem:[#allocation3 + $0x60] sm:$0xff]
          %v2163 = vld [vmem:[#allocation3 + $0x68] sm:$0xff]
          %v2164 = vld [vmem:[#allocation3 + $0x70] sm:$0xff]
          %v2165 = vld [vmem:[#allocation3 + $0x78] sm:$0xff]
          %v2166 = vrcp.pop %v2150
          %v2167 = vmul.f32 1.0, %v2166
          %v2168 = vrcp.pop %v2151
          %v2169 = vmul.f32 1.0, %v2168
          %v2170 = vrcp.pop %v2152
          %v2171 = vmul.f32 1.0, %v2170
          %v2172 = vrcp.pop %v2153
          %v2173 = vmul.f32 1.0, %v2172
          %v2174 = vrcp.pop %v2154
          %v2175 = vmul.f32 1.0, %v2174
          %v2176 = vrcp.pop %v2155
          %v2177 = vmul.f32 1.0, %v2176
          %v2178 = vrcp.pop %v2156
          %v2179 = vmul.f32 1.0, %v2178
          %v2180 = vrcp.pop %v2157
          %v2181 = vmul.f32 1.0, %v2180
          %v2182 = vrcp.pop %v2158
          %v2183 = vmul.f32 1.0, %v2182
          %v2184 = vrcp.pop %v2159
          %v2185 = vmul.f32 1.0, %v2184
          %v2186 = vrcp.pop %v2160
          %v2187 = vmul.f32 1.0, %v2186
          %v2188 = vrcp.pop %v2161
          %v2189 = vmul.f32 1.0, %v2188
          %v2190 = vrcp.pop %v2162
          %v2191 = vmul.f32 1.0, %v2190
          %v2192 = vrcp.pop %v2163
          %v2193 = vmul.f32 1.0, %v2192
          %v2194 = vrcp.pop %v2164
          %v2195 = vmul.f32 1.0, %v2194
          %v2196 = vrcp.pop %v2165
          %v2197 = vmul.f32 1.0, %v2196
          %2199 = vset.pattern.permute.xlu0 0
          %2200 = vperm.xlu0 %2199, %v2167
          %v2201 = vpop.permute.xlu0 %2200
          %2204 = vset.pattern.permute.xlu0 0
          %2205 = vperm.xlu0 %2204, %v2169
          %v2206 = vpop.permute.xlu0 %2205
          %2209 = vset.pattern.permute.xlu0 0
          %2210 = vperm.xlu0 %2209, %v2171
          %v2211 = vpop.permute.xlu0 %2210
          %2214 = vset.pattern.permute.xlu0 0
          %2215 = vperm.xlu0 %2214, %v2173
          %v2216 = vpop.permute.xlu0 %2215
          %2219 = vset.pattern.permute.xlu0 0
          %2220 = vperm.xlu0 %2219, %v2175
          %v2221 = vpop.permute.xlu0 %2220
          %2224 = vset.pattern.permute.xlu0 0
          %2225 = vperm.xlu0 %2224, %v2177
          %v2226 = vpop.permute.xlu0 %2225
          %2229 = vset.pattern.permute.xlu0 0
          %2230 = vperm.xlu0 %2229, %v2179
          %v2231 = vpop.permute.xlu0 %2230
          %2234 = vset.pattern.permute.xlu0 0
          %2235 = vperm.xlu0 %2234, %v2181
          %v2236 = vpop.permute.xlu0 %2235
          %2239 = vset.pattern.permute.xlu0 0
          %2240 = vperm.xlu0 %2239, %v2183
          %v2241 = vpop.permute.xlu0 %2240
          %2244 = vset.pattern.permute.xlu0 0
          %2245 = vperm.xlu0 %2244, %v2185
          %v2246 = vpop.permute.xlu0 %2245
          %2249 = vset.pattern.permute.xlu0 0
          %2250 = vperm.xlu0 %2249, %v2187
          %v2251 = vpop.permute.xlu0 %2250
          %2254 = vset.pattern.permute.xlu0 0
          %2255 = vperm.xlu0 %2254, %v2189
          %v2256 = vpop.permute.xlu0 %2255
          %2259 = vset.pattern.permute.xlu0 0
          %2260 = vperm.xlu0 %2259, %v2191
          %v2261 = vpop.permute.xlu0 %2260
          %2264 = vset.pattern.permute.xlu0 0
          %2265 = vperm.xlu0 %2264, %v2193
          %v2266 = vpop.permute.xlu0 %2265
          %2269 = vset.pattern.permute.xlu0 0
          %2270 = vperm.xlu0 %2269, %v2195
          %v2271 = vpop.permute.xlu0 %2270
          %2274 = vset.pattern.permute.xlu0 0
          %2275 = vperm.xlu0 %2274, %v2197
          %v2276 = vpop.permute.xlu0 %2275
          %v2278 = vmul.f32 %v2134, %v2201
          %v2279 = vmul.f32 %v2135, %v2206
          %v2280 = vmul.f32 %v2136, %v2211
          %v2281 = vmul.f32 %v2137, %v2216
          %v2282 = vmul.f32 %v2138, %v2221
          %v2283 = vmul.f32 %v2139, %v2226
          %v2284 = vmul.f32 %v2140, %v2231
          %v2285 = vmul.f32 %v2141, %v2236
          %v2286 = vmul.f32 %v2142, %v2241
          %v2287 = vmul.f32 %v2143, %v2246
          %v2288 = vmul.f32 %v2144, %v2251
          %v2289 = vmul.f32 %v2145, %v2256
          %v2290 = vmul.f32 %v2146, %v2261
          %v2291 = vmul.f32 %v2147, %v2266
          %v2292 = vmul.f32 %v2148, %v2271
          %v2293 = vmul.f32 %v2149, %v2276
          %2294 = vst [vmem:[#allocation4] sm:$0xff] %v2278
          %2295 = vst [vmem:[#allocation4 + $0x10] sm:$0xff] %v2279
          %2296 = vst [vmem:[#allocation4 + $0x20] sm:$0xff] %v2280
          %2297 = vst [vmem:[#allocation4 + $0x30] sm:$0xff] %v2281
          %2298 = vst [vmem:[#allocation4 + $0x40] sm:$0xff] %v2282
          %2299 = vst [vmem:[#allocation4 + $0x50] sm:$0xff] %v2283
          %2300 = vst [vmem:[#allocation4 + $0x60] sm:$0xff] %v2284
          %2301 = vst [vmem:[#allocation4 + $0x70] sm:$0xff] %v2285
          %2302 = vst [vmem:[#allocation4 + $0x80] sm:$0xff] %v2286
          %2303 = vst [vmem:[#allocation4 + $0x90] sm:$0xff] %v2287
          %2304 = vst [vmem:[#allocation4 + $0xa0] sm:$0xff] %v2288
          %2305 = vst [vmem:[#allocation4 + $0xb0] sm:$0xff] %v2289
          %2306 = vst [vmem:[#allocation4 + $0xc0] sm:$0xff] %v2290
          %2307 = vst [vmem:[#allocation4 + $0xd0] sm:$0xff] %v2291
          %2308 = vst [vmem:[#allocation4 + $0xe0] sm:$0xff] %v2292
          %2309 = vst [vmem:[#allocation4 + $0xf0] sm:$0xff] %v2293
          %v2310 = vld [vmem:[#allocation4 + $0x8] sm:$0xff]
          %v2311 = vld [vmem:[#allocation4 + $0x18] sm:$0xff]
          %v2312 = vld [vmem:[#allocation4 + $0x28] sm:$0xff]
          %v2313 = vld [vmem:[#allocation4 + $0x38] sm:$0xff]
          %v2314 = vld [vmem:[#allocation4 + $0x48] sm:$0xff]
          %v2315 = vld [vmem:[#allocation4 + $0x58] sm:$0xff]
          %v2316 = vld [vmem:[#allocation4 + $0x68] sm:$0xff]
          %v2317 = vld [vmem:[#allocation4 + $0x78] sm:$0xff]
          %v2318 = vld [vmem:[#allocation4 + $0x88] sm:$0xff]
          %v2319 = vld [vmem:[#allocation4 + $0x98] sm:$0xff]
          %v2320 = vld [vmem:[#allocation4 + $0xa8] sm:$0xff]
          %v2321 = vld [vmem:[#allocation4 + $0xb8] sm:$0xff]
          %v2322 = vld [vmem:[#allocation4 + $0xc8] sm:$0xff]
          %v2323 = vld [vmem:[#allocation4 + $0xd8] sm:$0xff]
          %v2324 = vld [vmem:[#allocation4 + $0xe8] sm:$0xff]
          %v2325 = vld [vmem:[#allocation4 + $0xf8] sm:$0xff]
          %v2326 = vld [vmem:[%s1737] sm:$0xff]
          %v2327 = vld [vmem:[%s1737 + $0x8] sm:$0xff]
          %v2328 = vld [vmem:[%s1737 + $0x10] sm:$0xff]
          %v2329 = vld [vmem:[%s1737 + $0x18] sm:$0xff]
          %v2330 = vld [vmem:[%s1737 + $0x20] sm:$0xff]
          %v2331 = vld [vmem:[%s1737 + $0x28] sm:$0xff]
          %v2332 = vld [vmem:[%s1737 + $0x30] sm:$0xff]
          %v2333 = vld [vmem:[%s1737 + $0x38] sm:$0xff]
          %v2334 = vld [vmem:[%s1737 + $0x40] sm:$0xff]
          %v2335 = vld [vmem:[%s1737 + $0x48] sm:$0xff]
          %v2336 = vld [vmem:[%s1737 + $0x50] sm:$0xff]
          %v2337 = vld [vmem:[%s1737 + $0x58] sm:$0xff]
          %v2338 = vld [vmem:[%s1737 + $0x60] sm:$0xff]
          %v2339 = vld [vmem:[%s1737 + $0x68] sm:$0xff]
          %v2340 = vld [vmem:[%s1737 + $0x70] sm:$0xff]
          %v2341 = vld [vmem:[%s1737 + $0x78] sm:$0xff]
          %v2342 = vrcp.pop %v2326
          %v2343 = vmul.f32 1.0, %v2342
          %v2344 = vrcp.pop %v2327
          %v2345 = vmul.f32 1.0, %v2344
          %v2346 = vrcp.pop %v2328
          %v2347 = vmul.f32 1.0, %v2346
          %v2348 = vrcp.pop %v2329
          %v2349 = vmul.f32 1.0, %v2348
          %v2350 = vrcp.pop %v2330
          %v2351 = vmul.f32 1.0, %v2350
          %v2352 = vrcp.pop %v2331
          %v2353 = vmul.f32 1.0, %v2352
          %v2354 = vrcp.pop %v2332
          %v2355 = vmul.f32 1.0, %v2354
          %v2356 = vrcp.pop %v2333
          %v2357 = vmul.f32 1.0, %v2356
          %v2358 = vrcp.pop %v2334
          %v2359 = vmul.f32 1.0, %v2358
          %v2360 = vrcp.pop %v2335
          %v2361 = vmul.f32 1.0, %v2360
          %v2362 = vrcp.pop %v2336
          %v2363 = vmul.f32 1.0, %v2362
          %v2364 = vrcp.pop %v2337
          %v2365 = vmul.f32 1.0, %v2364
          %v2366 = vrcp.pop %v2338
          %v2367 = vmul.f32 1.0, %v2366
          %v2368 = vrcp.pop %v2339
          %v2369 = vmul.f32 1.0, %v2368
          %v2370 = vrcp.pop %v2340
          %v2371 = vmul.f32 1.0, %v2370
          %v2372 = vrcp.pop %v2341
          %v2373 = vmul.f32 1.0, %v2372
          %2375 = vset.pattern.permute.xlu0 0
          %2376 = vperm.xlu0 %2375, %v2343
          %v2377 = vpop.permute.xlu0 %2376
          %2380 = vset.pattern.permute.xlu0 0
          %2381 = vperm.xlu0 %2380, %v2345
          %v2382 = vpop.permute.xlu0 %2381
          %2385 = vset.pattern.permute.xlu0 0
          %2386 = vperm.xlu0 %2385, %v2347
          %v2387 = vpop.permute.xlu0 %2386
          %2390 = vset.pattern.permute.xlu0 0
          %2391 = vperm.xlu0 %2390, %v2349
          %v2392 = vpop.permute.xlu0 %2391
          %2395 = vset.pattern.permute.xlu0 0
          %2396 = vperm.xlu0 %2395, %v2351
          %v2397 = vpop.permute.xlu0 %2396
          %2400 = vset.pattern.permute.xlu0 0
          %2401 = vperm.xlu0 %2400, %v2353
          %v2402 = vpop.permute.xlu0 %2401
          %2405 = vset.pattern.permute.xlu0 0
          %2406 = vperm.xlu0 %2405, %v2355
          %v2407 = vpop.permute.xlu0 %2406
          %2410 = vset.pattern.permute.xlu0 0
          %2411 = vperm.xlu0 %2410, %v2357
          %v2412 = vpop.permute.xlu0 %2411
          %2415 = vset.pattern.permute.xlu0 0
          %2416 = vperm.xlu0 %2415, %v2359
          %v2417 = vpop.permute.xlu0 %2416
          %2420 = vset.pattern.permute.xlu0 0
          %2421 = vperm.xlu0 %2420, %v2361
          %v2422 = vpop.permute.xlu0 %2421
          %2425 = vset.pattern.permute.xlu0 0
          %2426 = vperm.xlu0 %2425, %v2363
          %v2427 = vpop.permute.xlu0 %2426
          %2430 = vset.pattern.permute.xlu0 0
          %2431 = vperm.xlu0 %2430, %v2365
          %v2432 = vpop.permute.xlu0 %2431
          %2435 = vset.pattern.permute.xlu0 0
          %2436 = vperm.xlu0 %2435, %v2367
          %v2437 = vpop.permute.xlu0 %2436
          %2440 = vset.pattern.permute.xlu0 0
          %2441 = vperm.xlu0 %2440, %v2369
          %v2442 = vpop.permute.xlu0 %2441
          %2445 = vset.pattern.permute.xlu0 0
          %2446 = vperm.xlu0 %2445, %v2371
          %v2447 = vpop.permute.xlu0 %2446
          %2450 = vset.pattern.permute.xlu0 0
          %2451 = vperm.xlu0 %2450, %v2373
          %v2452 = vpop.permute.xlu0 %2451
          %v2454 = vmul.f32 %v2310, %v2377
          %v2455 = vmul.f32 %v2311, %v2382
          %v2456 = vmul.f32 %v2312, %v2387
          %v2457 = vmul.f32 %v2313, %v2392
          %v2458 = vmul.f32 %v2314, %v2397
          %v2459 = vmul.f32 %v2315, %v2402
          %v2460 = vmul.f32 %v2316, %v2407
          %v2461 = vmul.f32 %v2317, %v2412
          %v2462 = vmul.f32 %v2318, %v2417
          %v2463 = vmul.f32 %v2319, %v2422
          %v2464 = vmul.f32 %v2320, %v2427
          %v2465 = vmul.f32 %v2321, %v2432
          %v2466 = vmul.f32 %v2322, %v2437
          %v2467 = vmul.f32 %v2323, %v2442
          %v2468 = vmul.f32 %v2324, %v2447
          %v2469 = vmul.f32 %v2325, %v2452
          %2470 = vst [vmem:[#allocation4 + $0x8] sm:$0xff] %v2454
          %2471 = vst [vmem:[#allocation4 + $0x18] sm:$0xff] %v2455
          %2472 = vst [vmem:[#allocation4 + $0x28] sm:$0xff] %v2456
          %2473 = vst [vmem:[#allocation4 + $0x38] sm:$0xff] %v2457
          %2474 = vst [vmem:[#allocation4 + $0x48] sm:$0xff] %v2458
          %2475 = vst [vmem:[#allocation4 + $0x58] sm:$0xff] %v2459
          %2476 = vst [vmem:[#allocation4 + $0x68] sm:$0xff] %v2460
          %2477 = vst [vmem:[#allocation4 + $0x78] sm:$0xff] %v2461
          %2478 = vst [vmem:[#allocation4 + $0x88] sm:$0xff] %v2462
          %2479 = vst [vmem:[#allocation4 + $0x98] sm:$0xff] %v2463
          %2480 = vst [vmem:[#allocation4 + $0xa8] sm:$0xff] %v2464
          %2481 = vst [vmem:[#allocation4 + $0xb8] sm:$0xff] %v2465
          %2482 = vst [vmem:[#allocation4 + $0xc8] sm:$0xff] %v2466
          %2483 = vst [vmem:[#allocation4 + $0xd8] sm:$0xff] %v2467
          %2484 = vst [vmem:[#allocation4 + $0xe8] sm:$0xff] %v2468
          %2485 = vst [vmem:[#allocation4 + $0xf8] sm:$0xff] %v2469
          %v2486 = vld [vmem:[#allocation4] sm:$0xff]
          %v2487 = vld [vmem:[#allocation4 + $0x8] sm:$0xff]
          %v2488 = vld [vmem:[#allocation4 + $0x10] sm:$0xff]
          %v2489 = vld [vmem:[#allocation4 + $0x18] sm:$0xff]
          %v2490 = vld [vmem:[#allocation4 + $0x20] sm:$0xff]
          %v2491 = vld [vmem:[#allocation4 + $0x28] sm:$0xff]
          %v2492 = vld [vmem:[#allocation4 + $0x30] sm:$0xff]
          %v2493 = vld [vmem:[#allocation4 + $0x38] sm:$0xff]
          %v2494 = vld [vmem:[#allocation4 + $0x40] sm:$0xff]
          %v2495 = vld [vmem:[#allocation4 + $0x48] sm:$0xff]
          %v2496 = vld [vmem:[#allocation4 + $0x50] sm:$0xff]
          %v2497 = vld [vmem:[#allocation4 + $0x58] sm:$0xff]
          %v2498 = vld [vmem:[#allocation4 + $0x60] sm:$0xff]
          %v2499 = vld [vmem:[#allocation4 + $0x68] sm:$0xff]
          %v2500 = vld [vmem:[#allocation4 + $0x70] sm:$0xff]
          %v2501 = vld [vmem:[#allocation4 + $0x78] sm:$0xff]
          %v2502 = vld [vmem:[#allocation4 + $0x80] sm:$0xff]
          %v2503 = vld [vmem:[#allocation4 + $0x88] sm:$0xff]
          %v2504 = vld [vmem:[#allocation4 + $0x90] sm:$0xff]
          %v2505 = vld [vmem:[#allocation4 + $0x98] sm:$0xff]
          %v2506 = vld [vmem:[#allocation4 + $0xa0] sm:$0xff]
          %v2507 = vld [vmem:[#allocation4 + $0xa8] sm:$0xff]
          %v2508 = vld [vmem:[#allocation4 + $0xb0] sm:$0xff]
          %v2509 = vld [vmem:[#allocation4 + $0xb8] sm:$0xff]
          %v2510 = vld [vmem:[#allocation4 + $0xc0] sm:$0xff]
          %v2511 = vld [vmem:[#allocation4 + $0xc8] sm:$0xff]
          %v2512 = vld [vmem:[#allocation4 + $0xd0] sm:$0xff]
          %v2513 = vld [vmem:[#allocation4 + $0xd8] sm:$0xff]
          %v2514 = vld [vmem:[#allocation4 + $0xe0] sm:$0xff]
          %v2515 = vld [vmem:[#allocation4 + $0xe8] sm:$0xff]
          %v2516 = vld [vmem:[#allocation4 + $0xf0] sm:$0xff]
          %v2517 = vld [vmem:[#allocation4 + $0xf8] sm:$0xff]
          %v2518 = vpack.c.bf16 %v2488, %v2486
          %v2519 = vpack.c.bf16 %v2489, %v2487
          %v2520 = vpack.c.bf16 %v2492, %v2490
          %v2521 = vpack.c.bf16 %v2493, %v2491
          %v2522 = vpack.c.bf16 %v2496, %v2494
          %v2523 = vpack.c.bf16 %v2497, %v2495
          %v2524 = vpack.c.bf16 %v2500, %v2498
          %v2525 = vpack.c.bf16 %v2501, %v2499
          %v2526 = vpack.c.bf16 %v2504, %v2502
          %v2527 = vpack.c.bf16 %v2505, %v2503
          %v2528 = vpack.c.bf16 %v2508, %v2506
          %v2529 = vpack.c.bf16 %v2509, %v2507
          %v2530 = vpack.c.bf16 %v2512, %v2510
          %v2531 = vpack.c.bf16 %v2513, %v2511
          %v2532 = vpack.c.bf16 %v2516, %v2514
          %v2533 = vpack.c.bf16 %v2517, %v2515
          %v2534 = vld [vmem:[%s3] sm:$0xff]
          %v2535 = vld [vmem:[%s3 + $0x8] sm:$0xff]
          %v2536 = vld [vmem:[%s3 + $0x10] sm:$0xff]
          %v2537 = vld [vmem:[%s3 + $0x18] sm:$0xff]
          %v2538 = vld [vmem:[%s3 + $0x20] sm:$0xff]
          %v2539 = vld [vmem:[%s3 + $0x28] sm:$0xff]
          %v2540 = vld [vmem:[%s3 + $0x30] sm:$0xff]
          %v2541 = vld [vmem:[%s3 + $0x38] sm:$0xff]
          %v2542 = vld [vmem:[%s3 + $0x40] sm:$0xff]
          %v2543 = vld [vmem:[%s3 + $0x48] sm:$0xff]
          %v2544 = vld [vmem:[%s3 + $0x50] sm:$0xff]
          %v2545 = vld [vmem:[%s3 + $0x58] sm:$0xff]
          %v2546 = vld [vmem:[%s3 + $0x60] sm:$0xff]
          %v2547 = vld [vmem:[%s3 + $0x68] sm:$0xff]
          %v2548 = vld [vmem:[%s3 + $0x70] sm:$0xff]
          %v2549 = vld [vmem:[%s3 + $0x78] sm:$0xff]
          %v2550 = vld [vmem:[%s3 + $0x80] sm:$0xff]
          %v2551 = vld [vmem:[%s3 + $0x88] sm:$0xff]
          %v2552 = vld [vmem:[%s3 + $0x90] sm:$0xff]
          %v2553 = vld [vmem:[%s3 + $0x98] sm:$0xff]
          %v2554 = vld [vmem:[%s3 + $0xa0] sm:$0xff]
          %v2555 = vld [vmem:[%s3 + $0xa8] sm:$0xff]
          %v2556 = vld [vmem:[%s3 + $0xb0] sm:$0xff]
          %v2557 = vld [vmem:[%s3 + $0xb8] sm:$0xff]
          %v2558 = vld [vmem:[%s3 + $0xc0] sm:$0xff]
          %v2559 = vld [vmem:[%s3 + $0xc8] sm:$0xff]
          %v2560 = vld [vmem:[%s3 + $0xd0] sm:$0xff]
          %v2561 = vld [vmem:[%s3 + $0xd8] sm:$0xff]
          %v2562 = vld [vmem:[%s3 + $0xe0] sm:$0xff]
          %v2563 = vld [vmem:[%s3 + $0xe8] sm:$0xff]
          %v2564 = vld [vmem:[%s3 + $0xf0] sm:$0xff]
          %v2565 = vld [vmem:[%s3 + $0xf8] sm:$0xff]
          %v2566 = vld [vmem:[%s4] sm:$0x3]
          %v2568 = vlaneseq
          %v2569 = vshrl.u32 %v2568, 7
          %v2570 = vsub.s32 0, %v2569
          %v2571 = vrot.slane %v2566, %v2570
          %v2572 = vlaneseq
          %v2573 = vshrl.u32 %v2572, 7
          %v2574 = vsub.s32 1, %v2573
          %v2575 = vrot.slane %v2566, %v2574
          %v2610 = vunpack.c.l.b16 %v2534
          %v2611 = vunpack.c.h.b16 %v2534
          %v2612 = vunpack.c.l.b16 %v2535
          %v2613 = vunpack.c.h.b16 %v2535
          %v2614 = vunpack.c.l.b16 %v2536
          %v2615 = vunpack.c.h.b16 %v2536
          %v2616 = vunpack.c.l.b16 %v2537
          %v2617 = vunpack.c.h.b16 %v2537
          %v2618 = vunpack.c.l.b16 %v2538
          %v2619 = vunpack.c.h.b16 %v2538
          %v2620 = vunpack.c.l.b16 %v2539
          %v2621 = vunpack.c.h.b16 %v2539
          %v2622 = vunpack.c.l.b16 %v2540
          %v2623 = vunpack.c.h.b16 %v2540
          %v2624 = vunpack.c.l.b16 %v2541
          %v2625 = vunpack.c.h.b16 %v2541
          %v2626 = vunpack.c.l.b16 %v2542
          %v2627 = vunpack.c.h.b16 %v2542
          %v2628 = vunpack.c.l.b16 %v2543
          %v2629 = vunpack.c.h.b16 %v2543
          %v2630 = vunpack.c.l.b16 %v2544
          %v2631 = vunpack.c.h.b16 %v2544
          %v2632 = vunpack.c.l.b16 %v2545
          %v2633 = vunpack.c.h.b16 %v2545
          %v2634 = vunpack.c.l.b16 %v2546
          %v2635 = vunpack.c.h.b16 %v2546
          %v2636 = vunpack.c.l.b16 %v2547
          %v2637 = vunpack.c.h.b16 %v2547
          %v2638 = vunpack.c.l.b16 %v2548
          %v2639 = vunpack.c.h.b16 %v2548
          %v2640 = vunpack.c.l.b16 %v2549
          %v2641 = vunpack.c.h.b16 %v2549
          %v2642 = vunpack.c.l.b16 %v2550
          %v2643 = vunpack.c.h.b16 %v2550
          %v2644 = vunpack.c.l.b16 %v2551
          %v2645 = vunpack.c.h.b16 %v2551
          %v2646 = vunpack.c.l.b16 %v2552
          %v2647 = vunpack.c.h.b16 %v2552
          %v2648 = vunpack.c.l.b16 %v2553
          %v2649 = vunpack.c.h.b16 %v2553
          %v2650 = vunpack.c.l.b16 %v2554
          %v2651 = vunpack.c.h.b16 %v2554
          %v2652 = vunpack.c.l.b16 %v2555
          %v2653 = vunpack.c.h.b16 %v2555
          %v2654 = vunpack.c.l.b16 %v2556
          %v2655 = vunpack.c.h.b16 %v2556
          %v2656 = vunpack.c.l.b16 %v2557
          %v2657 = vunpack.c.h.b16 %v2557
          %v2658 = vunpack.c.l.b16 %v2558
          %v2659 = vunpack.c.h.b16 %v2558
          %v2660 = vunpack.c.l.b16 %v2559
          %v2661 = vunpack.c.h.b16 %v2559
          %v2662 = vunpack.c.l.b16 %v2560
          %v2663 = vunpack.c.h.b16 %v2560
          %v2664 = vunpack.c.l.b16 %v2561
          %v2665 = vunpack.c.h.b16 %v2561
          %v2666 = vunpack.c.l.b16 %v2562
          %v2667 = vunpack.c.h.b16 %v2562
          %v2668 = vunpack.c.l.b16 %v2563
          %v2669 = vunpack.c.h.b16 %v2563
          %v2670 = vunpack.c.l.b16 %v2564
          %v2671 = vunpack.c.h.b16 %v2564
          %v2672 = vunpack.c.l.b16 %v2565
          %v2673 = vunpack.c.h.b16 %v2565
          %v2674 = vpack.c.b16 %v2612, %v2610
          %v2675 = vpack.c.b16 %v2613, %v2611
          %v2676 = vpack.c.b16 %v2616, %v2614
          %v2677 = vpack.c.b16 %v2617, %v2615
          %v2678 = vpack.c.b16 %v2620, %v2618
          %v2679 = vpack.c.b16 %v2621, %v2619
          %v2680 = vpack.c.b16 %v2624, %v2622
          %v2681 = vpack.c.b16 %v2625, %v2623
          %v2682 = vpack.c.b16 %v2628, %v2626
          %v2683 = vpack.c.b16 %v2629, %v2627
          %v2684 = vpack.c.b16 %v2632, %v2630
          %v2685 = vpack.c.b16 %v2633, %v2631
          %v2686 = vpack.c.b16 %v2636, %v2634
          %v2687 = vpack.c.b16 %v2637, %v2635
          %v2688 = vpack.c.b16 %v2640, %v2638
          %v2689 = vpack.c.b16 %v2641, %v2639
          %v2690 = vpack.c.b16 %v2644, %v2642
          %v2691 = vpack.c.b16 %v2645, %v2643
          %v2692 = vpack.c.b16 %v2648, %v2646
          %v2693 = vpack.c.b16 %v2649, %v2647
          %v2694 = vpack.c.b16 %v2652, %v2650
          %v2695 = vpack.c.b16 %v2653, %v2651
          %v2696 = vpack.c.b16 %v2656, %v2654
          %v2697 = vpack.c.b16 %v2657, %v2655
          %v2698 = vpack.c.b16 %v2660, %v2658
          %v2699 = vpack.c.b16 %v2661, %v2659
          %v2700 = vpack.c.b16 %v2664, %v2662
          %v2701 = vpack.c.b16 %v2665, %v2663
          %v2702 = vpack.c.b16 %v2668, %v2666
          %v2703 = vpack.c.b16 %v2669, %v2667
          %v2704 = vpack.c.b16 %v2672, %v2670
          %v2705 = vpack.c.b16 %v2673, %v2671
          %2738 = vmatprep.subr.bf16.mxu0 %v2675
          %2739 = vmatpush1.bf16.msra.mxu0 %v2674
          %2740 = vmatprep.subr.bf16.mxu0 %v2677
          %2741 = vmatpush1.bf16.msra.mxu0 %v2676
          %2742 = vmatprep.subr.bf16.mxu0 %v2679
          %2743 = vmatpush1.bf16.msra.mxu0 %v2678
          %2744 = vmatprep.subr.bf16.mxu0 %v2681
          %2745 = vmatpush1.bf16.msra.mxu0 %v2680
          %2746 = vmatprep.subr.bf16.mxu0 %v2683
          %2747 = vmatpush1.bf16.msra.mxu0 %v2682
          %2748 = vmatprep.subr.bf16.mxu0 %v2685
          %2749 = vmatpush1.bf16.msra.mxu0 %v2684
          %2750 = vmatprep.subr.bf16.mxu0 %v2687
          %2751 = vmatpush1.bf16.msra.mxu0 %v2686
          %2752 = vmatprep.subr.bf16.mxu0 %v2689
          %2753 = vmatpush1.bf16.msra.mxu0 %v2688
          %2754 = vmatprep.subr.bf16.mxu0 %v2691
          %2755 = vmatpush1.bf16.msra.mxu0 %v2690
          %2756 = vmatprep.subr.bf16.mxu0 %v2693
          %2757 = vmatpush1.bf16.msra.mxu0 %v2692
          %2758 = vmatprep.subr.bf16.mxu0 %v2695
          %2759 = vmatpush1.bf16.msra.mxu0 %v2694
          %2760 = vmatprep.subr.bf16.mxu0 %v2697
          %2761 = vmatpush1.bf16.msra.mxu0 %v2696
          %2762 = vmatprep.subr.bf16.mxu0 %v2699
          %2763 = vmatpush1.bf16.msra.mxu0 %v2698
          %2764 = vmatprep.subr.bf16.mxu0 %v2701
          %2765 = vmatpush1.bf16.msra.mxu0 %v2700
          %2766 = vmatprep.subr.bf16.mxu0 %v2703
          %2767 = vmatpush1.bf16.msra.mxu0 %v2702
          %2768 = vmatprep.subr.bf16.mxu0 %v2705
          %2769 = vmatpush1.bf16.msra.mxu0 %v2704
          %2770 = vmatprep.mubr.bf16.mxu0 %v2519
          %2771 = vmatmul.mubr.bf16.gmra.mrb[0].mxu0 %v2518
          %v2772 = vpop.f32.mrb[0].mxu0
          %v2773 = vadd.f32 %v2571, %v2772
          %v2774 = vpop.f32.mrb[0].mxu0
          %v2775 = vadd.f32 %v2575, %v2774
          %v2776 = vpop.f32.mrb[0].mxu0
          %v2777 = vadd.f32 %v2571, %v2776
          %v2778 = vpop.f32.mrb[0].mxu0
          %v2779 = vadd.f32 %v2575, %v2778
          %2780 = vmatprep.mubr.bf16.mxu0 %v2521
          %2781 = vmatmul.mubr.bf16.gmra.mrb[0].mxu0 %v2520
          %v2782 = vpop.f32.mrb[0].mxu0
          %v2783 = vadd.f32 %v2571, %v2782
          %v2784 = vpop.f32.mrb[0].mxu0
          %v2785 = vadd.f32 %v2575, %v2784
          %v2786 = vpop.f32.mrb[0].mxu0
          %v2787 = vadd.f32 %v2571, %v2786
          %v2788 = vpop.f32.mrb[0].mxu0
          %v2789 = vadd.f32 %v2575, %v2788
          %2790 = vmatprep.mubr.bf16.mxu0 %v2523
          %2791 = vmatmul.mubr.bf16.gmra.mrb[0].mxu0 %v2522
          %v2792 = vpop.f32.mrb[0].mxu0
          %v2793 = vadd.f32 %v2571, %v2792
          %v2794 = vpop.f32.mrb[0].mxu0
          %v2795 = vadd.f32 %v2575, %v2794
          %v2796 = vpop.f32.mrb[0].mxu0
          %v2797 = vadd.f32 %v2571, %v2796
          %v2798 = vpop.f32.mrb[0].mxu0
          %v2799 = vadd.f32 %v2575, %v2798
          %2800 = vmatprep.mubr.bf16.mxu0 %v2525
          %2801 = vmatmul.mubr.bf16.gmra.mrb[0].mxu0 %v2524
          %v2802 = vpop.f32.mrb[0].mxu0
          %v2803 = vadd.f32 %v2571, %v2802
          %v2804 = vpop.f32.mrb[0].mxu0
          %v2805 = vadd.f32 %v2575, %v2804
          %v2806 = vpop.f32.mrb[0].mxu0
          %v2807 = vadd.f32 %v2571, %v2806
          %v2808 = vpop.f32.mrb[0].mxu0
          %v2809 = vadd.f32 %v2575, %v2808
          %2810 = vmatprep.mubr.bf16.mxu0 %v2527
          %2811 = vmatmul.mubr.bf16.gmra.mrb[0].mxu0 %v2526
          %v2812 = vpop.f32.mrb[0].mxu0
          %v2813 = vadd.f32 %v2571, %v2812
          %v2814 = vpop.f32.mrb[0].mxu0
          %v2815 = vadd.f32 %v2575, %v2814
          %v2816 = vpop.f32.mrb[0].mxu0
          %v2817 = vadd.f32 %v2571, %v2816
          %v2818 = vpop.f32.mrb[0].mxu0
          %v2819 = vadd.f32 %v2575, %v2818
          %2820 = vmatprep.mubr.bf16.mxu0 %v2529
          %2821 = vmatmul.mubr.bf16.gmra.mrb[0].mxu0 %v2528
          %v2822 = vpop.f32.mrb[0].mxu0
          %v2823 = vadd.f32 %v2571, %v2822
          %v2824 = vpop.f32.mrb[0].mxu0
          %v2825 = vadd.f32 %v2575, %v2824
          %v2826 = vpop.f32.mrb[0].mxu0
          %v2827 = vadd.f32 %v2571, %v2826
          %v2828 = vpop.f32.mrb[0].mxu0
          %v2829 = vadd.f32 %v2575, %v2828
          %2830 = vmatprep.mubr.bf16.mxu0 %v2531
          %2831 = vmatmul.mubr.bf16.gmra.mrb[0].mxu0 %v2530
          %v2832 = vpop.f32.mrb[0].mxu0
          %v2833 = vadd.f32 %v2571, %v2832
          %v2834 = vpop.f32.mrb[0].mxu0
          %v2835 = vadd.f32 %v2575, %v2834
          %v2836 = vpop.f32.mrb[0].mxu0
          %v2837 = vadd.f32 %v2571, %v2836
          %v2838 = vpop.f32.mrb[0].mxu0
          %v2839 = vadd.f32 %v2575, %v2838
          %2840 = vmatprep.mubr.bf16.mxu0 %v2533
          %2841 = vmatmul.mubr.bf16.gmra.mrb[0].mxu0 %v2532
          %v2842 = vpop.f32.mrb[0].mxu0
          %v2843 = vadd.f32 %v2571, %v2842
          %v2844 = vpop.f32.mrb[0].mxu0
          %v2845 = vadd.f32 %v2575, %v2844
          %v2846 = vpop.f32.mrb[0].mxu0
          %v2847 = vadd.f32 %v2571, %v2846
          %v2848 = vpop.f32.mrb[0].mxu0
          %v2849 = vadd.f32 %v2575, %v2848
          %2850 = vdwg.mxu0
          %v2851 = vpack.c.bf16 %v2777, %v2773
          %v2852 = vpack.c.bf16 %v2779, %v2775
          %v2853 = vpack.c.bf16 %v2787, %v2783
          %v2854 = vpack.c.bf16 %v2789, %v2785
          %v2855 = vpack.c.bf16 %v2797, %v2793
          %v2856 = vpack.c.bf16 %v2799, %v2795
          %v2857 = vpack.c.bf16 %v2807, %v2803
          %v2858 = vpack.c.bf16 %v2809, %v2805
          %v2859 = vpack.c.bf16 %v2817, %v2813
          %v2860 = vpack.c.bf16 %v2819, %v2815
          %v2861 = vpack.c.bf16 %v2827, %v2823
          %v2862 = vpack.c.bf16 %v2829, %v2825
          %v2863 = vpack.c.bf16 %v2837, %v2833
          %v2864 = vpack.c.bf16 %v2839, %v2835
          %v2865 = vpack.c.bf16 %v2847, %v2843
          %v2866 = vpack.c.bf16 %v2849, %v2845
          %v2883 = vunpack.c.l.b16 %v2851
          %v2884 = vunpack.c.l.b16 %v2852
          %v2885 = vunpack.c.h.b16 %v2851
          %v2886 = vunpack.c.h.b16 %v2852
          %v2887 = vunpack.c.l.b16 %v2853
          %v2888 = vunpack.c.l.b16 %v2854
          %v2889 = vunpack.c.h.b16 %v2853
          %v2890 = vunpack.c.h.b16 %v2854
          %v2891 = vunpack.c.l.b16 %v2855
          %v2892 = vunpack.c.l.b16 %v2856
          %v2893 = vunpack.c.h.b16 %v2855
          %v2894 = vunpack.c.h.b16 %v2856
          %v2895 = vunpack.c.l.b16 %v2857
          %v2896 = vunpack.c.l.b16 %v2858
          %v2897 = vunpack.c.h.b16 %v2857
          %v2898 = vunpack.c.h.b16 %v2858
          %v2899 = vunpack.c.l.b16 %v2859
          %v2900 = vunpack.c.l.b16 %v2860
          %v2901 = vunpack.c.h.b16 %v2859
          %v2902 = vunpack.c.h.b16 %v2860
          %v2903 = vunpack.c.l.b16 %v2861
          %v2904 = vunpack.c.l.b16 %v2862
          %v2905 = vunpack.c.h.b16 %v2861
          %v2906 = vunpack.c.h.b16 %v2862
          %v2907 = vunpack.c.l.b16 %v2863
          %v2908 = vunpack.c.l.b16 %v2864
          %v2909 = vunpack.c.h.b16 %v2863
          %v2910 = vunpack.c.h.b16 %v2864
          %v2911 = vunpack.c.l.b16 %v2865
          %v2912 = vunpack.c.l.b16 %v2866
          %v2913 = vunpack.c.h.b16 %v2865
          %v2914 = vunpack.c.h.b16 %v2866
          %v2915 = vpack.c.b16 %v2884, %v2883
          %v2916 = vpack.c.b16 %v2886, %v2885
          %v2917 = vpack.c.b16 %v2888, %v2887
          %v2918 = vpack.c.b16 %v2890, %v2889
          %v2919 = vpack.c.b16 %v2892, %v2891
          %v2920 = vpack.c.b16 %v2894, %v2893
          %v2921 = vpack.c.b16 %v2896, %v2895
          %v2922 = vpack.c.b16 %v2898, %v2897
          %v2923 = vpack.c.b16 %v2900, %v2899
          %v2924 = vpack.c.b16 %v2902, %v2901
          %v2925 = vpack.c.b16 %v2904, %v2903
          %v2926 = vpack.c.b16 %v2906, %v2905
          %v2927 = vpack.c.b16 %v2908, %v2907
          %v2928 = vpack.c.b16 %v2910, %v2909
          %v2929 = vpack.c.b16 %v2912, %v2911
          %v2930 = vpack.c.b16 %v2914, %v2913
          %2947 = vst [vmem:[%s307] sm:$0xff] %v2915
          %2948 = vst [vmem:[%s307 + $0x8] sm:$0xff] %v2916
          %2949 = vst [vmem:[%s307 + $0x10] sm:$0xff] %v2917
          %2950 = vst [vmem:[%s307 + $0x18] sm:$0xff] %v2918
          %2951 = vst [vmem:[%s307 + $0x20] sm:$0xff] %v2919
          %2952 = vst [vmem:[%s307 + $0x28] sm:$0xff] %v2920
          %2953 = vst [vmem:[%s307 + $0x30] sm:$0xff] %v2921
          %2954 = vst [vmem:[%s307 + $0x38] sm:$0xff] %v2922
          %2955 = vst [vmem:[%s307 + $0x40] sm:$0xff] %v2923
          %2956 = vst [vmem:[%s307 + $0x48] sm:$0xff] %v2924
          %2957 = vst [vmem:[%s307 + $0x50] sm:$0xff] %v2925
          %2958 = vst [vmem:[%s307 + $0x58] sm:$0xff] %v2926
          %2959 = vst [vmem:[%s307 + $0x60] sm:$0xff] %v2927
          %2960 = vst [vmem:[%s307 + $0x68] sm:$0xff] %v2928
          %2961 = vst [vmem:[%s307 + $0x70] sm:$0xff] %v2929
          %2962 = vst [vmem:[%s307 + $0x78] sm:$0xff] %v2930
        $region48: #{wan_self_attention.3} parent=39 // pred_fallthru
          _
        %s2963 = sand.u32 %s174, 1
        %s2964 = scalar_lea.sflag [#allocation6], %s2963
        %s2965 = sand.u32 %s174, 1
        %s2966 = smul.addr %s2965, 128
        %s2967 = scalar_lea.vmem [#allocation5], %s2966
        // Predicated region
        $region49: #{wan_self_attention.3} parent=39 // pred_check
          %p2968 = pneg %p184
        $region50: #{wan_self_attention.3} parent=39 // pred_check_branch
          %2970 = sbr.rel (%p2968) target = $region52
        $region51: #{wan_self_attention.3} parent=39 // pred_region
          %s2971 = smul.u32 16, %s25
          %s2973 = ssub.s32 2048, 2048
          %2974 = vsyncadd %s2964, %s2973
          %s2975 = smul.addr %s2971, 2
          %s2976 = smul.addr %s24, 32
          %s2977 = sadd.s32 %s2975, %s2976
          %s2978 = smul.addr %s2977, 64
          %s2979 = scalar_lea.hbm %s5, %s2978
          %s2980 = sshll.u32 %s2967, 4
          %s2981 = int_to_ptr.vmem [resolvable:$true] %s2980
          %2986 = dma.vmem_to_hbm [thread:$0]  %s2981, 2048, %s2979, %s2964, 128, 128, 8
        $region52: #{wan_self_attention.3} parent=39 // pred_fallthru
          _
      $region40: #{wan_self_attention.3} parent=5 // pred_fallthru
        _
      %p2987 = scmp.le.s32.totalorder 2, %s14
      // Predicated region
      $region53: #{wan_self_attention.3} parent=5 // pred_check
        %p2988 = pneg %p2987
      $region54: #{wan_self_attention.3} parent=5 // pred_check_branch
        %2990 = sbr.rel (%p2988) target = $region56
      $region55: #{wan_self_attention.3} parent=5 // pred_region
        %s2991 = ssub.s32 %s14, 2
        // Predicated region
        $region57: #{wan_self_attention.3} parent=55 // pred_check
          %p2992 = pneg %p190
        $region58: #{wan_self_attention.3} parent=55 // pred_check_branch
          %2994 = sbr.rel (%p2992) target = $region60
        $region59: #{wan_self_attention.3} parent=55 // pred_region
          %s2995 = sand.u32 %s175, 1
          %s2996 = scalar_lea.sflag [#allocation6], %s2995
          %s2997 = sand.u32 %s175, 1
          %s2998 = smul.addr %s2997, 128
          %s2999 = scalar_lea.vmem [#allocation5], %s2998
          %3000 = dma.done %s2996, 2048
        $region60: #{wan_self_attention.3} parent=55 // pred_fallthru
          _
      $region56: #{wan_self_attention.3} parent=5 // pred_fallthru
        _
    $region6: #{wan_self_attention.3} parent=1 // loop_footer
      %s18 = sadd.s32 1, %s14
    $region7: #{wan_self_attention.3} parent=1 // loop_footer_branch
      %13 = sbr.rel target = $region3
    $region8: #{wan_self_attention.3} parent=1 // loop_exit
      _
    %3001 = vsyncpa [#allocation6], 1
    %s3002 = scalar_lea.sflag [#allocation6], 1
    %3003 = vsyncpa %s3002, 1

</llo_original>
